<compile_context>
chip_gen: v7x
topology: tpu7x:2x2x1
jax: 0.10.0
libtpu: 0.0.40
codegen_flags: <defaults>
</compile_context>

<pallas_src>
import functools

import jax
import jax.numpy as jnp
from jax.experimental import pallas as pl
from jax.experimental.pallas import tpu as pltpu


def _adj_apply(adj, s):
    """out[b, i, :] = sum_k adj[b, i, k] * s[b, k, :].

    adj: (BB, N, N) f32, s: (BB, N, D) f32  ->  (BB, N, D) f32.
    N is tiny (8), so an unrolled per-neighbor FMA on the VPU avoids materializing a
    (BB, N, N, D) intermediate and the cross-sublane reduce of the previous version.
    """
    n = adj.shape[-1]
    acc = adj[:, :, 0:1] * s[:, 0:1, :]
    for k in range(1, n):
        acc = acc + adj[:, :, k:k + 1] * s[:, k:k + 1, :]
    return acc


def _encoder_kernel(num_dense, adj_ref, node_ref, eps_ref, *refs):
    """Fused forward pass for one block of BB graphs.

    refs order (inputs, all weights bf16 / biases f32):
        w_node = [w1 | wi_n | wj_n], b_node = [b1 | bi | bj],
        w2, b2,
        w_h = [wi_h | wj_h],
        [wd_k, bd_k] * num_dense,
        w_ml = [Wm | Wl] (lane-padded halves), b_ml
    then one output: packed (BB, 3*d_pad) slab [h | mu | logvar].
    """
    f32, bf16 = jnp.float32, jnp.bfloat16
    n_w = 7 + 2 * num_dense
    w_refs = refs[:n_w]
    out_ref = refs[n_w]

    w_node, b_node, w2, b2, w_h = w_refs[:5]
    dense = [(w_refs[5 + 2 * i], w_refs[6 + 2 * i]) for i in range(num_dense)]
    w_ml, b_ml = w_refs[5 + 2 * num_dense], w_refs[6 + 2 * num_dense]

    adj = adj_ref[...]                       # (BB, N, N) f32 (pre-summed edge channels)
    node2 = node_ref[...]                    # (BB*N, M) bf16 — fed straight to the MXU
    BB, N, _ = adj.shape
    d1 = w2.shape[0]
    aux = (w_node.shape[1] - d1) // 2

    # --- fused node-LHS matmul: node2 @ [w1 | wi_n | wj_n] + [b1 | bi | bj] ---------
    p_node = jnp.dot(node2, w_node[...], preferred_element_type=f32) + b_node[...]
    s1 = p_node[:, :d1]                      # (BB*N, d1) f32, bias b1 included
    gi_n = p_node[:, d1:d1 + aux]            # node-side term of sigmoid gate (+ bi)
    gj_n = p_node[:, d1 + aux:]              # node-side term of tanh gate   (+ bj)

    # --- GraphConvolution layer 1: h1 = tanh(adj @ s1 + s1) -------------------------
    s1_3 = s1.reshape(BB, N, d1)
    h1 = jnp.tanh(_adj_apply(adj, s1_3) + s1_3)
    h1_2 = h1.reshape(BB * N, d1).astype(bf16)

    # --- GraphConvolution layer 2 ----------------------------------------------------
    s2 = jnp.dot(h1_2, w2[...], preferred_element_type=f32) + b2[...]
    s2_3 = s2.reshape(BB, N, -1)
    h2 = jnp.tanh(_adj_apply(adj, s2_3) + s2_3)
    h2_2 = h2.reshape(BB * N, -1).astype(bf16)

    # --- GraphAggregation: fused h2 @ [wi_h | wj_h]; node-side terms reuse p_node ----
    p_h = jnp.dot(h2_2, w_h[...], preferred_element_type=f32)
    gi = jax.nn.sigmoid(p_h[:, :aux] + gi_n)
    gj = jnp.tanh(p_h[:, aux:] + gj_n)
    x = jnp.tanh(jnp.sum((gi * gj).reshape(BB, N, aux), axis=1))      # (BB, aux) f32

    # --- MultiDenseLayer --------------------------------------------------------------
    for wd, bd in dense:
        x = jnp.tanh(jnp.dot(x.astype(bf16), wd[...], preferred_element_type=f32)
                     + bd[...])

    # --- fused emb_mean | emb_logvar (each half lane-padded to a multiple of 128) ----
    ml = jnp.dot(x.astype(bf16), w_ml[...], preferred_element_type=f32) + b_ml[...]
    d_pad = ml.shape[1] // 2
    mu = ml[:, :d_pad]
    lv = ml[:, d_pad:]
    h = eps_ref[...].astype(f32) * jnp.exp(0.5 * lv) + mu             # reparameterize

    # Single packed, lane-dense (128-aligned) output slab: [h | mu | logvar].
    out_ref[:, :d_pad] = h
    out_ref[:, d_pad:2 * d_pad] = mu
    out_ref[:, 2 * d_pad:] = lv


def graph_encoder_forward(adj, node, params, eps, *, block_b=None):
    """adj: (B, E+1, N, N), node: (B, N, M), eps: (B, d_out) standard normal."""
    f32 = jnp.float32
    cd = jnp.bfloat16
    B, _, N, _ = adj.shape
    M = node.shape[-1]
    d_out = params["wm"].shape[1]
    d_pad = ((d_out + 127) // 128) * 128
    num_dense = len(params["dense"])

    # Hoisted into XLA: drop the "no bond" channel and pre-sum the edge channels.
    # The shared-weight GCN only ever consumes adj_sum -> E x less kernel input DMA.
    adj_sum = jnp.sum(adj[:, :-1, :, :], axis=1).astype(f32)           # (B, N, N)

    # Batch-block selection: big blocks amortize per-step overhead; blocks stay
    # multiples of 16 (bf16 sublane packing of the folded BB*N rows); and for large
    # batches we force an even grid of >= 2 steps so the "parallel" axis actually
    # uses both TensorCores on v7x.
    if block_b is None:
        block_b = 256
    block_b = max(16, (block_b // 16) * 16)
    block_b = min(block_b, max(16, ((B + 15) // 16) * 16))
    if B >= 32 and (B + block_b - 1) // block_b < 2:
        block_b = max(16, ((((B + 1) // 2) + 15) // 16) * 16)
    b_pad = ((B + block_b - 1) // block_b) * block_b
    grid_b = b_pad // block_b

    # Streamed per-graph operands:
    #   adj   -> f32 (tiny; keeps the FMA/VPU math f32 on v5e, no in-kernel upcast)
    #   node  -> bf16, pre-flattened to (B*N, M): direct MXU LHS, no in-kernel reshape
    #   eps   -> bf16, upcast in-kernel (f32 reparameterization path)
    # TODO(synk): eps (torch.randn_like in reparameterize) is drawn host-side and
    # streamed rather than generated with the in-kernel PRNG (pltpu.prng_*).
    adj_in = jnp.zeros((b_pad, N, N), f32).at[:B].set(adj_sum)
    node_in = jnp.zeros((b_pad * N, M), cd).at[:B * N].set(node.reshape(B * N, M).astype(cd))
    eps_in = jnp.zeros((b_pad, d_pad), cd).at[:B, :d_out].set(eps.astype(cd))

    # --- weight packing (weights bf16 for the MXU, biases f32) -----------------------
    # Fused node-LHS matmul: [w1 | wi_n | wj_n] with bias [b1 | bi | bj].
    w_node = jnp.concatenate([params["w1"], params["wi_n"], params["wj_n"]], axis=1).astype(cd)
    b_node = jnp.concatenate([params["b1"], params["bi"], params["bj"]], axis=1).astype(f32)
    w2 = params["w2"].astype(cd)
    b2 = params["b2"].astype(f32)
    # Fused aggregation matmul: [wi_h | wj_h] (biases already in b_node).
    w_h = jnp.concatenate([params["wi_h"], params["wj_h"]], axis=1).astype(cd)
    dense_args = []
    for wd, bd in params["dense"]:
        dense_args += [wd.astype(cd), bd.astype(f32)]
    # Fused emb_mean | emb_logvar; pad each half to d_pad so the split is 128-aligned.
    prev = params["wm"].shape[0]
    w_ml = jnp.zeros((prev, 2 * d_pad), f32)
    w_ml = w_ml.at[:, :d_out].set(params["wm"]).at[:, d_pad:d_pad + d_out].set(params["wl"])
    w_ml = w_ml.astype(cd)
    b_ml = jnp.zeros((1, 2 * d_pad), f32)
    b_ml = b_ml.at[:, :d_out].set(params["bm"]).at[:, d_pad:d_pad + d_out].set(params["bl"])

    weight_args = [w_node, b_node, w2, b2, w_h] + dense_args + [w_ml, b_ml]

    def const_spec(a):
        return pl.BlockSpec(a.shape, lambda b: (0, 0))   # all weights are 2-D

    in_specs = (
        [pl.BlockSpec((block_b, N, N), lambda b: (b, 0, 0)),
         pl.BlockSpec((block_b * N, M), lambda b: (b, 0)),
         pl.BlockSpec((block_b, d_pad), lambda b: (b, 0))]
        + [const_spec(a) for a in weight_args]
    )
    # One packed output slab [h | mu | logvar]: a single lane-dense output pipeline.
    out_specs = pl.BlockSpec((block_b, 3 * d_pad), lambda b: (b, 0))
    out_shape = jax.ShapeDtypeStruct((b_pad, 3 * d_pad), f32)

    cp = dict(dimension_semantics=("parallel",))
    if block_b >= 64:
        # Budget explicitly for large blocks (v7x: 64 MiB physical / 32 MiB default
        # scoped; v5e default scoped is only 16 MiB).  40 MiB is safely below v7x
        # physical and far above what a 256-graph block needs (~10-12 MiB).
        cp["vmem_limit_bytes"] = 40 * 1024 * 1024

    kernel = functools.partial(_encoder_kernel, num_dense)
    packed = pl.pallas_call(
        kernel,
        grid=(grid_b,),
        in_specs=in_specs,
        out_specs=out_specs,
        out_shape=out_shape,
        compiler_params=pltpu.CompilerParams(**cp),
    )(adj_in, node_in, eps_in, *weight_args)

    h = packed[:B, :d_out]
    mu = packed[:B, d_pad:d_pad + d_out]
    lv = packed[:B, 2 * d_pad:2 * d_pad + d_out]
    return h, mu, lv


def reference_forward(adj_sum, node, P, eps):
    """Pure-JAX f32 reference (same math, on the pre-summed adjacency)."""
    s1 = node @ P["w1"] + P["b1"]
    h1 = jnp.tanh(jnp.einsum("bik,bkd->bid", adj_sum, s1) + s1)
    s2 = h1 @ P["w2"] + P["b2"]
    h2 = jnp.tanh(jnp.einsum("bik,bkd->bid", adj_sum, s2) + s2)
    gi = jax.nn.sigmoid(h2 @ P["wi_h"] + node @ P["wi_n"] + P["bi"])
    gj = jnp.tanh(h2 @ P["wj_h"] + node @ P["wj_n"] + P["bj"])
    x = jnp.tanh(jnp.sum(gi * gj, axis=1))
    for wd, bd in P["dense"]:
        x = jnp.tanh(x @ wd + bd)
    mu = x @ P["wm"] + P["bm"]
    lv = x @ P["wl"] + P["bl"]
    h = eps * jnp.exp(0.5 * lv) + mu
    return h, mu, lv


def init_params(key, m_dim, graph_conv_dim, aux_dim, linear_dim, out_dim):
    d1, d2 = graph_conv_dim

    def lin(k, i, o):
        kw, kb = jax.random.split(k)
        return (jax.random.normal(kw, (i, o), jnp.float32) * 0.1,
                jax.random.normal(kb, (1, o), jnp.float32) * 0.01)

    ks = jax.random.split(key, 8 + len(linear_dim))
    w1, b1 = lin(ks[0], m_dim, d1)
    w2, b2 = lin(ks[1], d1, d2)
    # aggregation Linear on concat([h2, node]) -> split into (d2, aux) and (m_dim, aux)
    wi, bi = lin(ks[2], d2 + m_dim, aux_dim)
    wj, bj = lin(ks[3], d2 + m_dim, aux_dim)
    dense = []
    prev = aux_dim
    for i, ld in enumerate(linear_dim):
        wd, bd = lin(ks[4 + i], prev, ld)
        dense.append((wd, bd))
        prev = ld
    wm, bm = lin(ks[4 + len(linear_dim)], prev, out_dim)
    wl, bl = lin(ks[5 + len(linear_dim)], prev, out_dim)
    return {
        "w1": w1, "b1": b1, "w2": w2, "b2": b2,
        "wi_h": wi[:d2], "wi_n": wi[d2:], "bi": bi,
        "wj_h": wj[:d2], "wj_n": wj[d2:], "bj": bj,
        "dense": dense, "wm": wm, "bm": bm, "wl": wl, "bl": bl,
    }


if __name__ == "__main__":
    # Small-but-representative config (B > block_b so the batch-blocked grid has 2 steps):
    B = 32
    vertexes = 8          # N
    edges = 4             # bond types kept after dropping the last channel
    nodes_dim = 8         # m_dim (atom-type one-hot width)
    graph_conv_dim = [32, 16]
    aux_dim = 32
    linear_dim = [32, 16]
    out_dim = edges * vertexes * vertexes + vertexes * nodes_dim  # 320

    key = jax.random.PRNGKey(0)
    k_adj, k_node, k_eps, k_par = jax.random.split(key, 4)

    # Modest adjacency magnitudes keep the tanh GCN well-conditioned so the bf16-MXU
    # kernel can be compared against the full-f32 reference below.
    adj = jax.random.uniform(k_adj, (B, edges + 1, vertexes, vertexes), jnp.float32) * 0.25
    node = jax.random.uniform(k_node, (B, vertexes, nodes_dim), jnp.float32)
    eps = jax.random.normal(k_eps, (B, out_dim), jnp.float32)

    params = init_params(k_par, nodes_dim, graph_conv_dim, aux_dim, linear_dim, out_dim)

    h, mu, lv = graph_encoder_forward(adj, node, params, eps)
    jax.block_until_ready((h, mu, lv))

    # Reference consumes the same (bf16-rounded) streamed inputs but keeps full-f32
    # weights and math, so the comparison measures the kernel's bf16-MXU fidelity
    # against the true f32 forward.
    cd = jnp.bfloat16
    adj_sum = jnp.sum(adj[:, :-1], axis=1)                       # kernel streams adj in f32
    node_rt = node.astype(cd).astype(jnp.float32)
    eps_rt = eps.astype(cd).astype(jnp.float32)
    h_ref, mu_ref, lv_ref = reference_forward(adj_sum, node_rt, params, eps_rt)

    assert h.shape == (B, out_dim) and mu.shape == (B, out_dim) and lv.shape == (B, out_dim)
    assert jnp.allclose(mu, mu_ref, atol=4e-2, rtol=4e-2)
    assert jnp.allclose(lv, lv_ref, atol=4e-2, rtol=4e-2)
    assert jnp.allclose(h, h_ref, atol=4e-2, rtol=4e-2)

    print("KERNEL_OK")
</pallas_src>

<mosaic_0001>
module attributes {stable_mosaic.version = 11 : i64} {
  func.func @_encoder_kernel(%arg0: i32, %arg1: memref<16x8x8xf32, #tpu.memory_space<vmem>>, %arg2: memref<128x8xbf16, #tpu.memory_space<vmem>>, %arg3: memref<16x384xbf16, #tpu.memory_space<vmem>>, %arg4: memref<8x96xbf16, #tpu.memory_space<vmem>>, %arg5: memref<1x96xf32, #tpu.memory_space<vmem>>, %arg6: memref<32x16xbf16, #tpu.memory_space<vmem>>, %arg7: memref<1x16xf32, #tpu.memory_space<vmem>>, %arg8: memref<16x64xbf16, #tpu.memory_space<vmem>>, %arg9: memref<32x32xbf16, #tpu.memory_space<vmem>>, %arg10: memref<1x32xf32, #tpu.memory_space<vmem>>, %arg11: memref<32x16xbf16, #tpu.memory_space<vmem>>, %arg12: memref<1x16xf32, #tpu.memory_space<vmem>>, %arg13: memref<16x768xbf16, #tpu.memory_space<vmem>>, %arg14: memref<1x768xf32, #tpu.memory_space<vmem>>, %arg15: memref<16x1152xf32, #tpu.memory_space<vmem>>) attributes {dimension_semantics = [#tpu.dimension_semantics<parallel>], iteration_bounds = array<i64: 2>, scalar_prefetch = 0 : i64, scratch_operands = 0 : i64, tpu.core_type = #tpu.core_type<tc>, window_params = [{transform_indices = @transform_0, window_bounds = array<i64: 16, 8, 8>}, {transform_indices = @transform_1, window_bounds = array<i64: 128, 8>}, {transform_indices = @transform_2, window_bounds = array<i64: 16, 384>}, {pipeline_mode = #tpu.pipeline_mode<synchronous>, transform_indices = @transform_3, window_bounds = array<i64: 8, 96>}, {pipeline_mode = #tpu.pipeline_mode<synchronous>, transform_indices = @transform_4, window_bounds = array<i64: 1, 96>}, {pipeline_mode = #tpu.pipeline_mode<synchronous>, transform_indices = @transform_5, window_bounds = array<i64: 32, 16>}, {pipeline_mode = #tpu.pipeline_mode<synchronous>, transform_indices = @transform_6, window_bounds = array<i64: 1, 16>}, {pipeline_mode = #tpu.pipeline_mode<synchronous>, transform_indices = @transform_7, window_bounds = array<i64: 16, 64>}, {pipeline_mode = #tpu.pipeline_mode<synchronous>, transform_indices = @transform_8, window_bounds = array<i64: 32, 32>}, {pipeline_mode = #tpu.pipeline_mode<synchronous>, transform_indices = @transform_9, window_bounds = array<i64: 1, 32>}, {pipeline_mode = #tpu.pipeline_mode<synchronous>, transform_indices = @transform_10, window_bounds = array<i64: 32, 16>}, {pipeline_mode = #tpu.pipeline_mode<synchronous>, transform_indices = @transform_11, window_bounds = array<i64: 1, 16>}, {pipeline_mode = #tpu.pipeline_mode<synchronous>, transform_indices = @transform_12, window_bounds = array<i64: 16, 768>}, {pipeline_mode = #tpu.pipeline_mode<synchronous>, transform_indices = @transform_13, window_bounds = array<i64: 1, 768>}, {transform_indices = @transform_14, window_bounds = array<i64: 16, 1152>}]} {
    %c0 = arith.constant 0 : index
    %c0_0 = arith.constant 0 : index
    %c0_1 = arith.constant 0 : index
    %0 = vector.load %arg1[%c0, %c0_0, %c0_1] : memref<16x8x8xf32, #tpu.memory_space<vmem>>, vector<16x8x8xf32>
    %c0_2 = arith.constant 0 : index
    %c0_3 = arith.constant 0 : index
    %1 = vector.load %arg2[%c0_2, %c0_3] : memref<128x8xbf16, #tpu.memory_space<vmem>>, vector<128x8xbf16>
    %c0_4 = arith.constant 0 : index
    %c0_5 = arith.constant 0 : index
    %2 = vector.load %arg4[%c0_4, %c0_5] : memref<8x96xbf16, #tpu.memory_space<vmem>>, vector<8x96xbf16>
    %cst = arith.constant dense<0.000000e+00> : vector<128x96xf32>
    %3 = tpu.matmul %1, %2, %cst {dimension_numbers = #tpu.dot_dimension_numbers<[1], [0], [0], [1], [0, 0, 1, 1], [], []>} : vector<128x8xbf16>, vector<8x96xbf16>, vector<128x96xf32> -> vector<128x96xf32>
    %c0_6 = arith.constant 0 : index
    %c0_7 = arith.constant 0 : index
    %4 = vector.load %arg5[%c0_6, %c0_7] : memref<1x96xf32, #tpu.memory_space<vmem>>, vector<1x96xf32>
    %5 = vector.broadcast %4 : vector<1x96xf32> to vector<128x96xf32>
    %6 = arith.addf %3, %5 : vector<128x96xf32>
    %7 = vector.extract_strided_slice %6 {offsets = [0, 0], sizes = [128, 32], strides = [1, 1]} : vector<128x96xf32> to vector<128x32xf32>
    %8 = vector.extract_strided_slice %6 {offsets = [0, 32], sizes = [128, 32], strides = [1, 1]} : vector<128x96xf32> to vector<128x32xf32>
    %9 = vector.extract_strided_slice %6 {offsets = [0, 64], sizes = [128, 32], strides = [1, 1]} : vector<128x96xf32> to vector<128x32xf32>
    %10 = vector.shape_cast %7 : vector<128x32xf32> to vector<16x8x32xf32>
    %11 = vector.extract_strided_slice %0 {offsets = [0, 0, 0], sizes = [16, 8, 1], strides = [1, 1, 1]} : vector<16x8x8xf32> to vector<16x8x1xf32>
    %12 = vector.extract_strided_slice %10 {offsets = [0, 0, 0], sizes = [16, 1, 32], strides = [1, 1, 1]} : vector<16x8x32xf32> to vector<16x1x32xf32>
    %13 = vector.broadcast %11 : vector<16x8x1xf32> to vector<16x8x32xf32>
    %14 = vector.broadcast %12 : vector<16x1x32xf32> to vector<16x8x32xf32>
    %15 = arith.mulf %13, %14 : vector<16x8x32xf32>
    %16 = vector.extract_strided_slice %0 {offsets = [0, 0, 1], sizes = [16, 8, 1], strides = [1, 1, 1]} : vector<16x8x8xf32> to vector<16x8x1xf32>
    %17 = vector.extract_strided_slice %10 {offsets = [0, 1, 0], sizes = [16, 1, 32], strides = [1, 1, 1]} : vector<16x8x32xf32> to vector<16x1x32xf32>
    %18 = vector.broadcast %16 : vector<16x8x1xf32> to vector<16x8x32xf32>
    %19 = vector.broadcast %17 : vector<16x1x32xf32> to vector<16x8x32xf32>
    %20 = arith.mulf %18, %19 : vector<16x8x32xf32>
    %21 = arith.addf %15, %20 : vector<16x8x32xf32>
    %22 = vector.extract_strided_slice %0 {offsets = [0, 0, 2], sizes = [16, 8, 1], strides = [1, 1, 1]} : vector<16x8x8xf32> to vector<16x8x1xf32>
    %23 = vector.extract_strided_slice %10 {offsets = [0, 2, 0], sizes = [16, 1, 32], strides = [1, 1, 1]} : vector<16x8x32xf32> to vector<16x1x32xf32>
    %24 = vector.broadcast %22 : vector<16x8x1xf32> to vector<16x8x32xf32>
    %25 = vector.broadcast %23 : vector<16x1x32xf32> to vector<16x8x32xf32>
    %26 = arith.mulf %24, %25 : vector<16x8x32xf32>
    %27 = arith.addf %21, %26 : vector<16x8x32xf32>
    %28 = vector.extract_strided_slice %0 {offsets = [0, 0, 3], sizes = [16, 8, 1], strides = [1, 1, 1]} : vector<16x8x8xf32> to vector<16x8x1xf32>
    %29 = vector.extract_strided_slice %10 {offsets = [0, 3, 0], sizes = [16, 1, 32], strides = [1, 1, 1]} : vector<16x8x32xf32> to vector<16x1x32xf32>
    %30 = vector.broadcast %28 : vector<16x8x1xf32> to vector<16x8x32xf32>
    %31 = vector.broadcast %29 : vector<16x1x32xf32> to vector<16x8x32xf32>
    %32 = arith.mulf %30, %31 : vector<16x8x32xf32>
    %33 = arith.addf %27, %32 : vector<16x8x32xf32>
    %34 = vector.extract_strided_slice %0 {offsets = [0, 0, 4], sizes = [16, 8, 1], strides = [1, 1, 1]} : vector<16x8x8xf32> to vector<16x8x1xf32>
    %35 = vector.extract_strided_slice %10 {offsets = [0, 4, 0], sizes = [16, 1, 32], strides = [1, 1, 1]} : vector<16x8x32xf32> to vector<16x1x32xf32>
    %36 = vector.broadcast %34 : vector<16x8x1xf32> to vector<16x8x32xf32>
    %37 = vector.broadcast %35 : vector<16x1x32xf32> to vector<16x8x32xf32>
    %38 = arith.mulf %36, %37 : vector<16x8x32xf32>
    %39 = arith.addf %33, %38 : vector<16x8x32xf32>
    %40 = vector.extract_strided_slice %0 {offsets = [0, 0, 5], sizes = [16, 8, 1], strides = [1, 1, 1]} : vector<16x8x8xf32> to vector<16x8x1xf32>
    %41 = vector.extract_strided_slice %10 {offsets = [0, 5, 0], sizes = [16, 1, 32], strides = [1, 1, 1]} : vector<16x8x32xf32> to vector<16x1x32xf32>
    %42 = vector.broadcast %40 : vector<16x8x1xf32> to vector<16x8x32xf32>
    %43 = vector.broadcast %41 : vector<16x1x32xf32> to vector<16x8x32xf32>
    %44 = arith.mulf %42, %43 : vector<16x8x32xf32>
    %45 = arith.addf %39, %44 : vector<16x8x32xf32>
    %46 = vector.extract_strided_slice %0 {offsets = [0, 0, 6], sizes = [16, 8, 1], strides = [1, 1, 1]} : vector<16x8x8xf32> to vector<16x8x1xf32>
    %47 = vector.extract_strided_slice %10 {offsets = [0, 6, 0], sizes = [16, 1, 32], strides = [1, 1, 1]} : vector<16x8x32xf32> to vector<16x1x32xf32>
    %48 = vector.broadcast %46 : vector<16x8x1xf32> to vector<16x8x32xf32>
    %49 = vector.broadcast %47 : vector<16x1x32xf32> to vector<16x8x32xf32>
    %50 = arith.mulf %48, %49 : vector<16x8x32xf32>
    %51 = arith.addf %45, %50 : vector<16x8x32xf32>
    %52 = vector.extract_strided_slice %0 {offsets = [0, 0, 7], sizes = [16, 8, 1], strides = [1, 1, 1]} : vector<16x8x8xf32> to vector<16x8x1xf32>
    %53 = vector.extract_strided_slice %10 {offsets = [0, 7, 0], sizes = [16, 1, 32], strides = [1, 1, 1]} : vector<16x8x32xf32> to vector<16x1x32xf32>
    %54 = vector.broadcast %52 : vector<16x8x1xf32> to vector<16x8x32xf32>
    %55 = vector.broadcast %53 : vector<16x1x32xf32> to vector<16x8x32xf32>
    %56 = arith.mulf %54, %55 : vector<16x8x32xf32>
    %57 = arith.addf %51, %56 : vector<16x8x32xf32>
    %58 = arith.addf %57, %10 : vector<16x8x32xf32>
    %59 = math.tanh %58 : vector<16x8x32xf32>
    %60 = vector.shape_cast %59 : vector<16x8x32xf32> to vector<128x32xf32>
    %61 = arith.truncf %60 : vector<128x32xf32> to vector<128x32xbf16>
    %c0_8 = arith.constant 0 : index
    %c0_9 = arith.constant 0 : index
    %62 = vector.load %arg6[%c0_8, %c0_9] : memref<32x16xbf16, #tpu.memory_space<vmem>>, vector<32x16xbf16>
    %cst_10 = arith.constant dense<0.000000e+00> : vector<128x16xf32>
    %63 = tpu.matmul %61, %62, %cst_10 {dimension_numbers = #tpu.dot_dimension_numbers<[1], [0], [0], [1], [0, 0, 1, 1], [], []>} : vector<128x32xbf16>, vector<32x16xbf16>, vector<128x16xf32> -> vector<128x16xf32>
    %c0_11 = arith.constant 0 : index
    %c0_12 = arith.constant 0 : index
    %64 = vector.load %arg7[%c0_11, %c0_12] : memref<1x16xf32, #tpu.memory_space<vmem>>, vector<1x16xf32>
    %65 = vector.broadcast %64 : vector<1x16xf32> to vector<128x16xf32>
    %66 = arith.addf %63, %65 : vector<128x16xf32>
    %67 = vector.shape_cast %66 : vector<128x16xf32> to vector<16x8x16xf32>
    %68 = vector.extract_strided_slice %0 {offsets = [0, 0, 0], sizes = [16, 8, 1], strides = [1, 1, 1]} : vector<16x8x8xf32> to vector<16x8x1xf32>
    %69 = vector.extract_strided_slice %67 {offsets = [0, 0, 0], sizes = [16, 1, 16], strides = [1, 1, 1]} : vector<16x8x16xf32> to vector<16x1x16xf32>
    %70 = vector.broadcast %68 : vector<16x8x1xf32> to vector<16x8x16xf32>
    %71 = vector.broadcast %69 : vector<16x1x16xf32> to vector<16x8x16xf32>
    %72 = arith.mulf %70, %71 : vector<16x8x16xf32>
    %73 = vector.extract_strided_slice %0 {offsets = [0, 0, 1], sizes = [16, 8, 1], strides = [1, 1, 1]} : vector<16x8x8xf32> to vector<16x8x1xf32>
    %74 = vector.extract_strided_slice %67 {offsets = [0, 1, 0], sizes = [16, 1, 16], strides = [1, 1, 1]} : vector<16x8x16xf32> to vector<16x1x16xf32>
    %75 = vector.broadcast %73 : vector<16x8x1xf32> to vector<16x8x16xf32>
    %76 = vector.broadcast %74 : vector<16x1x16xf32> to vector<16x8x16xf32>
    %77 = arith.mulf %75, %76 : vector<16x8x16xf32>
    %78 = arith.addf %72, %77 : vector<16x8x16xf32>
    %79 = vector.extract_strided_slice %0 {offsets = [0, 0, 2], sizes = [16, 8, 1], strides = [1, 1, 1]} : vector<16x8x8xf32> to vector<16x8x1xf32>
    %80 = vector.extract_strided_slice %67 {offsets = [0, 2, 0], sizes = [16, 1, 16], strides = [1, 1, 1]} : vector<16x8x16xf32> to vector<16x1x16xf32>
    %81 = vector.broadcast %79 : vector<16x8x1xf32> to vector<16x8x16xf32>
    %82 = vector.broadcast %80 : vector<16x1x16xf32> to vector<16x8x16xf32>
    %83 = arith.mulf %81, %82 : vector<16x8x16xf32>
    %84 = arith.addf %78, %83 : vector<16x8x16xf32>
    %85 = vector.extract_strided_slice %0 {offsets = [0, 0, 3], sizes = [16, 8, 1], strides = [1, 1, 1]} : vector<16x8x8xf32> to vector<16x8x1xf32>
    %86 = vector.extract_strided_slice %67 {offsets = [0, 3, 0], sizes = [16, 1, 16], strides = [1, 1, 1]} : vector<16x8x16xf32> to vector<16x1x16xf32>
    %87 = vector.broadcast %85 : vector<16x8x1xf32> to vector<16x8x16xf32>
    %88 = vector.broadcast %86 : vector<16x1x16xf32> to vector<16x8x16xf32>
    %89 = arith.mulf %87, %88 : vector<16x8x16xf32>
    %90 = arith.addf %84, %89 : vector<16x8x16xf32>
    %91 = vector.extract_strided_slice %0 {offsets = [0, 0, 4], sizes = [16, 8, 1], strides = [1, 1, 1]} : vector<16x8x8xf32> to vector<16x8x1xf32>
    %92 = vector.extract_strided_slice %67 {offsets = [0, 4, 0], sizes = [16, 1, 16], strides = [1, 1, 1]} : vector<16x8x16xf32> to vector<16x1x16xf32>
    %93 = vector.broadcast %91 : vector<16x8x1xf32> to vector<16x8x16xf32>
    %94 = vector.broadcast %92 : vector<16x1x16xf32> to vector<16x8x16xf32>
    %95 = arith.mulf %93, %94 : vector<16x8x16xf32>
    %96 = arith.addf %90, %95 : vector<16x8x16xf32>
    %97 = vector.extract_strided_slice %0 {offsets = [0, 0, 5], sizes = [16, 8, 1], strides = [1, 1, 1]} : vector<16x8x8xf32> to vector<16x8x1xf32>
    %98 = vector.extract_strided_slice %67 {offsets = [0, 5, 0], sizes = [16, 1, 16], strides = [1, 1, 1]} : vector<16x8x16xf32> to vector<16x1x16xf32>
    %99 = vector.broadcast %97 : vector<16x8x1xf32> to vector<16x8x16xf32>
    %100 = vector.broadcast %98 : vector<16x1x16xf32> to vector<16x8x16xf32>
    %101 = arith.mulf %99, %100 : vector<16x8x16xf32>
    %102 = arith.addf %96, %101 : vector<16x8x16xf32>
    %103 = vector.extract_strided_slice %0 {offsets = [0, 0, 6], sizes = [16, 8, 1], strides = [1, 1, 1]} : vector<16x8x8xf32> to vector<16x8x1xf32>
    %104 = vector.extract_strided_slice %67 {offsets = [0, 6, 0], sizes = [16, 1, 16], strides = [1, 1, 1]} : vector<16x8x16xf32> to vector<16x1x16xf32>
    %105 = vector.broadcast %103 : vector<16x8x1xf32> to vector<16x8x16xf32>
    %106 = vector.broadcast %104 : vector<16x1x16xf32> to vector<16x8x16xf32>
    %107 = arith.mulf %105, %106 : vector<16x8x16xf32>
    %108 = arith.addf %102, %107 : vector<16x8x16xf32>
    %109 = vector.extract_strided_slice %0 {offsets = [0, 0, 7], sizes = [16, 8, 1], strides = [1, 1, 1]} : vector<16x8x8xf32> to vector<16x8x1xf32>
    %110 = vector.extract_strided_slice %67 {offsets = [0, 7, 0], sizes = [16, 1, 16], strides = [1, 1, 1]} : vector<16x8x16xf32> to vector<16x1x16xf32>
    %111 = vector.broadcast %109 : vector<16x8x1xf32> to vector<16x8x16xf32>
    %112 = vector.broadcast %110 : vector<16x1x16xf32> to vector<16x8x16xf32>
    %113 = arith.mulf %111, %112 : vector<16x8x16xf32>
    %114 = arith.addf %108, %113 : vector<16x8x16xf32>
    %115 = arith.addf %114, %67 : vector<16x8x16xf32>
    %116 = math.tanh %115 : vector<16x8x16xf32>
    %117 = vector.shape_cast %116 : vector<16x8x16xf32> to vector<128x16xf32>
    %118 = arith.truncf %117 : vector<128x16xf32> to vector<128x16xbf16>
    %c0_13 = arith.constant 0 : index
    %c0_14 = arith.constant 0 : index
    %119 = vector.load %arg8[%c0_13, %c0_14] : memref<16x64xbf16, #tpu.memory_space<vmem>>, vector<16x64xbf16>
    %cst_15 = arith.constant dense<0.000000e+00> : vector<128x64xf32>
    %120 = tpu.matmul %118, %119, %cst_15 {dimension_numbers = #tpu.dot_dimension_numbers<[1], [0], [0], [1], [0, 0, 1, 1], [], []>} : vector<128x16xbf16>, vector<16x64xbf16>, vector<128x64xf32> -> vector<128x64xf32>
    %121 = vector.extract_strided_slice %120 {offsets = [0, 0], sizes = [128, 32], strides = [1, 1]} : vector<128x64xf32> to vector<128x32xf32>
    %122 = arith.addf %121, %8 : vector<128x32xf32>
    %123 = arith.negf %122 : vector<128x32xf32>
    %124 = math.exp %123 : vector<128x32xf32>
    %cst_16 = arith.constant 1.000000e+00 : f32
    %125 = vector.broadcast %cst_16 : f32 to vector<128x32xf32>
    %126 = arith.addf %125, %124 : vector<128x32xf32>
    %127 = arith.divf %125, %126 : vector<128x32xf32>
    %128 = vector.extract_strided_slice %120 {offsets = [0, 32], sizes = [128, 32], strides = [1, 1]} : vector<128x64xf32> to vector<128x32xf32>
    %129 = arith.addf %128, %9 : vector<128x32xf32>
    %130 = math.tanh %129 : vector<128x32xf32>
    %131 = arith.mulf %127, %130 : vector<128x32xf32>
    %132 = vector.shape_cast %131 : vector<128x32xf32> to vector<16x8x32xf32>
    %cst_17 = arith.constant dense<0.000000e+00> : vector<16x32xf32>
    %133 = vector.multi_reduction <add>, %132, %cst_17 [1] : vector<16x8x32xf32> to vector<16x32xf32>
    %134 = math.tanh %133 : vector<16x32xf32>
    %135 = arith.truncf %134 : vector<16x32xf32> to vector<16x32xbf16>
    %c0_18 = arith.constant 0 : index
    %c0_19 = arith.constant 0 : index
    %136 = vector.load %arg9[%c0_18, %c0_19] : memref<32x32xbf16, #tpu.memory_space<vmem>>, vector<32x32xbf16>
    %cst_20 = arith.constant dense<0.000000e+00> : vector<16x32xf32>
    %137 = tpu.matmul %135, %136, %cst_20 {dimension_numbers = #tpu.dot_dimension_numbers<[1], [0], [0], [1], [0, 0, 1, 1], [], []>} : vector<16x32xbf16>, vector<32x32xbf16>, vector<16x32xf32> -> vector<16x32xf32>
    %c0_21 = arith.constant 0 : index
    %c0_22 = arith.constant 0 : index
    %138 = vector.load %arg10[%c0_21, %c0_22] : memref<1x32xf32, #tpu.memory_space<vmem>>, vector<1x32xf32>
    %139 = vector.broadcast %138 : vector<1x32xf32> to vector<16x32xf32>
    %140 = arith.addf %137, %139 : vector<16x32xf32>
    %141 = math.tanh %140 : vector<16x32xf32>
    %142 = arith.truncf %141 : vector<16x32xf32> to vector<16x32xbf16>
    %c0_23 = arith.constant 0 : index
    %c0_24 = arith.constant 0 : index
    %143 = vector.load %arg11[%c0_23, %c0_24] : memref<32x16xbf16, #tpu.memory_space<vmem>>, vector<32x16xbf16>
    %cst_25 = arith.constant dense<0.000000e+00> : vector<16x16xf32>
    %144 = tpu.matmul %142, %143, %cst_25 {dimension_numbers = #tpu.dot_dimension_numbers<[1], [0], [0], [1], [0, 0, 1, 1], [], []>} : vector<16x32xbf16>, vector<32x16xbf16>, vector<16x16xf32> -> vector<16x16xf32>
    %c0_26 = arith.constant 0 : index
    %c0_27 = arith.constant 0 : index
    %145 = vector.load %arg12[%c0_26, %c0_27] : memref<1x16xf32, #tpu.memory_space<vmem>>, vector<1x16xf32>
    %146 = vector.broadcast %145 : vector<1x16xf32> to vector<16x16xf32>
    %147 = arith.addf %144, %146 : vector<16x16xf32>
    %148 = math.tanh %147 : vector<16x16xf32>
    %149 = arith.truncf %148 : vector<16x16xf32> to vector<16x16xbf16>
    %c0_28 = arith.constant 0 : index
    %c0_29 = arith.constant 0 : index
    %150 = vector.load %arg13[%c0_28, %c0_29] : memref<16x768xbf16, #tpu.memory_space<vmem>>, vector<16x768xbf16>
    %cst_30 = arith.constant dense<0.000000e+00> : vector<16x768xf32>
    %151 = tpu.matmul %149, %150, %cst_30 {dimension_numbers = #tpu.dot_dimension_numbers<[1], [0], [0], [1], [0, 0, 1, 1], [], []>} : vector<16x16xbf16>, vector<16x768xbf16>, vector<16x768xf32> -> vector<16x768xf32>
    %c0_31 = arith.constant 0 : index
    %c0_32 = arith.constant 0 : index
    %152 = vector.load %arg14[%c0_31, %c0_32] : memref<1x768xf32, #tpu.memory_space<vmem>>, vector<1x768xf32>
    %153 = vector.broadcast %152 : vector<1x768xf32> to vector<16x768xf32>
    %154 = arith.addf %151, %153 : vector<16x768xf32>
    %155 = vector.extract_strided_slice %154 {offsets = [0, 0], sizes = [16, 384], strides = [1, 1]} : vector<16x768xf32> to vector<16x384xf32>
    %156 = vector.extract_strided_slice %154 {offsets = [0, 384], sizes = [16, 384], strides = [1, 1]} : vector<16x768xf32> to vector<16x384xf32>
    %c0_33 = arith.constant 0 : index
    %c0_34 = arith.constant 0 : index
    %157 = vector.load %arg3[%c0_33, %c0_34] : memref<16x384xbf16, #tpu.memory_space<vmem>>, vector<16x384xbf16>
    %158 = arith.extf %157 : vector<16x384xbf16> to vector<16x384xf32>
    %cst_35 = arith.constant 5.000000e-01 : f32
    %159 = vector.broadcast %cst_35 : f32 to vector<16x384xf32>
    %160 = arith.mulf %159, %156 : vector<16x384xf32>
    %161 = math.exp %160 : vector<16x384xf32>
    %162 = arith.mulf %158, %161 : vector<16x384xf32>
    %163 = arith.addf %162, %155 : vector<16x384xf32>
    %c0_36 = arith.constant 0 : index
    %c0_37 = arith.constant 0 : index
    %164 = vector.load %arg15[%c0_36, %c0_37] : memref<16x1152xf32, #tpu.memory_space<vmem>>, vector<16x384xf32>
    tpu.vector_store %arg15[%c0_36, %c0_37], %163 {strides = array<i32>} : memref<16x1152xf32, #tpu.memory_space<vmem>>, vector<16x384xf32>,
    %c0_38 = arith.constant 0 : index
    %c384 = arith.constant 384 : index
    %165 = vector.load %arg15[%c0_38, %c384] : memref<16x1152xf32, #tpu.memory_space<vmem>>, vector<16x384xf32>
    tpu.vector_store %arg15[%c0_38, %c384], %155 {strides = array<i32>} : memref<16x1152xf32, #tpu.memory_space<vmem>>, vector<16x384xf32>,
    %c0_39 = arith.constant 0 : index
    %c768 = arith.constant 768 : index
    %166 = vector.load %arg15[%c0_39, %c768] : memref<16x1152xf32, #tpu.memory_space<vmem>>, vector<16x384xf32>
    tpu.vector_store %arg15[%c0_39, %c768], %156 {strides = array<i32>} : memref<16x1152xf32, #tpu.memory_space<vmem>>, vector<16x384xf32>,
    return
  }
  func.func @transform_0(%arg0: i32) -> (i32, i32, i32) {
    %c0_i32 = arith.constant 0 : i32
    %c0_i32_0 = arith.constant 0 : i32
    %c0_i32_1 = arith.constant 0 : i32
    return %arg0, %c0_i32, %c0_i32_0 : i32, i32, i32
  }
  func.func @transform_1(%arg0: i32) -> (i32, i32) {
    %c0_i32 = arith.constant 0 : i32
    %c0_i32_0 = arith.constant 0 : i32
    return %arg0, %c0_i32 : i32, i32
  }
  func.func @transform_2(%arg0: i32) -> (i32, i32) {
    %c0_i32 = arith.constant 0 : i32
    %c0_i32_0 = arith.constant 0 : i32
    return %arg0, %c0_i32 : i32, i32
  }
  func.func @transform_3(%arg0: i32) -> (i32, i32) {
    %c0_i32 = arith.constant 0 : i32
    %c0_i32_0 = arith.constant 0 : i32
    %c0_i32_1 = arith.constant 0 : i32
    return %c0_i32, %c0_i32_0 : i32, i32
  }
  func.func @transform_4(%arg0: i32) -> (i32, i32) {
    %c0_i32 = arith.constant 0 : i32
    %c0_i32_0 = arith.constant 0 : i32
    %c0_i32_1 = arith.constant 0 : i32
    return %c0_i32, %c0_i32_0 : i32, i32
  }
  func.func @transform_5(%arg0: i32) -> (i32, i32) {
    %c0_i32 = arith.constant 0 : i32
    %c0_i32_0 = arith.constant 0 : i32
    %c0_i32_1 = arith.constant 0 : i32
    return %c0_i32, %c0_i32_0 : i32, i32
  }
  func.func @transform_6(%arg0: i32) -> (i32, i32) {
    %c0_i32 = arith.constant 0 : i32
    %c0_i32_0 = arith.constant 0 : i32
    %c0_i32_1 = arith.constant 0 : i32
    return %c0_i32, %c0_i32_0 : i32, i32
  }
  func.func @transform_7(%arg0: i32) -> (i32, i32) {
    %c0_i32 = arith.constant 0 : i32
    %c0_i32_0 = arith.constant 0 : i32
    %c0_i32_1 = arith.constant 0 : i32
    return %c0_i32, %c0_i32_0 : i32, i32
  }
  func.func @transform_8(%arg0: i32) -> (i32, i32) {
    %c0_i32 = arith.constant 0 : i32
    %c0_i32_0 = arith.constant 0 : i32
    %c0_i32_1 = arith.constant 0 : i32
    return %c0_i32, %c0_i32_0 : i32, i32
  }
  func.func @transform_9(%arg0: i32) -> (i32, i32) {
    %c0_i32 = arith.constant 0 : i32
    %c0_i32_0 = arith.constant 0 : i32
    %c0_i32_1 = arith.constant 0 : i32
    return %c0_i32, %c0_i32_0 : i32, i32
  }
  func.func @transform_10(%arg0: i32) -> (i32, i32) {
    %c0_i32 = arith.constant 0 : i32
    %c0_i32_0 = arith.constant 0 : i32
    %c0_i32_1 = arith.constant 0 : i32
    return %c0_i32, %c0_i32_0 : i32, i32
  }
  func.func @transform_11(%arg0: i32) -> (i32, i32) {
    %c0_i32 = arith.constant 0 : i32
    %c0_i32_0 = arith.constant 0 : i32
    %c0_i32_1 = arith.constant 0 : i32
    return %c0_i32, %c0_i32_0 : i32, i32
  }
  func.func @transform_12(%arg0: i32) -> (i32, i32) {
    %c0_i32 = arith.constant 0 : i32
    %c0_i32_0 = arith.constant 0 : i32
    %c0_i32_1 = arith.constant 0 : i32
    return %c0_i32, %c0_i32_0 : i32, i32
  }
  func.func @transform_13(%arg0: i32) -> (i32, i32) {
    %c0_i32 = arith.constant 0 : i32
    %c0_i32_0 = arith.constant 0 : i32
    %c0_i32_1 = arith.constant 0 : i32
    return %c0_i32, %c0_i32_0 : i32, i32
  }
  func.func @transform_14(%arg0: i32) -> (i32, i32) {
    %c0_i32 = arith.constant 0 : i32
    %c0_i32_0 = arith.constant 0 : i32
    return %arg0, %c0_i32 : i32, i32
  }
}

</mosaic_0001>

<llo_original>
// kernel: tpu_custom_call.1
$region0: #{tpu_custom_call.1}
  #allocation0 [shape = 'u32[]', space=smem, size = 0x4, offset = 0x4, fixed_abs, tag = 'smem constant byte address 0x4 - core index']
  #allocation1 [shape = 'u32[144,128]{1,0:T(1,128)}', space=vmem, size = 0x12000, scoped, tag = 'internal scratch']
  %s0 = inlined_call_operand.vmem [shape: f32[32,8,8], index: 0, kind: input, shape index: {}]
  %s1 = inlined_call_operand.vmem [shape: bf16[256,8], index: 1, kind: input, shape index: {}]
  %s2 = inlined_call_operand.vmem [shape: bf16[32,384], index: 2, kind: input, shape index: {}]
  %s3 = inlined_call_operand.vmem [shape: bf16[8,96], index: 3, kind: input, shape index: {}]
  %s4 = inlined_call_operand.vmem [shape: f32[1,96], index: 4, kind: input, shape index: {}]
  %s5 = inlined_call_operand.vmem [shape: bf16[32,16], index: 5, kind: input, shape index: {}]
  %s6 = inlined_call_operand.vmem [shape: f32[1,16], index: 6, kind: input, shape index: {}]
  %s7 = inlined_call_operand.vmem [shape: bf16[16,64], index: 7, kind: input, shape index: {}]
  %s8 = inlined_call_operand.vmem [shape: bf16[32,32], index: 8, kind: input, shape index: {}]
  %s9 = inlined_call_operand.vmem [shape: f32[1,32], index: 9, kind: input, shape index: {}]
  %s10 = inlined_call_operand.vmem [shape: bf16[32,16], index: 10, kind: input, shape index: {}]
  %s11 = inlined_call_operand.vmem [shape: f32[1,16], index: 11, kind: input, shape index: {}]
  %s12 = inlined_call_operand.vmem [shape: bf16[16,768], index: 12, kind: input, shape index: {}]
  %s13 = inlined_call_operand.vmem [shape: f32[1,768], index: 13, kind: input, shape index: {}]
  %s14 = inlined_call_operand.hbm [shape: f32[32,1152], index: 14, kind: output, shape index: {}]
  %s15 = sld [smem:[#allocation0]]
  $region89: #{tpu_custom_call.1} parent=0
    _
  %s17 = ssub.s32 1, %s15
  %s18 = scalar_select 0, %s17, %s15
  $region1: #{tpu_custom_call.1} parent=0
    #allocation2 [shape = 'u8[147456]{0}', space=vmem, size = 0x24000, scoped, tag = 'output window, operand 0']
    #allocation3 [shape = 's32[2]{0}', space=sflag, size = 0x8, scoped, tag = 'scoped memory for tpu_custom_call.1']
    %19 = vsyncpa [#allocation3], 0
    %s20 = scalar_lea.sflag [#allocation3], 1
    %21 = vsyncpa %s20, 0
    loop: start=0, step=1, limit=4
    $region2: #{tpu_custom_call.1} parent=1 // loop_pre_header
      _
    $region3: #{tpu_custom_call.1} parent=1 // loop_header
      %s23 = sphi 0, %s27
      %p24 = scmp.ge.s32.totalorder %s23, 4
      %s33 = sphi 0, %s35
      %s36 = sphi 0, %s33
      %s37 = sphi 0, %s36
      %s53 = sphi 0, %s37
      %s59 = sphi 0, %s61
      %s62 = sphi 0, %s59
      %s63 = sphi 0, %s62
      %s79 = sphi 0, %s63
      %s85 = sphi 0, %s87
      %s88 = sphi 0, %s85
      %s89 = sphi 0, %s88
      %s105 = sphi 0, %s89
      %s109 = sphi 0, %s109
      %s111 = sphi 0, %s109
      %s112 = sphi 0, %s111
      %s126 = sphi 0, %s112
      %s130 = sphi 0, %s130
      %s132 = sphi 0, %s130
      %s133 = sphi 0, %s132
      %s147 = sphi 0, %s133
      %s151 = sphi 0, %s151
      %s153 = sphi 0, %s151
      %s154 = sphi 0, %s153
      %s168 = sphi 0, %s154
      %s172 = sphi 0, %s172
      %s174 = sphi 0, %s172
      %s175 = sphi 0, %s174
      %s189 = sphi 0, %s175
      %s193 = sphi 0, %s193
      %s195 = sphi 0, %s193
      %s196 = sphi 0, %s195
      %s210 = sphi 0, %s196
      %s214 = sphi 0, %s214
      %s216 = sphi 0, %s214
      %s217 = sphi 0, %s216
      %s231 = sphi 0, %s217
      %s235 = sphi 0, %s235
      %s237 = sphi 0, %s235
      %s238 = sphi 0, %s237
      %s252 = sphi 0, %s238
      %s256 = sphi 0, %s256
      %s258 = sphi 0, %s256
      %s259 = sphi 0, %s258
      %s273 = sphi 0, %s259
      %s277 = sphi 0, %s277
      %s279 = sphi 0, %s277
      %s280 = sphi 0, %s279
      %s294 = sphi 0, %s280
      %s298 = sphi 0, %s298
      %s300 = sphi 0, %s298
      %s301 = sphi 0, %s300
      %s315 = sphi 0, %s301
      %s319 = sphi 0, %s319
      %s321 = sphi 0, %s319
      %s322 = sphi 0, %s321
      %s336 = sphi 0, %s322
      %s342 = sphi 0, %s344
      %s345 = sphi 0, %s342
      %s346 = sphi 0, %s345
      %s362 = sphi 0, %s346
    $region4: #{tpu_custom_call.1} parent=1 // loop_header_branch
      %26 = sbr.rel (%p24) target = $region8
    $region5: #{tpu_custom_call.1} parent=1 // loop_body
      %s28 = ssub.s32 %s23, 1
      %s29 = ssub.s32 %s23, 2
      %s30 = sadd.s32 %s23, 1
      %s31 = ssub.s32 %s23, %s30
      %p32 = scmp.eq.s32.totalorder %s31, 0
      %s34 = sadd.s32 %s33, 1
      %s35 = scalar_select %p32, %s33, %s34
      %p38 = pneg %p32
      %p39 = scmp.eq.s32.totalorder %s23, 1
      %p40 = por %p38, %p39
      %p41 = scmp.ne.s32.totalorder %s33, %s36
      %p42 = scmp.eq.s32.totalorder %s23, 0
      %p43 = por %p41, %p42
      %p44 = scmp.ne.s32.totalorder %s33, %s36
      %p45 = scmp.eq.s32.totalorder %s28, 1
      %p46 = por %p44, %p45
      %p47 = scmp.ne.s32.totalorder %s36, %s37
      %p48 = scmp.eq.s32.totalorder %s28, 0
      %p49 = por %p47, %p48
      %p50 = scmp.ne.s32.totalorder %s36, %s37
      %p51 = scmp.eq.s32.totalorder %s29, 1
      %p52 = por %p50, %p51
      %p54 = scmp.ne.s32.totalorder %s37, %s53
      %p55 = scmp.eq.s32.totalorder %s29, 0
      %p56 = por %p54, %p55
      %s57 = ssub.s32 %s23, %s30
      %p58 = scmp.eq.s32.totalorder %s57, 0
      %s60 = sadd.s32 %s59, 1
      %s61 = scalar_select %p58, %s59, %s60
      %p64 = pneg %p58
      %p65 = scmp.eq.s32.totalorder %s23, 1
      %p66 = por %p64, %p65
      %p67 = scmp.ne.s32.totalorder %s59, %s62
      %p68 = scmp.eq.s32.totalorder %s23, 0
      %p69 = por %p67, %p68
      %p70 = scmp.ne.s32.totalorder %s59, %s62
      %p71 = scmp.eq.s32.totalorder %s28, 1
      %p72 = por %p70, %p71
      %p73 = scmp.ne.s32.totalorder %s62, %s63
      %p74 = scmp.eq.s32.totalorder %s28, 0
      %p75 = por %p73, %p74
      %p76 = scmp.ne.s32.totalorder %s62, %s63
      %p77 = scmp.eq.s32.totalorder %s29, 1
      %p78 = por %p76, %p77
      %p80 = scmp.ne.s32.totalorder %s63, %s79
      %p81 = scmp.eq.s32.totalorder %s29, 0
      %p82 = por %p80, %p81
      %s83 = ssub.s32 %s23, %s30
      %p84 = scmp.eq.s32.totalorder %s83, 0
      %s86 = sadd.s32 %s85, 1
      %s87 = scalar_select %p84, %s85, %s86
      %p90 = pneg %p84
      %p91 = scmp.eq.s32.totalorder %s23, 1
      %p92 = por %p90, %p91
      %p93 = scmp.ne.s32.totalorder %s85, %s88
      %p94 = scmp.eq.s32.totalorder %s23, 0
      %p95 = por %p93, %p94
      %p96 = scmp.ne.s32.totalorder %s85, %s88
      %p97 = scmp.eq.s32.totalorder %s28, 1
      %p98 = por %p96, %p97
      %p99 = scmp.ne.s32.totalorder %s88, %s89
      %p100 = scmp.eq.s32.totalorder %s28, 0
      %p101 = por %p99, %p100
      %p102 = scmp.ne.s32.totalorder %s88, %s89
      %p103 = scmp.eq.s32.totalorder %s29, 1
      %p104 = por %p102, %p103
      %p106 = scmp.ne.s32.totalorder %s89, %s105
      %p107 = scmp.eq.s32.totalorder %s29, 0
      %p108 = por %p106, %p107
      %s110 = sadd.s32 %s109, 1
      %p113 = scmp.eq.s32.totalorder %s23, 1
      %p114 = scmp.ne.s32.totalorder %s109, %s111
      %p115 = scmp.eq.s32.totalorder %s23, 0
      %p116 = por %p114, %p115
      %p117 = scmp.ne.s32.totalorder %s109, %s111
      %p118 = scmp.eq.s32.totalorder %s28, 1
      %p119 = por %p117, %p118
      %p120 = scmp.ne.s32.totalorder %s111, %s112
      %p121 = scmp.eq.s32.totalorder %s28, 0
      %p122 = por %p120, %p121
      %p123 = scmp.ne.s32.totalorder %s111, %s112
      %p124 = scmp.eq.s32.totalorder %s29, 1
      %p125 = por %p123, %p124
      %p127 = scmp.ne.s32.totalorder %s112, %s126
      %p128 = scmp.eq.s32.totalorder %s29, 0
      %p129 = por %p127, %p128
      %s131 = sadd.s32 %s130, 1
      %p134 = scmp.eq.s32.totalorder %s23, 1
      %p135 = scmp.ne.s32.totalorder %s130, %s132
      %p136 = scmp.eq.s32.totalorder %s23, 0
      %p137 = por %p135, %p136
      %p138 = scmp.ne.s32.totalorder %s130, %s132
      %p139 = scmp.eq.s32.totalorder %s28, 1
      %p140 = por %p138, %p139
      %p141 = scmp.ne.s32.totalorder %s132, %s133
      %p142 = scmp.eq.s32.totalorder %s28, 0
      %p143 = por %p141, %p142
      %p144 = scmp.ne.s32.totalorder %s132, %s133
      %p145 = scmp.eq.s32.totalorder %s29, 1
      %p146 = por %p144, %p145
      %p148 = scmp.ne.s32.totalorder %s133, %s147
      %p149 = scmp.eq.s32.totalorder %s29, 0
      %p150 = por %p148, %p149
      %s152 = sadd.s32 %s151, 1
      %p155 = scmp.eq.s32.totalorder %s23, 1
      %p156 = scmp.ne.s32.totalorder %s151, %s153
      %p157 = scmp.eq.s32.totalorder %s23, 0
      %p158 = por %p156, %p157
      %p159 = scmp.ne.s32.totalorder %s151, %s153
      %p160 = scmp.eq.s32.totalorder %s28, 1
      %p161 = por %p159, %p160
      %p162 = scmp.ne.s32.totalorder %s153, %s154
      %p163 = scmp.eq.s32.totalorder %s28, 0
      %p164 = por %p162, %p163
      %p165 = scmp.ne.s32.totalorder %s153, %s154
      %p166 = scmp.eq.s32.totalorder %s29, 1
      %p167 = por %p165, %p166
      %p169 = scmp.ne.s32.totalorder %s154, %s168
      %p170 = scmp.eq.s32.totalorder %s29, 0
      %p171 = por %p169, %p170
      %s173 = sadd.s32 %s172, 1
      %p176 = scmp.eq.s32.totalorder %s23, 1
      %p177 = scmp.ne.s32.totalorder %s172, %s174
      %p178 = scmp.eq.s32.totalorder %s23, 0
      %p179 = por %p177, %p178
      %p180 = scmp.ne.s32.totalorder %s172, %s174
      %p181 = scmp.eq.s32.totalorder %s28, 1
      %p182 = por %p180, %p181
      %p183 = scmp.ne.s32.totalorder %s174, %s175
      %p184 = scmp.eq.s32.totalorder %s28, 0
      %p185 = por %p183, %p184
      %p186 = scmp.ne.s32.totalorder %s174, %s175
      %p187 = scmp.eq.s32.totalorder %s29, 1
      %p188 = por %p186, %p187
      %p190 = scmp.ne.s32.totalorder %s175, %s189
      %p191 = scmp.eq.s32.totalorder %s29, 0
      %p192 = por %p190, %p191
      %s194 = sadd.s32 %s193, 1
      %p197 = scmp.eq.s32.totalorder %s23, 1
      %p198 = scmp.ne.s32.totalorder %s193, %s195
      %p199 = scmp.eq.s32.totalorder %s23, 0
      %p200 = por %p198, %p199
      %p201 = scmp.ne.s32.totalorder %s193, %s195
      %p202 = scmp.eq.s32.totalorder %s28, 1
      %p203 = por %p201, %p202
      %p204 = scmp.ne.s32.totalorder %s195, %s196
      %p205 = scmp.eq.s32.totalorder %s28, 0
      %p206 = por %p204, %p205
      %p207 = scmp.ne.s32.totalorder %s195, %s196
      %p208 = scmp.eq.s32.totalorder %s29, 1
      %p209 = por %p207, %p208
      %p211 = scmp.ne.s32.totalorder %s196, %s210
      %p212 = scmp.eq.s32.totalorder %s29, 0
      %p213 = por %p211, %p212
      %s215 = sadd.s32 %s214, 1
      %p218 = scmp.eq.s32.totalorder %s23, 1
      %p219 = scmp.ne.s32.totalorder %s214, %s216
      %p220 = scmp.eq.s32.totalorder %s23, 0
      %p221 = por %p219, %p220
      %p222 = scmp.ne.s32.totalorder %s214, %s216
      %p223 = scmp.eq.s32.totalorder %s28, 1
      %p224 = por %p222, %p223
      %p225 = scmp.ne.s32.totalorder %s216, %s217
      %p226 = scmp.eq.s32.totalorder %s28, 0
      %p227 = por %p225, %p226
      %p228 = scmp.ne.s32.totalorder %s216, %s217
      %p229 = scmp.eq.s32.totalorder %s29, 1
      %p230 = por %p228, %p229
      %p232 = scmp.ne.s32.totalorder %s217, %s231
      %p233 = scmp.eq.s32.totalorder %s29, 0
      %p234 = por %p232, %p233
      %s236 = sadd.s32 %s235, 1
      %p239 = scmp.eq.s32.totalorder %s23, 1
      %p240 = scmp.ne.s32.totalorder %s235, %s237
      %p241 = scmp.eq.s32.totalorder %s23, 0
      %p242 = por %p240, %p241
      %p243 = scmp.ne.s32.totalorder %s235, %s237
      %p244 = scmp.eq.s32.totalorder %s28, 1
      %p245 = por %p243, %p244
      %p246 = scmp.ne.s32.totalorder %s237, %s238
      %p247 = scmp.eq.s32.totalorder %s28, 0
      %p248 = por %p246, %p247
      %p249 = scmp.ne.s32.totalorder %s237, %s238
      %p250 = scmp.eq.s32.totalorder %s29, 1
      %p251 = por %p249, %p250
      %p253 = scmp.ne.s32.totalorder %s238, %s252
      %p254 = scmp.eq.s32.totalorder %s29, 0
      %p255 = por %p253, %p254
      %s257 = sadd.s32 %s256, 1
      %p260 = scmp.eq.s32.totalorder %s23, 1
      %p261 = scmp.ne.s32.totalorder %s256, %s258
      %p262 = scmp.eq.s32.totalorder %s23, 0
      %p263 = por %p261, %p262
      %p264 = scmp.ne.s32.totalorder %s256, %s258
      %p265 = scmp.eq.s32.totalorder %s28, 1
      %p266 = por %p264, %p265
      %p267 = scmp.ne.s32.totalorder %s258, %s259
      %p268 = scmp.eq.s32.totalorder %s28, 0
      %p269 = por %p267, %p268
      %p270 = scmp.ne.s32.totalorder %s258, %s259
      %p271 = scmp.eq.s32.totalorder %s29, 1
      %p272 = por %p270, %p271
      %p274 = scmp.ne.s32.totalorder %s259, %s273
      %p275 = scmp.eq.s32.totalorder %s29, 0
      %p276 = por %p274, %p275
      %s278 = sadd.s32 %s277, 1
      %p281 = scmp.eq.s32.totalorder %s23, 1
      %p282 = scmp.ne.s32.totalorder %s277, %s279
      %p283 = scmp.eq.s32.totalorder %s23, 0
      %p284 = por %p282, %p283
      %p285 = scmp.ne.s32.totalorder %s277, %s279
      %p286 = scmp.eq.s32.totalorder %s28, 1
      %p287 = por %p285, %p286
      %p288 = scmp.ne.s32.totalorder %s279, %s280
      %p289 = scmp.eq.s32.totalorder %s28, 0
      %p290 = por %p288, %p289
      %p291 = scmp.ne.s32.totalorder %s279, %s280
      %p292 = scmp.eq.s32.totalorder %s29, 1
      %p293 = por %p291, %p292
      %p295 = scmp.ne.s32.totalorder %s280, %s294
      %p296 = scmp.eq.s32.totalorder %s29, 0
      %p297 = por %p295, %p296
      %s299 = sadd.s32 %s298, 1
      %p302 = scmp.eq.s32.totalorder %s23, 1
      %p303 = scmp.ne.s32.totalorder %s298, %s300
      %p304 = scmp.eq.s32.totalorder %s23, 0
      %p305 = por %p303, %p304
      %p306 = scmp.ne.s32.totalorder %s298, %s300
      %p307 = scmp.eq.s32.totalorder %s28, 1
      %p308 = por %p306, %p307
      %p309 = scmp.ne.s32.totalorder %s300, %s301
      %p310 = scmp.eq.s32.totalorder %s28, 0
      %p311 = por %p309, %p310
      %p312 = scmp.ne.s32.totalorder %s300, %s301
      %p313 = scmp.eq.s32.totalorder %s29, 1
      %p314 = por %p312, %p313
      %p316 = scmp.ne.s32.totalorder %s301, %s315
      %p317 = scmp.eq.s32.totalorder %s29, 0
      %p318 = por %p316, %p317
      %s320 = sadd.s32 %s319, 1
      %p323 = scmp.eq.s32.totalorder %s23, 1
      %p324 = scmp.ne.s32.totalorder %s319, %s321
      %p325 = scmp.eq.s32.totalorder %s23, 0
      %p326 = por %p324, %p325
      %p327 = scmp.ne.s32.totalorder %s319, %s321
      %p328 = scmp.eq.s32.totalorder %s28, 1
      %p329 = por %p327, %p328
      %p330 = scmp.ne.s32.totalorder %s321, %s322
      %p331 = scmp.eq.s32.totalorder %s28, 0
      %p332 = por %p330, %p331
      %p333 = scmp.ne.s32.totalorder %s321, %s322
      %p334 = scmp.eq.s32.totalorder %s29, 1
      %p335 = por %p333, %p334
      %p337 = scmp.ne.s32.totalorder %s322, %s336
      %p338 = scmp.eq.s32.totalorder %s29, 0
      %p339 = por %p337, %p338
      %s340 = ssub.s32 %s23, %s30
      %p341 = scmp.eq.s32.totalorder %s340, 0
      %s343 = sadd.s32 %s342, 1
      %s344 = scalar_select %p341, %s342, %s343
      %p347 = pneg %p341
      %p348 = scmp.eq.s32.totalorder %s23, 1
      %p349 = por %p347, %p348
      %p350 = scmp.ne.s32.totalorder %s342, %s345
      %p351 = scmp.eq.s32.totalorder %s23, 0
      %p352 = por %p350, %p351
      %p353 = scmp.ne.s32.totalorder %s342, %s345
      %p354 = scmp.eq.s32.totalorder %s28, 1
      %p355 = por %p353, %p354
      %p356 = scmp.ne.s32.totalorder %s345, %s346
      %p357 = scmp.eq.s32.totalorder %s28, 0
      %p358 = por %p356, %p357
      %p359 = scmp.ne.s32.totalorder %s345, %s346
      %p360 = scmp.eq.s32.totalorder %s29, 1
      %p361 = por %p359, %p360
      %p363 = scmp.ne.s32.totalorder %s346, %s362
      %p364 = scmp.eq.s32.totalorder %s29, 0
      %p365 = por %p363, %p364
      %p366 = scmp.le.s32.totalorder 1, %s23
      %p367 = scmp.lt.s32.totalorder %s23, 3
      %p368 = pnand %p366, %p367
      %p369 = pneg %p368
      // Predicated region
      $region9: #{tpu_custom_call.1} parent=5 // pred_check
        _
      $region10: #{tpu_custom_call.1} parent=5 // pred_check_branch
        %371 = sbr.rel (%p368) target = $region12
      $region11: #{tpu_custom_call.1} parent=5 // pred_region
        %s372 = ssub.s32 %s23, 1
        // Predicated region
        $region13: #{tpu_custom_call.1} parent=11 // pred_check
          %p373 = pneg %p122
        $region14: #{tpu_custom_call.1} parent=11 // pred_check_branch
          %375 = sbr.rel (%p373) target = $region16
        $region15: #{tpu_custom_call.1} parent=11 // pred_region
          _
        $region16: #{tpu_custom_call.1} parent=11 // pred_fallthru
          _
        // Predicated region
        $region17: #{tpu_custom_call.1} parent=11 // pred_check
          %p376 = pneg %p143
        $region18: #{tpu_custom_call.1} parent=11 // pred_check_branch
          %378 = sbr.rel (%p376) target = $region20
        $region19: #{tpu_custom_call.1} parent=11 // pred_region
          _
        $region20: #{tpu_custom_call.1} parent=11 // pred_fallthru
          _
        // Predicated region
        $region21: #{tpu_custom_call.1} parent=11 // pred_check
          %p379 = pneg %p164
        $region22: #{tpu_custom_call.1} parent=11 // pred_check_branch
          %381 = sbr.rel (%p379) target = $region24
        $region23: #{tpu_custom_call.1} parent=11 // pred_region
          _
        $region24: #{tpu_custom_call.1} parent=11 // pred_fallthru
          _
        // Predicated region
        $region25: #{tpu_custom_call.1} parent=11 // pred_check
          %p382 = pneg %p185
        $region26: #{tpu_custom_call.1} parent=11 // pred_check_branch
          %384 = sbr.rel (%p382) target = $region28
        $region27: #{tpu_custom_call.1} parent=11 // pred_region
          _
        $region28: #{tpu_custom_call.1} parent=11 // pred_fallthru
          _
        // Predicated region
        $region29: #{tpu_custom_call.1} parent=11 // pred_check
          %p385 = pneg %p206
        $region30: #{tpu_custom_call.1} parent=11 // pred_check_branch
          %387 = sbr.rel (%p385) target = $region32
        $region31: #{tpu_custom_call.1} parent=11 // pred_region
          _
        $region32: #{tpu_custom_call.1} parent=11 // pred_fallthru
          _
        // Predicated region
        $region33: #{tpu_custom_call.1} parent=11 // pred_check
          %p388 = pneg %p227
        $region34: #{tpu_custom_call.1} parent=11 // pred_check_branch
          %390 = sbr.rel (%p388) target = $region36
        $region35: #{tpu_custom_call.1} parent=11 // pred_region
          _
        $region36: #{tpu_custom_call.1} parent=11 // pred_fallthru
          _
        // Predicated region
        $region37: #{tpu_custom_call.1} parent=11 // pred_check
          %p391 = pneg %p248
        $region38: #{tpu_custom_call.1} parent=11 // pred_check_branch
          %393 = sbr.rel (%p391) target = $region40
        $region39: #{tpu_custom_call.1} parent=11 // pred_region
          _
        $region40: #{tpu_custom_call.1} parent=11 // pred_fallthru
          _
        // Predicated region
        $region41: #{tpu_custom_call.1} parent=11 // pred_check
          %p394 = pneg %p269
        $region42: #{tpu_custom_call.1} parent=11 // pred_check_branch
          %396 = sbr.rel (%p394) target = $region44
        $region43: #{tpu_custom_call.1} parent=11 // pred_region
          _
        $region44: #{tpu_custom_call.1} parent=11 // pred_fallthru
          _
        // Predicated region
        $region45: #{tpu_custom_call.1} parent=11 // pred_check
          %p397 = pneg %p290
        $region46: #{tpu_custom_call.1} parent=11 // pred_check_branch
          %399 = sbr.rel (%p397) target = $region48
        $region47: #{tpu_custom_call.1} parent=11 // pred_region
          _
        $region48: #{tpu_custom_call.1} parent=11 // pred_fallthru
          _
        // Predicated region
        $region49: #{tpu_custom_call.1} parent=11 // pred_check
          %p400 = pneg %p311
        $region50: #{tpu_custom_call.1} parent=11 // pred_check_branch
          %402 = sbr.rel (%p400) target = $region52
        $region51: #{tpu_custom_call.1} parent=11 // pred_region
          _
        $region52: #{tpu_custom_call.1} parent=11 // pred_fallthru
          _
        // Predicated region
        $region53: #{tpu_custom_call.1} parent=11 // pred_check
          %p403 = pneg %p332
        $region54: #{tpu_custom_call.1} parent=11 // pred_check_branch
          %405 = sbr.rel (%p403) target = $region56
        $region55: #{tpu_custom_call.1} parent=11 // pred_region
          _
        $region56: #{tpu_custom_call.1} parent=11 // pred_fallthru
          _
      $region12: #{tpu_custom_call.1} parent=5 // pred_fallthru
        _
      %p406 = scmp.lt.s32.totalorder %s23, 2
      // Predicated region
      $region57: #{tpu_custom_call.1} parent=5 // pred_check
        %p407 = pneg %p406
      $region58: #{tpu_custom_call.1} parent=5 // pred_check_branch
        %409 = sbr.rel (%p407) target = $region60
      $region59: #{tpu_custom_call.1} parent=5 // pred_region
        // Predicated region
        $region61: #{tpu_custom_call.1} parent=59 // pred_check
          %p410 = pneg %p43
        $region62: #{tpu_custom_call.1} parent=59 // pred_check_branch
          %412 = sbr.rel (%p410) target = $region64
        $region63: #{tpu_custom_call.1} parent=59 // pred_region
          %s413 = smul.u32 16, %s23
          %p414 = scmp.lt.s32.totalorder %s413, 31
          %s415 = scalar_select %p414, %s413, 31
          %s416 = smul.addr %s415, 8
          %s417 = scalar_lea.vmem %s0, %s416
          %s418 = smul.u32 16, %s23
        $region64: #{tpu_custom_call.1} parent=59 // pred_fallthru
          _
        // Predicated region
        $region65: #{tpu_custom_call.1} parent=59 // pred_check
          %p419 = pneg %p69
        $region66: #{tpu_custom_call.1} parent=59 // pred_check_branch
          %421 = sbr.rel (%p419) target = $region68
        $region67: #{tpu_custom_call.1} parent=59 // pred_region
          %s422 = smul.u32 16, %s23
          %p423 = scmp.lt.s32.totalorder %s422, 31
          %s424 = scalar_select %p423, %s422, 31
          %s425 = smul.addr %s424, 4
          %s426 = scalar_lea.vmem %s1, %s425
          %s427 = smul.u32 16, %s23
        $region68: #{tpu_custom_call.1} parent=59 // pred_fallthru
          _
        // Predicated region
        $region69: #{tpu_custom_call.1} parent=59 // pred_check
          %p428 = pneg %p95
        $region70: #{tpu_custom_call.1} parent=59 // pred_check_branch
          %430 = sbr.rel (%p428) target = $region72
        $region71: #{tpu_custom_call.1} parent=59 // pred_region
          %s431 = smul.u32 2, %s23
          %p432 = scmp.lt.s32.totalorder %s431, 3
          %s433 = scalar_select %p432, %s431, 3
          %s434 = smul.addr %s433, 3
          %s435 = smul.addr %s434, 4
          %s436 = scalar_lea.vmem %s2, %s435
          %s437 = smul.u32 2, %s23
        $region72: #{tpu_custom_call.1} parent=59 // pred_fallthru
          _
      $region60: #{tpu_custom_call.1} parent=5 // pred_fallthru
        _
      %p438 = scmp.le.s32.totalorder 1, %s23
      %p439 = scmp.lt.s32.totalorder %s23, 3
      %p440 = pnand %p438, %p439
      %p441 = pneg %p440
      // Predicated region
      $region73: #{tpu_custom_call.1} parent=5 // pred_check
        _
      $region74: #{tpu_custom_call.1} parent=5 // pred_check_branch
        %443 = sbr.rel (%p440) target = $region76
      $region75: #{tpu_custom_call.1} parent=5 // pred_region
        %s444 = ssub.s32 %s23, 1
        %s445 = smul.u32 16, %s28
        %p446 = scmp.lt.s32.totalorder %s445, 31
        %s447 = scalar_select %p446, %s445, 31
        %s448 = smul.addr %s447, 8
        %s449 = scalar_lea.vmem %s0, %s448
        %p450 = pneg %p49
        %p451 = pneg %p46
        %s452 = smul.u32 16, %s28
        %p453 = scmp.lt.s32.totalorder %s452, 31
        %s454 = scalar_select %p453, %s452, 31
        %s455 = smul.addr %s454, 4
        %s456 = scalar_lea.vmem %s1, %s455
        %p457 = pneg %p75
        %p458 = pneg %p72
        %s459 = smul.u32 2, %s28
        %p460 = scmp.lt.s32.totalorder %s459, 3
        %s461 = scalar_select %p460, %s459, 3
        %s462 = smul.addr %s461, 3
        %s463 = smul.addr %s462, 4
        %s464 = scalar_lea.vmem %s2, %s463
        %p465 = pneg %p101
        %p466 = pneg %p98
        %p467 = pneg %p122
        %p468 = pneg %p119
        %p469 = pneg %p143
        %p470 = pneg %p140
        %p471 = pneg %p164
        %p472 = pneg %p161
        %p473 = pneg %p185
        %p474 = pneg %p182
        %p475 = pneg %p206
        %p476 = pneg %p203
        %p477 = pneg %p227
        %p478 = pneg %p224
        %p479 = pneg %p248
        %p480 = pneg %p245
        %p481 = pneg %p269
        %p482 = pneg %p266
        %p483 = pneg %p290
        %p484 = pneg %p287
        %p485 = pneg %p311
        %p486 = pneg %p308
        %p487 = pneg %p332
        %p488 = pneg %p329
        %p489 = pneg %p358
        %p490 = pneg %p355
        %s491 = sand.u32 %s345, 1
        %s492 = scalar_lea.sflag [#allocation3], %s491
        %s493 = sand.u32 %s345, 1
        %s494 = smul.addr %s493, 144
        %s495 = scalar_lea.vmem [#allocation2], %s494
        %s496 = smul.u32 16, %s28
        %p497 = scmp.lt.s32.totalorder %s496, 31
        %s498 = scalar_select %p497, %s496, 31
        %s499 = smul.addr %s498, 8
        %s500 = scalar_lea.vmem %s0, %s499
        %s501 = smul.u32 16, %s28
        %s502 = smul.u32 16, %s28
        %p503 = scmp.lt.s32.totalorder %s502, 31
        %s504 = scalar_select %p503, %s502, 31
        %s505 = smul.addr %s504, 4
        %s506 = scalar_lea.vmem %s1, %s505
        %s507 = smul.u32 16, %s28
        %s508 = smul.u32 2, %s28
        %p509 = scmp.lt.s32.totalorder %s508, 3
        %s510 = scalar_select %p509, %s508, 3
        %s511 = smul.addr %s510, 3
        %s512 = smul.addr %s511, 4
        %s513 = scalar_lea.vmem %s2, %s512
        %s514 = smul.u32 2, %s28
        %s515 = smul.u32 2, %s28
        %v517 = vld [vmem:[%s500] sm:$0xff]
        %v518 = vld [vmem:[%s500 + $0x8] sm:$0xff]
        %v519 = vld [vmem:[%s500 + $0x10] sm:$0xff]
        %v520 = vld [vmem:[%s500 + $0x18] sm:$0xff]
        %v521 = vld [vmem:[%s500 + $0x20] sm:$0xff]
        %v522 = vld [vmem:[%s500 + $0x28] sm:$0xff]
        %v523 = vld [vmem:[%s500 + $0x30] sm:$0xff]
        %v524 = vld [vmem:[%s500 + $0x38] sm:$0xff]
        %v525 = vld [vmem:[%s500 + $0x40] sm:$0xff]
        %v526 = vld [vmem:[%s500 + $0x48] sm:$0xff]
        %v527 = vld [vmem:[%s500 + $0x50] sm:$0xff]
        %v528 = vld [vmem:[%s500 + $0x58] sm:$0xff]
        %v529 = vld [vmem:[%s500 + $0x60] sm:$0xff]
        %v530 = vld [vmem:[%s500 + $0x68] sm:$0xff]
        %v531 = vld [vmem:[%s500 + $0x70] sm:$0xff]
        %v532 = vld [vmem:[%s500 + $0x78] sm:$0xff]
        %v533 = vld [vmem:[%s506] sm:$0xf]
        %v534 = vld [vmem:[%s506 + $0x4] sm:$0xf]
        %v535 = vld [vmem:[%s506 + $0x8] sm:$0xf]
        %v536 = vld [vmem:[%s506 + $0xc] sm:$0xf]
        %v537 = vld [vmem:[%s506 + $0x10] sm:$0xf]
        %v538 = vld [vmem:[%s506 + $0x14] sm:$0xf]
        %v539 = vld [vmem:[%s506 + $0x18] sm:$0xf]
        %v540 = vld [vmem:[%s506 + $0x1c] sm:$0xf]
        %v541 = vld [vmem:[%s506 + $0x20] sm:$0xf]
        %v542 = vld [vmem:[%s506 + $0x24] sm:$0xf]
        %v543 = vld [vmem:[%s506 + $0x28] sm:$0xf]
        %v544 = vld [vmem:[%s506 + $0x2c] sm:$0xf]
        %v545 = vld [vmem:[%s506 + $0x30] sm:$0xf]
        %v546 = vld [vmem:[%s506 + $0x34] sm:$0xf]
        %v547 = vld [vmem:[%s506 + $0x38] sm:$0xf]
        %v548 = vld [vmem:[%s506 + $0x3c] sm:$0xf]
        %v549 = vld [vmem:[%s3] sm:$0xf]
        %v550 = vld [vmem:[%s4] sm:$0x1]
        %v552 = vlaneseq
        %v553 = vshrl.u32 %v552, 7
        %v554 = vsub.s32 0, %v553
        %v555 = vrot.slane %v550, %v554
        %v573 = vunpack.c.l.b16 %v533
        %v574 = vunpack.c.l.b16 %v534
        %v575 = vunpack.c.l.b16 %v535
        %v576 = vunpack.c.l.b16 %v536
        %v577 = vunpack.c.l.b16 %v537
        %v578 = vunpack.c.l.b16 %v538
        %v579 = vunpack.c.l.b16 %v539
        %v580 = vunpack.c.l.b16 %v540
        %v581 = vunpack.c.l.b16 %v541
        %v582 = vunpack.c.l.b16 %v542
        %v583 = vunpack.c.l.b16 %v543
        %v584 = vunpack.c.l.b16 %v544
        %v585 = vunpack.c.l.b16 %v545
        %v586 = vunpack.c.l.b16 %v546
        %v587 = vunpack.c.l.b16 %v547
        %v588 = vunpack.c.l.b16 %v548
        %v589 = vpack.c.b16 %v574, %v573
        %v590 = vpack.c.b16 %v576, %v575
        %v591 = vpack.c.b16 %v578, %v577
        %v592 = vpack.c.b16 %v580, %v579
        %v593 = vpack.c.b16 %v582, %v581
        %v594 = vpack.c.b16 %v584, %v583
        %v595 = vpack.c.b16 %v586, %v585
        %v596 = vpack.c.b16 %v588, %v587
        %vm597 = vcmask 64512
        %v599 = vsel %vm597, %v589, 0
        %v602 = vsel %vm597, %v590, 0
        %v605 = vsel %vm597, %v591, 0
        %v608 = vsel %vm597, %v592, 0
        %v611 = vsel %vm597, %v593, 0
        %v614 = vsel %vm597, %v594, 0
        %v617 = vsel %vm597, %v595, 0
        %v620 = vsel %vm597, %v596, 0
        %vm622 = vcmask 1043456
        %v624 = vsel %vm622, %v549, 0
        %626 = vmatprep.subr.bf16.mxu0 0
        %627 = vmatpush1.bf16.msra.mxu0 %v624
        %628 = vmatprep.subr.bf16.mxu0 0
        %629 = vmatpush1.bf16.msra.mxu0 0
        %630 = vmatprep.subr.bf16.mxu0 0
        %631 = vmatpush1.bf16.msra.mxu0 0
        %632 = vmatprep.subr.bf16.mxu0 0
        %633 = vmatpush1.bf16.msra.mxu0 0
        %634 = vmatprep.subr.bf16.mxu0 0
        %635 = vmatpush1.bf16.msra.mxu0 0
        %636 = vmatprep.subr.bf16.mxu0 0
        %637 = vmatpush1.bf16.msra.mxu0 0
        %638 = vmatprep.subr.bf16.mxu0 0
        %639 = vmatpush1.bf16.msra.mxu0 0
        %640 = vmatprep.subr.bf16.mxu0 0
        %641 = vmatpush1.bf16.msra.mxu0 0
        %642 = vmatprep.subr.bf16.mxu0 0
        %643 = vmatpush1.bf16.msra.mxu0 0
        %644 = vmatprep.subr.bf16.mxu0 0
        %645 = vmatpush1.bf16.msra.mxu0 0
        %646 = vmatprep.subr.bf16.mxu0 0
        %647 = vmatpush1.bf16.msra.mxu0 0
        %648 = vmatprep.subr.bf16.mxu0 0
        %649 = vmatpush1.bf16.msra.mxu0 0
        %650 = vmatprep.subr.bf16.mxu0 0
        %651 = vmatpush1.bf16.msra.mxu0 0
        %652 = vmatprep.subr.bf16.mxu0 0
        %653 = vmatpush1.bf16.msra.mxu0 0
        %654 = vmatprep.subr.bf16.mxu0 0
        %655 = vmatpush1.bf16.msra.mxu0 0
        %656 = vmatprep.subr.bf16.mxu0 0
        %657 = vmatpush1.bf16.msra.mxu0 0
        %658 = vmatprep.mubr.bf16.mxu0 0
        %659 = vmatmul.mubr.bf16.gmra.mrb[0].mxu0 %v599
        %v660 = vpop.f32.mrb[0].mxu0
        %v661 = vadd.f32 %v555, %v660
        %v662 = vpop.f32.mrb[0].mxu0
        %v663 = vpop.f32.mrb[0].mxu0
        %v664 = vadd.f32 %v555, %v663
        %v665 = vpop.f32.mrb[0].mxu0
        %666 = vmatprep.mubr.bf16.mxu0 0
        %667 = vmatmul.mubr.bf16.gmra.mrb[0].mxu0 %v602
        %v668 = vpop.f32.mrb[0].mxu0
        %v669 = vadd.f32 %v555, %v668
        %v670 = vpop.f32.mrb[0].mxu0
        %v671 = vpop.f32.mrb[0].mxu0
        %v672 = vadd.f32 %v555, %v671
        %v673 = vpop.f32.mrb[0].mxu0
        %674 = vmatprep.mubr.bf16.mxu0 0
        %675 = vmatmul.mubr.bf16.gmra.mrb[0].mxu0 %v605
        %v676 = vpop.f32.mrb[0].mxu0
        %v677 = vadd.f32 %v555, %v676
        %v678 = vpop.f32.mrb[0].mxu0
        %v679 = vpop.f32.mrb[0].mxu0
        %v680 = vadd.f32 %v555, %v679
        %v681 = vpop.f32.mrb[0].mxu0
        %682 = vmatprep.mubr.bf16.mxu0 0
        %683 = vmatmul.mubr.bf16.gmra.mrb[0].mxu0 %v608
        %v684 = vpop.f32.mrb[0].mxu0
        %v685 = vadd.f32 %v555, %v684
        %v686 = vpop.f32.mrb[0].mxu0
        %v687 = vpop.f32.mrb[0].mxu0
        %v688 = vadd.f32 %v555, %v687
        %v689 = vpop.f32.mrb[0].mxu0
        %690 = vmatprep.mubr.bf16.mxu0 0
        %691 = vmatmul.mubr.bf16.gmra.mrb[0].mxu0 %v611
        %v692 = vpop.f32.mrb[0].mxu0
        %v693 = vadd.f32 %v555, %v692
        %v694 = vpop.f32.mrb[0].mxu0
        %v695 = vpop.f32.mrb[0].mxu0
        %v696 = vadd.f32 %v555, %v695
        %v697 = vpop.f32.mrb[0].mxu0
        %698 = vmatprep.mubr.bf16.mxu0 0
        %699 = vmatmul.mubr.bf16.gmra.mrb[0].mxu0 %v614
        %v700 = vpop.f32.mrb[0].mxu0
        %v701 = vadd.f32 %v555, %v700
        %v702 = vpop.f32.mrb[0].mxu0
        %v703 = vpop.f32.mrb[0].mxu0
        %v704 = vadd.f32 %v555, %v703
        %v705 = vpop.f32.mrb[0].mxu0
        %706 = vmatprep.mubr.bf16.mxu0 0
        %707 = vmatmul.mubr.bf16.gmra.mrb[0].mxu0 %v617
        %v708 = vpop.f32.mrb[0].mxu0
        %v709 = vadd.f32 %v555, %v708
        %v710 = vpop.f32.mrb[0].mxu0
        %v711 = vpop.f32.mrb[0].mxu0
        %v712 = vadd.f32 %v555, %v711
        %v713 = vpop.f32.mrb[0].mxu0
        %714 = vmatprep.mubr.bf16.mxu0 0
        %715 = vmatmul.mubr.bf16.gmra.mrb[0].mxu0 %v620
        %v716 = vpop.f32.mrb[0].mxu0
        %v717 = vadd.f32 %v555, %v716
        %v718 = vpop.f32.mrb[0].mxu0
        %v719 = vpop.f32.mrb[0].mxu0
        %v720 = vadd.f32 %v555, %v719
        %v721 = vpop.f32.mrb[0].mxu0
        %722 = vdwg.mxu0
        %724 = vset.pattern.permute.xlu0 0
        %725 = vperm.xlu0 %724, %v517
        %v726 = vpop.permute.xlu0 %725
        %729 = vset.pattern.permute.xlu0 0
        %730 = vperm.xlu0 %729, %v518
        %v731 = vpop.permute.xlu0 %730
        %734 = vset.pattern.permute.xlu0 0
        %735 = vperm.xlu0 %734, %v519
        %v736 = vpop.permute.xlu0 %735
        %739 = vset.pattern.permute.xlu0 0
        %740 = vperm.xlu0 %739, %v520
        %v741 = vpop.permute.xlu0 %740
        %744 = vset.pattern.permute.xlu0 0
        %745 = vperm.xlu0 %744, %v521
        %v746 = vpop.permute.xlu0 %745
        %749 = vset.pattern.permute.xlu0 0
        %750 = vperm.xlu0 %749, %v522
        %v751 = vpop.permute.xlu0 %750
        %754 = vset.pattern.permute.xlu0 0
        %755 = vperm.xlu0 %754, %v523
        %v756 = vpop.permute.xlu0 %755
        %759 = vset.pattern.permute.xlu0 0
        %760 = vperm.xlu0 %759, %v524
        %v761 = vpop.permute.xlu0 %760
        %764 = vset.pattern.permute.xlu0 0
        %765 = vperm.xlu0 %764, %v525
        %v766 = vpop.permute.xlu0 %765
        %769 = vset.pattern.permute.xlu0 0
        %770 = vperm.xlu0 %769, %v526
        %v771 = vpop.permute.xlu0 %770
        %774 = vset.pattern.permute.xlu0 0
        %775 = vperm.xlu0 %774, %v527
        %v776 = vpop.permute.xlu0 %775
        %779 = vset.pattern.permute.xlu0 0
        %780 = vperm.xlu0 %779, %v528
        %v781 = vpop.permute.xlu0 %780
        %784 = vset.pattern.permute.xlu0 0
        %785 = vperm.xlu0 %784, %v529
        %v786 = vpop.permute.xlu0 %785
        %789 = vset.pattern.permute.xlu0 0
        %790 = vperm.xlu0 %789, %v530
        %v791 = vpop.permute.xlu0 %790
        %794 = vset.pattern.permute.xlu0 0
        %795 = vperm.xlu0 %794, %v531
        %v796 = vpop.permute.xlu0 %795
        %799 = vset.pattern.permute.xlu0 0
        %800 = vperm.xlu0 %799, %v532
        %v801 = vpop.permute.xlu0 %800
        %v803 = vlaneseq
        %v804 = vshrl.u32 %v803, 7
        %v805 = vsub.s32 0, %v804
        %v806 = vrot.slane %v661, %v805
        %v807 = vlaneseq
        %v808 = vshrl.u32 %v807, 7
        %v809 = vsub.s32 0, %v808
        %v810 = vrot.slane %v664, %v809
        %v811 = vlaneseq
        %v812 = vshrl.u32 %v811, 7
        %v813 = vsub.s32 0, %v812
        %v814 = vrot.slane %v669, %v813
        %v815 = vlaneseq
        %v816 = vshrl.u32 %v815, 7
        %v817 = vsub.s32 0, %v816
        %v818 = vrot.slane %v672, %v817
        %v819 = vlaneseq
        %v820 = vshrl.u32 %v819, 7
        %v821 = vsub.s32 0, %v820
        %v822 = vrot.slane %v677, %v821
        %v823 = vlaneseq
        %v824 = vshrl.u32 %v823, 7
        %v825 = vsub.s32 0, %v824
        %v826 = vrot.slane %v680, %v825
        %v827 = vlaneseq
        %v828 = vshrl.u32 %v827, 7
        %v829 = vsub.s32 0, %v828
        %v830 = vrot.slane %v685, %v829
        %v831 = vlaneseq
        %v832 = vshrl.u32 %v831, 7
        %v833 = vsub.s32 0, %v832
        %v834 = vrot.slane %v688, %v833
        %v835 = vlaneseq
        %v836 = vshrl.u32 %v835, 7
        %v837 = vsub.s32 0, %v836
        %v838 = vrot.slane %v693, %v837
        %v839 = vlaneseq
        %v840 = vshrl.u32 %v839, 7
        %v841 = vsub.s32 0, %v840
        %v842 = vrot.slane %v696, %v841
        %v843 = vlaneseq
        %v844 = vshrl.u32 %v843, 7
        %v845 = vsub.s32 0, %v844
        %v846 = vrot.slane %v701, %v845
        %v847 = vlaneseq
        %v848 = vshrl.u32 %v847, 7
        %v849 = vsub.s32 0, %v848
        %v850 = vrot.slane %v704, %v849
        %v851 = vlaneseq
        %v852 = vshrl.u32 %v851, 7
        %v853 = vsub.s32 0, %v852
        %v854 = vrot.slane %v709, %v853
        %v855 = vlaneseq
        %v856 = vshrl.u32 %v855, 7
        %v857 = vsub.s32 0, %v856
        %v858 = vrot.slane %v712, %v857
        %v859 = vlaneseq
        %v860 = vshrl.u32 %v859, 7
        %v861 = vsub.s32 0, %v860
        %v862 = vrot.slane %v717, %v861
        %v863 = vlaneseq
        %v864 = vshrl.u32 %v863, 7
        %v865 = vsub.s32 0, %v864
        %v866 = vrot.slane %v720, %v865
        %v867 = vmul.f32 %v726, %v806
        %v868 = vmul.f32 %v731, %v810
        %v869 = vmul.f32 %v736, %v814
        %v870 = vmul.f32 %v741, %v818
        %v871 = vmul.f32 %v746, %v822
        %v872 = vmul.f32 %v751, %v826
        %v873 = vmul.f32 %v756, %v830
        %v874 = vmul.f32 %v761, %v834
        %v875 = vmul.f32 %v766, %v838
        %v876 = vmul.f32 %v771, %v842
        %v877 = vmul.f32 %v776, %v846
        %v878 = vmul.f32 %v781, %v850
        %v879 = vmul.f32 %v786, %v854
        %v880 = vmul.f32 %v791, %v858
        %v881 = vmul.f32 %v796, %v862
        %v882 = vmul.f32 %v801, %v866
        %883 = vset.pattern.permute.xlu0 1
        %884 = vperm.xlu0 %883, %v517
        %v885 = vpop.permute.xlu0 %884
        %887 = vset.pattern.permute.xlu0 1
        %888 = vperm.xlu0 %887, %v518
        %v889 = vpop.permute.xlu0 %888
        %891 = vset.pattern.permute.xlu0 1
        %892 = vperm.xlu0 %891, %v519
        %v893 = vpop.permute.xlu0 %892
        %895 = vset.pattern.permute.xlu0 1
        %896 = vperm.xlu0 %895, %v520
        %v897 = vpop.permute.xlu0 %896
        %899 = vset.pattern.permute.xlu0 1
        %900 = vperm.xlu0 %899, %v521
        %v901 = vpop.permute.xlu0 %900
        %903 = vset.pattern.permute.xlu0 1
        %904 = vperm.xlu0 %903, %v522
        %v905 = vpop.permute.xlu0 %904
        %907 = vset.pattern.permute.xlu0 1
        %908 = vperm.xlu0 %907, %v523
        %v909 = vpop.permute.xlu0 %908
        %911 = vset.pattern.permute.xlu0 1
        %912 = vperm.xlu0 %911, %v524
        %v913 = vpop.permute.xlu0 %912
        %915 = vset.pattern.permute.xlu0 1
        %916 = vperm.xlu0 %915, %v525
        %v917 = vpop.permute.xlu0 %916
        %919 = vset.pattern.permute.xlu0 1
        %920 = vperm.xlu0 %919, %v526
        %v921 = vpop.permute.xlu0 %920
        %923 = vset.pattern.permute.xlu0 1
        %924 = vperm.xlu0 %923, %v527
        %v925 = vpop.permute.xlu0 %924
        %927 = vset.pattern.permute.xlu0 1
        %928 = vperm.xlu0 %927, %v528
        %v929 = vpop.permute.xlu0 %928
        %931 = vset.pattern.permute.xlu0 1
        %932 = vperm.xlu0 %931, %v529
        %v933 = vpop.permute.xlu0 %932
        %935 = vset.pattern.permute.xlu0 1
        %936 = vperm.xlu0 %935, %v530
        %v937 = vpop.permute.xlu0 %936
        %939 = vset.pattern.permute.xlu0 1
        %940 = vperm.xlu0 %939, %v531
        %v941 = vpop.permute.xlu0 %940
        %943 = vset.pattern.permute.xlu0 1
        %944 = vperm.xlu0 %943, %v532
        %v945 = vpop.permute.xlu0 %944
        %v947 = vlaneseq
        %v948 = vshrl.u32 %v947, 7
        %v949 = vsub.s32 1, %v948
        %v950 = vrot.slane %v661, %v949
        %v951 = vlaneseq
        %v952 = vshrl.u32 %v951, 7
        %v953 = vsub.s32 1, %v952
        %v954 = vrot.slane %v664, %v953
        %v955 = vlaneseq
        %v956 = vshrl.u32 %v955, 7
        %v957 = vsub.s32 1, %v956
        %v958 = vrot.slane %v669, %v957
        %v959 = vlaneseq
        %v960 = vshrl.u32 %v959, 7
        %v961 = vsub.s32 1, %v960
        %v962 = vrot.slane %v672, %v961
        %v963 = vlaneseq
        %v964 = vshrl.u32 %v963, 7
        %v965 = vsub.s32 1, %v964
        %v966 = vrot.slane %v677, %v965
        %v967 = vlaneseq
        %v968 = vshrl.u32 %v967, 7
        %v969 = vsub.s32 1, %v968
        %v970 = vrot.slane %v680, %v969
        %v971 = vlaneseq
        %v972 = vshrl.u32 %v971, 7
        %v973 = vsub.s32 1, %v972
        %v974 = vrot.slane %v685, %v973
        %v975 = vlaneseq
        %v976 = vshrl.u32 %v975, 7
        %v977 = vsub.s32 1, %v976
        %v978 = vrot.slane %v688, %v977
        %v979 = vlaneseq
        %v980 = vshrl.u32 %v979, 7
        %v981 = vsub.s32 1, %v980
        %v982 = vrot.slane %v693, %v981
        %v983 = vlaneseq
        %v984 = vshrl.u32 %v983, 7
        %v985 = vsub.s32 1, %v984
        %v986 = vrot.slane %v696, %v985
        %v987 = vlaneseq
        %v988 = vshrl.u32 %v987, 7
        %v989 = vsub.s32 1, %v988
        %v990 = vrot.slane %v701, %v989
        %v991 = vlaneseq
        %v992 = vshrl.u32 %v991, 7
        %v993 = vsub.s32 1, %v992
        %v994 = vrot.slane %v704, %v993
        %v995 = vlaneseq
        %v996 = vshrl.u32 %v995, 7
        %v997 = vsub.s32 1, %v996
        %v998 = vrot.slane %v709, %v997
        %v999 = vlaneseq
        %v1000 = vshrl.u32 %v999, 7
        %v1001 = vsub.s32 1, %v1000
        %v1002 = vrot.slane %v712, %v1001
        %v1003 = vlaneseq
        %v1004 = vshrl.u32 %v1003, 7
        %v1005 = vsub.s32 1, %v1004
        %v1006 = vrot.slane %v717, %v1005
        %v1007 = vlaneseq
        %v1008 = vshrl.u32 %v1007, 7
        %v1009 = vsub.s32 1, %v1008
        %v1010 = vrot.slane %v720, %v1009
        %v1011 = vmul.f32 %v885, %v950
        %v1012 = vmul.f32 %v889, %v954
        %v1013 = vmul.f32 %v893, %v958
        %v1014 = vmul.f32 %v897, %v962
        %v1015 = vmul.f32 %v901, %v966
        %v1016 = vmul.f32 %v905, %v970
        %v1017 = vmul.f32 %v909, %v974
        %v1018 = vmul.f32 %v913, %v978
        %v1019 = vmul.f32 %v917, %v982
        %v1020 = vmul.f32 %v921, %v986
        %v1021 = vmul.f32 %v925, %v990
        %v1022 = vmul.f32 %v929, %v994
        %v1023 = vmul.f32 %v933, %v998
        %v1024 = vmul.f32 %v937, %v1002
        %v1025 = vmul.f32 %v941, %v1006
        %v1026 = vmul.f32 %v945, %v1010
        %v1027 = vadd.f32 %v867, %v1011
        %v1028 = vadd.f32 %v868, %v1012
        %v1029 = vadd.f32 %v869, %v1013
        %v1030 = vadd.f32 %v870, %v1014
        %v1031 = vadd.f32 %v871, %v1015
        %v1032 = vadd.f32 %v872, %v1016
        %v1033 = vadd.f32 %v873, %v1017
        %v1034 = vadd.f32 %v874, %v1018
        %v1035 = vadd.f32 %v875, %v1019
        %v1036 = vadd.f32 %v876, %v1020
        %v1037 = vadd.f32 %v877, %v1021
        %v1038 = vadd.f32 %v878, %v1022
        %v1039 = vadd.f32 %v879, %v1023
        %v1040 = vadd.f32 %v880, %v1024
        %v1041 = vadd.f32 %v881, %v1025
        %v1042 = vadd.f32 %v882, %v1026
        %1043 = vset.pattern.permute.xlu0 2
        %1044 = vperm.xlu0 %1043, %v517
        %v1045 = vpop.permute.xlu0 %1044
        %1047 = vset.pattern.permute.xlu0 2
        %1048 = vperm.xlu0 %1047, %v518
        %v1049 = vpop.permute.xlu0 %1048
        %1051 = vset.pattern.permute.xlu0 2
        %1052 = vperm.xlu0 %1051, %v519
        %v1053 = vpop.permute.xlu0 %1052
        %1055 = vset.pattern.permute.xlu0 2
        %1056 = vperm.xlu0 %1055, %v520
        %v1057 = vpop.permute.xlu0 %1056
        %1059 = vset.pattern.permute.xlu0 2
        %1060 = vperm.xlu0 %1059, %v521
        %v1061 = vpop.permute.xlu0 %1060
        %1063 = vset.pattern.permute.xlu0 2
        %1064 = vperm.xlu0 %1063, %v522
        %v1065 = vpop.permute.xlu0 %1064
        %1067 = vset.pattern.permute.xlu0 2
        %1068 = vperm.xlu0 %1067, %v523
        %v1069 = vpop.permute.xlu0 %1068
        %1071 = vset.pattern.permute.xlu0 2
        %1072 = vperm.xlu0 %1071, %v524
        %v1073 = vpop.permute.xlu0 %1072
        %1075 = vset.pattern.permute.xlu0 2
        %1076 = vperm.xlu0 %1075, %v525
        %v1077 = vpop.permute.xlu0 %1076
        %1079 = vset.pattern.permute.xlu0 2
        %1080 = vperm.xlu0 %1079, %v526
        %v1081 = vpop.permute.xlu0 %1080
        %1083 = vset.pattern.permute.xlu0 2
        %1084 = vperm.xlu0 %1083, %v527
        %v1085 = vpop.permute.xlu0 %1084
        %1087 = vset.pattern.permute.xlu0 2
        %1088 = vperm.xlu0 %1087, %v528
        %v1089 = vpop.permute.xlu0 %1088
        %1091 = vset.pattern.permute.xlu0 2
        %1092 = vperm.xlu0 %1091, %v529
        %v1093 = vpop.permute.xlu0 %1092
        %1095 = vset.pattern.permute.xlu0 2
        %1096 = vperm.xlu0 %1095, %v530
        %v1097 = vpop.permute.xlu0 %1096
        %1099 = vset.pattern.permute.xlu0 2
        %1100 = vperm.xlu0 %1099, %v531
        %v1101 = vpop.permute.xlu0 %1100
        %1103 = vset.pattern.permute.xlu0 2
        %1104 = vperm.xlu0 %1103, %v532
        %v1105 = vpop.permute.xlu0 %1104
        %v1107 = vlaneseq
        %v1108 = vshrl.u32 %v1107, 7
        %v1109 = vsub.s32 2, %v1108
        %v1110 = vrot.slane %v661, %v1109
        %v1111 = vlaneseq
        %v1112 = vshrl.u32 %v1111, 7
        %v1113 = vsub.s32 2, %v1112
        %v1114 = vrot.slane %v664, %v1113
        %v1115 = vlaneseq
        %v1116 = vshrl.u32 %v1115, 7
        %v1117 = vsub.s32 2, %v1116
        %v1118 = vrot.slane %v669, %v1117
        %v1119 = vlaneseq
        %v1120 = vshrl.u32 %v1119, 7
        %v1121 = vsub.s32 2, %v1120
        %v1122 = vrot.slane %v672, %v1121
        %v1123 = vlaneseq
        %v1124 = vshrl.u32 %v1123, 7
        %v1125 = vsub.s32 2, %v1124
        %v1126 = vrot.slane %v677, %v1125
        %v1127 = vlaneseq
        %v1128 = vshrl.u32 %v1127, 7
        %v1129 = vsub.s32 2, %v1128
        %v1130 = vrot.slane %v680, %v1129
        %v1131 = vlaneseq
        %v1132 = vshrl.u32 %v1131, 7
        %v1133 = vsub.s32 2, %v1132
        %v1134 = vrot.slane %v685, %v1133
        %v1135 = vlaneseq
        %v1136 = vshrl.u32 %v1135, 7
        %v1137 = vsub.s32 2, %v1136
        %v1138 = vrot.slane %v688, %v1137
        %v1139 = vlaneseq
        %v1140 = vshrl.u32 %v1139, 7
        %v1141 = vsub.s32 2, %v1140
        %v1142 = vrot.slane %v693, %v1141
        %v1143 = vlaneseq
        %v1144 = vshrl.u32 %v1143, 7
        %v1145 = vsub.s32 2, %v1144
        %v1146 = vrot.slane %v696, %v1145
        %v1147 = vlaneseq
        %v1148 = vshrl.u32 %v1147, 7
        %v1149 = vsub.s32 2, %v1148
        %v1150 = vrot.slane %v701, %v1149
        %v1151 = vlaneseq
        %v1152 = vshrl.u32 %v1151, 7
        %v1153 = vsub.s32 2, %v1152
        %v1154 = vrot.slane %v704, %v1153
        %v1155 = vlaneseq
        %v1156 = vshrl.u32 %v1155, 7
        %v1157 = vsub.s32 2, %v1156
        %v1158 = vrot.slane %v709, %v1157
        %v1159 = vlaneseq
        %v1160 = vshrl.u32 %v1159, 7
        %v1161 = vsub.s32 2, %v1160
        %v1162 = vrot.slane %v712, %v1161
        %v1163 = vlaneseq
        %v1164 = vshrl.u32 %v1163, 7
        %v1165 = vsub.s32 2, %v1164
        %v1166 = vrot.slane %v717, %v1165
        %v1167 = vlaneseq
        %v1168 = vshrl.u32 %v1167, 7
        %v1169 = vsub.s32 2, %v1168
        %v1170 = vrot.slane %v720, %v1169
        %v1171 = vmul.f32 %v1045, %v1110
        %v1172 = vmul.f32 %v1049, %v1114
        %v1173 = vmul.f32 %v1053, %v1118
        %v1174 = vmul.f32 %v1057, %v1122
        %v1175 = vmul.f32 %v1061, %v1126
        %v1176 = vmul.f32 %v1065, %v1130
        %v1177 = vmul.f32 %v1069, %v1134
        %v1178 = vmul.f32 %v1073, %v1138
        %v1179 = vmul.f32 %v1077, %v1142
        %v1180 = vmul.f32 %v1081, %v1146
        %v1181 = vmul.f32 %v1085, %v1150
        %v1182 = vmul.f32 %v1089, %v1154
        %v1183 = vmul.f32 %v1093, %v1158
        %v1184 = vmul.f32 %v1097, %v1162
        %v1185 = vmul.f32 %v1101, %v1166
        %v1186 = vmul.f32 %v1105, %v1170
        %v1187 = vadd.f32 %v1027, %v1171
        %v1188 = vadd.f32 %v1028, %v1172
        %v1189 = vadd.f32 %v1029, %v1173
        %v1190 = vadd.f32 %v1030, %v1174
        %v1191 = vadd.f32 %v1031, %v1175
        %v1192 = vadd.f32 %v1032, %v1176
        %v1193 = vadd.f32 %v1033, %v1177
        %v1194 = vadd.f32 %v1034, %v1178
        %v1195 = vadd.f32 %v1035, %v1179
        %v1196 = vadd.f32 %v1036, %v1180
        %v1197 = vadd.f32 %v1037, %v1181
        %v1198 = vadd.f32 %v1038, %v1182
        %v1199 = vadd.f32 %v1039, %v1183
        %v1200 = vadd.f32 %v1040, %v1184
        %v1201 = vadd.f32 %v1041, %v1185
        %v1202 = vadd.f32 %v1042, %v1186
        %1203 = vset.pattern.permute.xlu0 3
        %1204 = vperm.xlu0 %1203, %v517
        %v1205 = vpop.permute.xlu0 %1204
        %1207 = vset.pattern.permute.xlu0 3
        %1208 = vperm.xlu0 %1207, %v518
        %v1209 = vpop.permute.xlu0 %1208
        %1211 = vset.pattern.permute.xlu0 3
        %1212 = vperm.xlu0 %1211, %v519
        %v1213 = vpop.permute.xlu0 %1212
        %1215 = vset.pattern.permute.xlu0 3
        %1216 = vperm.xlu0 %1215, %v520
        %v1217 = vpop.permute.xlu0 %1216
        %1219 = vset.pattern.permute.xlu0 3
        %1220 = vperm.xlu0 %1219, %v521
        %v1221 = vpop.permute.xlu0 %1220
        %1223 = vset.pattern.permute.xlu0 3
        %1224 = vperm.xlu0 %1223, %v522
        %v1225 = vpop.permute.xlu0 %1224
        %1227 = vset.pattern.permute.xlu0 3
        %1228 = vperm.xlu0 %1227, %v523
        %v1229 = vpop.permute.xlu0 %1228
        %1231 = vset.pattern.permute.xlu0 3
        %1232 = vperm.xlu0 %1231, %v524
        %v1233 = vpop.permute.xlu0 %1232
        %1235 = vset.pattern.permute.xlu0 3
        %1236 = vperm.xlu0 %1235, %v525
        %v1237 = vpop.permute.xlu0 %1236
        %1239 = vset.pattern.permute.xlu0 3
        %1240 = vperm.xlu0 %1239, %v526
        %v1241 = vpop.permute.xlu0 %1240
        %1243 = vset.pattern.permute.xlu0 3
        %1244 = vperm.xlu0 %1243, %v527
        %v1245 = vpop.permute.xlu0 %1244
        %1247 = vset.pattern.permute.xlu0 3
        %1248 = vperm.xlu0 %1247, %v528
        %v1249 = vpop.permute.xlu0 %1248
        %1251 = vset.pattern.permute.xlu0 3
        %1252 = vperm.xlu0 %1251, %v529
        %v1253 = vpop.permute.xlu0 %1252
        %1255 = vset.pattern.permute.xlu0 3
        %1256 = vperm.xlu0 %1255, %v530
        %v1257 = vpop.permute.xlu0 %1256
        %1259 = vset.pattern.permute.xlu0 3
        %1260 = vperm.xlu0 %1259, %v531
        %v1261 = vpop.permute.xlu0 %1260
        %1263 = vset.pattern.permute.xlu0 3
        %1264 = vperm.xlu0 %1263, %v532
        %v1265 = vpop.permute.xlu0 %1264
        %v1267 = vlaneseq
        %v1268 = vshrl.u32 %v1267, 7
        %v1269 = vsub.s32 3, %v1268
        %v1270 = vrot.slane %v661, %v1269
        %v1271 = vlaneseq
        %v1272 = vshrl.u32 %v1271, 7
        %v1273 = vsub.s32 3, %v1272
        %v1274 = vrot.slane %v664, %v1273
        %v1275 = vlaneseq
        %v1276 = vshrl.u32 %v1275, 7
        %v1277 = vsub.s32 3, %v1276
        %v1278 = vrot.slane %v669, %v1277
        %v1279 = vlaneseq
        %v1280 = vshrl.u32 %v1279, 7
        %v1281 = vsub.s32 3, %v1280
        %v1282 = vrot.slane %v672, %v1281
        %v1283 = vlaneseq
        %v1284 = vshrl.u32 %v1283, 7
        %v1285 = vsub.s32 3, %v1284
        %v1286 = vrot.slane %v677, %v1285
        %v1287 = vlaneseq
        %v1288 = vshrl.u32 %v1287, 7
        %v1289 = vsub.s32 3, %v1288
        %v1290 = vrot.slane %v680, %v1289
        %v1291 = vlaneseq
        %v1292 = vshrl.u32 %v1291, 7
        %v1293 = vsub.s32 3, %v1292
        %v1294 = vrot.slane %v685, %v1293
        %v1295 = vlaneseq
        %v1296 = vshrl.u32 %v1295, 7
        %v1297 = vsub.s32 3, %v1296
        %v1298 = vrot.slane %v688, %v1297
        %v1299 = vlaneseq
        %v1300 = vshrl.u32 %v1299, 7
        %v1301 = vsub.s32 3, %v1300
        %v1302 = vrot.slane %v693, %v1301
        %v1303 = vlaneseq
        %v1304 = vshrl.u32 %v1303, 7
        %v1305 = vsub.s32 3, %v1304
        %v1306 = vrot.slane %v696, %v1305
        %v1307 = vlaneseq
        %v1308 = vshrl.u32 %v1307, 7
        %v1309 = vsub.s32 3, %v1308
        %v1310 = vrot.slane %v701, %v1309
        %v1311 = vlaneseq
        %v1312 = vshrl.u32 %v1311, 7
        %v1313 = vsub.s32 3, %v1312
        %v1314 = vrot.slane %v704, %v1313
        %v1315 = vlaneseq
        %v1316 = vshrl.u32 %v1315, 7
        %v1317 = vsub.s32 3, %v1316
        %v1318 = vrot.slane %v709, %v1317
        %v1319 = vlaneseq
        %v1320 = vshrl.u32 %v1319, 7
        %v1321 = vsub.s32 3, %v1320
        %v1322 = vrot.slane %v712, %v1321
        %v1323 = vlaneseq
        %v1324 = vshrl.u32 %v1323, 7
        %v1325 = vsub.s32 3, %v1324
        %v1326 = vrot.slane %v717, %v1325
        %v1327 = vlaneseq
        %v1328 = vshrl.u32 %v1327, 7
        %v1329 = vsub.s32 3, %v1328
        %v1330 = vrot.slane %v720, %v1329
        %v1331 = vmul.f32 %v1205, %v1270
        %v1332 = vmul.f32 %v1209, %v1274
        %v1333 = vmul.f32 %v1213, %v1278
        %v1334 = vmul.f32 %v1217, %v1282
        %v1335 = vmul.f32 %v1221, %v1286
        %v1336 = vmul.f32 %v1225, %v1290
        %v1337 = vmul.f32 %v1229, %v1294
        %v1338 = vmul.f32 %v1233, %v1298
        %v1339 = vmul.f32 %v1237, %v1302
        %v1340 = vmul.f32 %v1241, %v1306
        %v1341 = vmul.f32 %v1245, %v1310
        %v1342 = vmul.f32 %v1249, %v1314
        %v1343 = vmul.f32 %v1253, %v1318
        %v1344 = vmul.f32 %v1257, %v1322
        %v1345 = vmul.f32 %v1261, %v1326
        %v1346 = vmul.f32 %v1265, %v1330
        %v1347 = vadd.f32 %v1187, %v1331
        %v1348 = vadd.f32 %v1188, %v1332
        %v1349 = vadd.f32 %v1189, %v1333
        %v1350 = vadd.f32 %v1190, %v1334
        %v1351 = vadd.f32 %v1191, %v1335
        %v1352 = vadd.f32 %v1192, %v1336
        %v1353 = vadd.f32 %v1193, %v1337
        %v1354 = vadd.f32 %v1194, %v1338
        %v1355 = vadd.f32 %v1195, %v1339
        %v1356 = vadd.f32 %v1196, %v1340
        %v1357 = vadd.f32 %v1197, %v1341
        %v1358 = vadd.f32 %v1198, %v1342
        %v1359 = vadd.f32 %v1199, %v1343
        %v1360 = vadd.f32 %v1200, %v1344
        %v1361 = vadd.f32 %v1201, %v1345
        %v1362 = vadd.f32 %v1202, %v1346
        %1363 = vset.pattern.permute.xlu0 4
        %1364 = vperm.xlu0 %1363, %v517
        %v1365 = vpop.permute.xlu0 %1364
        %1367 = vset.pattern.permute.xlu0 4
        %1368 = vperm.xlu0 %1367, %v518
        %v1369 = vpop.permute.xlu0 %1368
        %1371 = vset.pattern.permute.xlu0 4
        %1372 = vperm.xlu0 %1371, %v519
        %v1373 = vpop.permute.xlu0 %1372
        %1375 = vset.pattern.permute.xlu0 4
        %1376 = vperm.xlu0 %1375, %v520
        %v1377 = vpop.permute.xlu0 %1376
        %1379 = vset.pattern.permute.xlu0 4
        %1380 = vperm.xlu0 %1379, %v521
        %v1381 = vpop.permute.xlu0 %1380
        %1383 = vset.pattern.permute.xlu0 4
        %1384 = vperm.xlu0 %1383, %v522
        %v1385 = vpop.permute.xlu0 %1384
        %1387 = vset.pattern.permute.xlu0 4
        %1388 = vperm.xlu0 %1387, %v523
        %v1389 = vpop.permute.xlu0 %1388
        %1391 = vset.pattern.permute.xlu0 4
        %1392 = vperm.xlu0 %1391, %v524
        %v1393 = vpop.permute.xlu0 %1392
        %1395 = vset.pattern.permute.xlu0 4
        %1396 = vperm.xlu0 %1395, %v525
        %v1397 = vpop.permute.xlu0 %1396
        %1399 = vset.pattern.permute.xlu0 4
        %1400 = vperm.xlu0 %1399, %v526
        %v1401 = vpop.permute.xlu0 %1400
        %1403 = vset.pattern.permute.xlu0 4
        %1404 = vperm.xlu0 %1403, %v527
        %v1405 = vpop.permute.xlu0 %1404
        %1407 = vset.pattern.permute.xlu0 4
        %1408 = vperm.xlu0 %1407, %v528
        %v1409 = vpop.permute.xlu0 %1408
        %1411 = vset.pattern.permute.xlu0 4
        %1412 = vperm.xlu0 %1411, %v529
        %v1413 = vpop.permute.xlu0 %1412
        %1415 = vset.pattern.permute.xlu0 4
        %1416 = vperm.xlu0 %1415, %v530
        %v1417 = vpop.permute.xlu0 %1416
        %1419 = vset.pattern.permute.xlu0 4
        %1420 = vperm.xlu0 %1419, %v531
        %v1421 = vpop.permute.xlu0 %1420
        %1423 = vset.pattern.permute.xlu0 4
        %1424 = vperm.xlu0 %1423, %v532
        %v1425 = vpop.permute.xlu0 %1424
        %v1427 = vlaneseq
        %v1428 = vshrl.u32 %v1427, 7
        %v1429 = vsub.s32 4, %v1428
        %v1430 = vrot.slane %v661, %v1429
        %v1431 = vlaneseq
        %v1432 = vshrl.u32 %v1431, 7
        %v1433 = vsub.s32 4, %v1432
        %v1434 = vrot.slane %v664, %v1433
        %v1435 = vlaneseq
        %v1436 = vshrl.u32 %v1435, 7
        %v1437 = vsub.s32 4, %v1436
        %v1438 = vrot.slane %v669, %v1437
        %v1439 = vlaneseq
        %v1440 = vshrl.u32 %v1439, 7
        %v1441 = vsub.s32 4, %v1440
        %v1442 = vrot.slane %v672, %v1441
        %v1443 = vlaneseq
        %v1444 = vshrl.u32 %v1443, 7
        %v1445 = vsub.s32 4, %v1444
        %v1446 = vrot.slane %v677, %v1445
        %v1447 = vlaneseq
        %v1448 = vshrl.u32 %v1447, 7
        %v1449 = vsub.s32 4, %v1448
        %v1450 = vrot.slane %v680, %v1449
        %v1451 = vlaneseq
        %v1452 = vshrl.u32 %v1451, 7
        %v1453 = vsub.s32 4, %v1452
        %v1454 = vrot.slane %v685, %v1453
        %v1455 = vlaneseq
        %v1456 = vshrl.u32 %v1455, 7
        %v1457 = vsub.s32 4, %v1456
        %v1458 = vrot.slane %v688, %v1457
        %v1459 = vlaneseq
        %v1460 = vshrl.u32 %v1459, 7
        %v1461 = vsub.s32 4, %v1460
        %v1462 = vrot.slane %v693, %v1461
        %v1463 = vlaneseq
        %v1464 = vshrl.u32 %v1463, 7
        %v1465 = vsub.s32 4, %v1464
        %v1466 = vrot.slane %v696, %v1465
        %v1467 = vlaneseq
        %v1468 = vshrl.u32 %v1467, 7
        %v1469 = vsub.s32 4, %v1468
        %v1470 = vrot.slane %v701, %v1469
        %v1471 = vlaneseq
        %v1472 = vshrl.u32 %v1471, 7
        %v1473 = vsub.s32 4, %v1472
        %v1474 = vrot.slane %v704, %v1473
        %v1475 = vlaneseq
        %v1476 = vshrl.u32 %v1475, 7
        %v1477 = vsub.s32 4, %v1476
        %v1478 = vrot.slane %v709, %v1477
        %v1479 = vlaneseq
        %v1480 = vshrl.u32 %v1479, 7
        %v1481 = vsub.s32 4, %v1480
        %v1482 = vrot.slane %v712, %v1481
        %v1483 = vlaneseq
        %v1484 = vshrl.u32 %v1483, 7
        %v1485 = vsub.s32 4, %v1484
        %v1486 = vrot.slane %v717, %v1485
        %v1487 = vlaneseq
        %v1488 = vshrl.u32 %v1487, 7
        %v1489 = vsub.s32 4, %v1488
        %v1490 = vrot.slane %v720, %v1489
        %v1491 = vmul.f32 %v1365, %v1430
        %v1492 = vmul.f32 %v1369, %v1434
        %v1493 = vmul.f32 %v1373, %v1438
        %v1494 = vmul.f32 %v1377, %v1442
        %v1495 = vmul.f32 %v1381, %v1446
        %v1496 = vmul.f32 %v1385, %v1450
        %v1497 = vmul.f32 %v1389, %v1454
        %v1498 = vmul.f32 %v1393, %v1458
        %v1499 = vmul.f32 %v1397, %v1462
        %v1500 = vmul.f32 %v1401, %v1466
        %v1501 = vmul.f32 %v1405, %v1470
        %v1502 = vmul.f32 %v1409, %v1474
        %v1503 = vmul.f32 %v1413, %v1478
        %v1504 = vmul.f32 %v1417, %v1482
        %v1505 = vmul.f32 %v1421, %v1486
        %v1506 = vmul.f32 %v1425, %v1490
        %v1507 = vadd.f32 %v1347, %v1491
        %v1508 = vadd.f32 %v1348, %v1492
        %v1509 = vadd.f32 %v1349, %v1493
        %v1510 = vadd.f32 %v1350, %v1494
        %v1511 = vadd.f32 %v1351, %v1495
        %v1512 = vadd.f32 %v1352, %v1496
        %v1513 = vadd.f32 %v1353, %v1497
        %v1514 = vadd.f32 %v1354, %v1498
        %v1515 = vadd.f32 %v1355, %v1499
        %v1516 = vadd.f32 %v1356, %v1500
        %v1517 = vadd.f32 %v1357, %v1501
        %v1518 = vadd.f32 %v1358, %v1502
        %v1519 = vadd.f32 %v1359, %v1503
        %v1520 = vadd.f32 %v1360, %v1504
        %v1521 = vadd.f32 %v1361, %v1505
        %v1522 = vadd.f32 %v1362, %v1506
        %1523 = vset.pattern.permute.xlu0 5
        %1524 = vperm.xlu0 %1523, %v517
        %v1525 = vpop.permute.xlu0 %1524
        %1527 = vset.pattern.permute.xlu0 5
        %1528 = vperm.xlu0 %1527, %v518
        %v1529 = vpop.permute.xlu0 %1528
        %1531 = vset.pattern.permute.xlu0 5
        %1532 = vperm.xlu0 %1531, %v519
        %v1533 = vpop.permute.xlu0 %1532
        %1535 = vset.pattern.permute.xlu0 5
        %1536 = vperm.xlu0 %1535, %v520
        %v1537 = vpop.permute.xlu0 %1536
        %1539 = vset.pattern.permute.xlu0 5
        %1540 = vperm.xlu0 %1539, %v521
        %v1541 = vpop.permute.xlu0 %1540
        %1543 = vset.pattern.permute.xlu0 5
        %1544 = vperm.xlu0 %1543, %v522
        %v1545 = vpop.permute.xlu0 %1544
        %1547 = vset.pattern.permute.xlu0 5
        %1548 = vperm.xlu0 %1547, %v523
        %v1549 = vpop.permute.xlu0 %1548
        %1551 = vset.pattern.permute.xlu0 5
        %1552 = vperm.xlu0 %1551, %v524
        %v1553 = vpop.permute.xlu0 %1552
        %1555 = vset.pattern.permute.xlu0 5
        %1556 = vperm.xlu0 %1555, %v525
        %v1557 = vpop.permute.xlu0 %1556
        %1559 = vset.pattern.permute.xlu0 5
        %1560 = vperm.xlu0 %1559, %v526
        %v1561 = vpop.permute.xlu0 %1560
        %1563 = vset.pattern.permute.xlu0 5
        %1564 = vperm.xlu0 %1563, %v527
        %v1565 = vpop.permute.xlu0 %1564
        %1567 = vset.pattern.permute.xlu0 5
        %1568 = vperm.xlu0 %1567, %v528
        %v1569 = vpop.permute.xlu0 %1568
        %1571 = vset.pattern.permute.xlu0 5
        %1572 = vperm.xlu0 %1571, %v529
        %v1573 = vpop.permute.xlu0 %1572
        %1575 = vset.pattern.permute.xlu0 5
        %1576 = vperm.xlu0 %1575, %v530
        %v1577 = vpop.permute.xlu0 %1576
        %1579 = vset.pattern.permute.xlu0 5
        %1580 = vperm.xlu0 %1579, %v531
        %v1581 = vpop.permute.xlu0 %1580
        %1583 = vset.pattern.permute.xlu0 5
        %1584 = vperm.xlu0 %1583, %v532
        %v1585 = vpop.permute.xlu0 %1584
        %v1587 = vlaneseq
        %v1588 = vshrl.u32 %v1587, 7
        %v1589 = vsub.s32 5, %v1588
        %v1590 = vrot.slane %v661, %v1589
        %v1591 = vlaneseq
        %v1592 = vshrl.u32 %v1591, 7
        %v1593 = vsub.s32 5, %v1592
        %v1594 = vrot.slane %v664, %v1593
        %v1595 = vlaneseq
        %v1596 = vshrl.u32 %v1595, 7
        %v1597 = vsub.s32 5, %v1596
        %v1598 = vrot.slane %v669, %v1597
        %v1599 = vlaneseq
        %v1600 = vshrl.u32 %v1599, 7
        %v1601 = vsub.s32 5, %v1600
        %v1602 = vrot.slane %v672, %v1601
        %v1603 = vlaneseq
        %v1604 = vshrl.u32 %v1603, 7
        %v1605 = vsub.s32 5, %v1604
        %v1606 = vrot.slane %v677, %v1605
        %v1607 = vlaneseq
        %v1608 = vshrl.u32 %v1607, 7
        %v1609 = vsub.s32 5, %v1608
        %v1610 = vrot.slane %v680, %v1609
        %v1611 = vlaneseq
        %v1612 = vshrl.u32 %v1611, 7
        %v1613 = vsub.s32 5, %v1612
        %v1614 = vrot.slane %v685, %v1613
        %v1615 = vlaneseq
        %v1616 = vshrl.u32 %v1615, 7
        %v1617 = vsub.s32 5, %v1616
        %v1618 = vrot.slane %v688, %v1617
        %v1619 = vlaneseq
        %v1620 = vshrl.u32 %v1619, 7
        %v1621 = vsub.s32 5, %v1620
        %v1622 = vrot.slane %v693, %v1621
        %v1623 = vlaneseq
        %v1624 = vshrl.u32 %v1623, 7
        %v1625 = vsub.s32 5, %v1624
        %v1626 = vrot.slane %v696, %v1625
        %v1627 = vlaneseq
        %v1628 = vshrl.u32 %v1627, 7
        %v1629 = vsub.s32 5, %v1628
        %v1630 = vrot.slane %v701, %v1629
        %v1631 = vlaneseq
        %v1632 = vshrl.u32 %v1631, 7
        %v1633 = vsub.s32 5, %v1632
        %v1634 = vrot.slane %v704, %v1633
        %v1635 = vlaneseq
        %v1636 = vshrl.u32 %v1635, 7
        %v1637 = vsub.s32 5, %v1636
        %v1638 = vrot.slane %v709, %v1637
        %v1639 = vlaneseq
        %v1640 = vshrl.u32 %v1639, 7
        %v1641 = vsub.s32 5, %v1640
        %v1642 = vrot.slane %v712, %v1641
        %v1643 = vlaneseq
        %v1644 = vshrl.u32 %v1643, 7
        %v1645 = vsub.s32 5, %v1644
        %v1646 = vrot.slane %v717, %v1645
        %v1647 = vlaneseq
        %v1648 = vshrl.u32 %v1647, 7
        %v1649 = vsub.s32 5, %v1648
        %v1650 = vrot.slane %v720, %v1649
        %v1651 = vmul.f32 %v1525, %v1590
        %v1652 = vmul.f32 %v1529, %v1594
        %v1653 = vmul.f32 %v1533, %v1598
        %v1654 = vmul.f32 %v1537, %v1602
        %v1655 = vmul.f32 %v1541, %v1606
        %v1656 = vmul.f32 %v1545, %v1610
        %v1657 = vmul.f32 %v1549, %v1614
        %v1658 = vmul.f32 %v1553, %v1618
        %v1659 = vmul.f32 %v1557, %v1622
        %v1660 = vmul.f32 %v1561, %v1626
        %v1661 = vmul.f32 %v1565, %v1630
        %v1662 = vmul.f32 %v1569, %v1634
        %v1663 = vmul.f32 %v1573, %v1638
        %v1664 = vmul.f32 %v1577, %v1642
        %v1665 = vmul.f32 %v1581, %v1646
        %v1666 = vmul.f32 %v1585, %v1650
        %v1667 = vadd.f32 %v1507, %v1651
        %v1668 = vadd.f32 %v1508, %v1652
        %v1669 = vadd.f32 %v1509, %v1653
        %v1670 = vadd.f32 %v1510, %v1654
        %v1671 = vadd.f32 %v1511, %v1655
        %v1672 = vadd.f32 %v1512, %v1656
        %v1673 = vadd.f32 %v1513, %v1657
        %v1674 = vadd.f32 %v1514, %v1658
        %v1675 = vadd.f32 %v1515, %v1659
        %v1676 = vadd.f32 %v1516, %v1660
        %v1677 = vadd.f32 %v1517, %v1661
        %v1678 = vadd.f32 %v1518, %v1662
        %v1679 = vadd.f32 %v1519, %v1663
        %v1680 = vadd.f32 %v1520, %v1664
        %v1681 = vadd.f32 %v1521, %v1665
        %v1682 = vadd.f32 %v1522, %v1666
        %1683 = vset.pattern.permute.xlu0 6
        %1684 = vperm.xlu0 %1683, %v517
        %v1685 = vpop.permute.xlu0 %1684
        %1687 = vset.pattern.permute.xlu0 6
        %1688 = vperm.xlu0 %1687, %v518
        %v1689 = vpop.permute.xlu0 %1688
        %1691 = vset.pattern.permute.xlu0 6
        %1692 = vperm.xlu0 %1691, %v519
        %v1693 = vpop.permute.xlu0 %1692
        %1695 = vset.pattern.permute.xlu0 6
        %1696 = vperm.xlu0 %1695, %v520
        %v1697 = vpop.permute.xlu0 %1696
        %1699 = vset.pattern.permute.xlu0 6
        %1700 = vperm.xlu0 %1699, %v521
        %v1701 = vpop.permute.xlu0 %1700
        %1703 = vset.pattern.permute.xlu0 6
        %1704 = vperm.xlu0 %1703, %v522
        %v1705 = vpop.permute.xlu0 %1704
        %1707 = vset.pattern.permute.xlu0 6
        %1708 = vperm.xlu0 %1707, %v523
        %v1709 = vpop.permute.xlu0 %1708
        %1711 = vset.pattern.permute.xlu0 6
        %1712 = vperm.xlu0 %1711, %v524
        %v1713 = vpop.permute.xlu0 %1712
        %1715 = vset.pattern.permute.xlu0 6
        %1716 = vperm.xlu0 %1715, %v525
        %v1717 = vpop.permute.xlu0 %1716
        %1719 = vset.pattern.permute.xlu0 6
        %1720 = vperm.xlu0 %1719, %v526
        %v1721 = vpop.permute.xlu0 %1720
        %1723 = vset.pattern.permute.xlu0 6
        %1724 = vperm.xlu0 %1723, %v527
        %v1725 = vpop.permute.xlu0 %1724
        %1727 = vset.pattern.permute.xlu0 6
        %1728 = vperm.xlu0 %1727, %v528
        %v1729 = vpop.permute.xlu0 %1728
        %1731 = vset.pattern.permute.xlu0 6
        %1732 = vperm.xlu0 %1731, %v529
        %v1733 = vpop.permute.xlu0 %1732
        %1735 = vset.pattern.permute.xlu0 6
        %1736 = vperm.xlu0 %1735, %v530
        %v1737 = vpop.permute.xlu0 %1736
        %1739 = vset.pattern.permute.xlu0 6
        %1740 = vperm.xlu0 %1739, %v531
        %v1741 = vpop.permute.xlu0 %1740
        %1743 = vset.pattern.permute.xlu0 6
        %1744 = vperm.xlu0 %1743, %v532
        %v1745 = vpop.permute.xlu0 %1744
        %v1747 = vlaneseq
        %v1748 = vshrl.u32 %v1747, 7
        %v1749 = vsub.s32 6, %v1748
        %v1750 = vrot.slane %v661, %v1749
        %v1751 = vlaneseq
        %v1752 = vshrl.u32 %v1751, 7
        %v1753 = vsub.s32 6, %v1752
        %v1754 = vrot.slane %v664, %v1753
        %v1755 = vlaneseq
        %v1756 = vshrl.u32 %v1755, 7
        %v1757 = vsub.s32 6, %v1756
        %v1758 = vrot.slane %v669, %v1757
        %v1759 = vlaneseq
        %v1760 = vshrl.u32 %v1759, 7
        %v1761 = vsub.s32 6, %v1760
        %v1762 = vrot.slane %v672, %v1761
        %v1763 = vlaneseq
        %v1764 = vshrl.u32 %v1763, 7
        %v1765 = vsub.s32 6, %v1764
        %v1766 = vrot.slane %v677, %v1765
        %v1767 = vlaneseq
        %v1768 = vshrl.u32 %v1767, 7
        %v1769 = vsub.s32 6, %v1768
        %v1770 = vrot.slane %v680, %v1769
        %v1771 = vlaneseq
        %v1772 = vshrl.u32 %v1771, 7
        %v1773 = vsub.s32 6, %v1772
        %v1774 = vrot.slane %v685, %v1773
        %v1775 = vlaneseq
        %v1776 = vshrl.u32 %v1775, 7
        %v1777 = vsub.s32 6, %v1776
        %v1778 = vrot.slane %v688, %v1777
        %v1779 = vlaneseq
        %v1780 = vshrl.u32 %v1779, 7
        %v1781 = vsub.s32 6, %v1780
        %v1782 = vrot.slane %v693, %v1781
        %v1783 = vlaneseq
        %v1784 = vshrl.u32 %v1783, 7
        %v1785 = vsub.s32 6, %v1784
        %v1786 = vrot.slane %v696, %v1785
        %v1787 = vlaneseq
        %v1788 = vshrl.u32 %v1787, 7
        %v1789 = vsub.s32 6, %v1788
        %v1790 = vrot.slane %v701, %v1789
        %v1791 = vlaneseq
        %v1792 = vshrl.u32 %v1791, 7
        %v1793 = vsub.s32 6, %v1792
        %v1794 = vrot.slane %v704, %v1793
        %v1795 = vlaneseq
        %v1796 = vshrl.u32 %v1795, 7
        %v1797 = vsub.s32 6, %v1796
        %v1798 = vrot.slane %v709, %v1797
        %v1799 = vlaneseq
        %v1800 = vshrl.u32 %v1799, 7
        %v1801 = vsub.s32 6, %v1800
        %v1802 = vrot.slane %v712, %v1801
        %v1803 = vlaneseq
        %v1804 = vshrl.u32 %v1803, 7
        %v1805 = vsub.s32 6, %v1804
        %v1806 = vrot.slane %v717, %v1805
        %v1807 = vlaneseq
        %v1808 = vshrl.u32 %v1807, 7
        %v1809 = vsub.s32 6, %v1808
        %v1810 = vrot.slane %v720, %v1809
        %v1811 = vmul.f32 %v1685, %v1750
        %v1812 = vmul.f32 %v1689, %v1754
        %v1813 = vmul.f32 %v1693, %v1758
        %v1814 = vmul.f32 %v1697, %v1762
        %v1815 = vmul.f32 %v1701, %v1766
        %v1816 = vmul.f32 %v1705, %v1770
        %v1817 = vmul.f32 %v1709, %v1774
        %v1818 = vmul.f32 %v1713, %v1778
        %v1819 = vmul.f32 %v1717, %v1782
        %v1820 = vmul.f32 %v1721, %v1786
        %v1821 = vmul.f32 %v1725, %v1790
        %v1822 = vmul.f32 %v1729, %v1794
        %v1823 = vmul.f32 %v1733, %v1798
        %v1824 = vmul.f32 %v1737, %v1802
        %v1825 = vmul.f32 %v1741, %v1806
        %v1826 = vmul.f32 %v1745, %v1810
        %v1827 = vadd.f32 %v1667, %v1811
        %v1828 = vadd.f32 %v1668, %v1812
        %v1829 = vadd.f32 %v1669, %v1813
        %v1830 = vadd.f32 %v1670, %v1814
        %v1831 = vadd.f32 %v1671, %v1815
        %v1832 = vadd.f32 %v1672, %v1816
        %v1833 = vadd.f32 %v1673, %v1817
        %v1834 = vadd.f32 %v1674, %v1818
        %v1835 = vadd.f32 %v1675, %v1819
        %v1836 = vadd.f32 %v1676, %v1820
        %v1837 = vadd.f32 %v1677, %v1821
        %v1838 = vadd.f32 %v1678, %v1822
        %v1839 = vadd.f32 %v1679, %v1823
        %v1840 = vadd.f32 %v1680, %v1824
        %v1841 = vadd.f32 %v1681, %v1825
        %v1842 = vadd.f32 %v1682, %v1826
        %1843 = vset.pattern.permute.xlu0 7
        %1844 = vperm.xlu0 %1843, %v517
        %v1845 = vpop.permute.xlu0 %1844
        %1847 = vset.pattern.permute.xlu0 7
        %1848 = vperm.xlu0 %1847, %v518
        %v1849 = vpop.permute.xlu0 %1848
        %1851 = vset.pattern.permute.xlu0 7
        %1852 = vperm.xlu0 %1851, %v519
        %v1853 = vpop.permute.xlu0 %1852
        %1855 = vset.pattern.permute.xlu0 7
        %1856 = vperm.xlu0 %1855, %v520
        %v1857 = vpop.permute.xlu0 %1856
        %1859 = vset.pattern.permute.xlu0 7
        %1860 = vperm.xlu0 %1859, %v521
        %v1861 = vpop.permute.xlu0 %1860
        %1863 = vset.pattern.permute.xlu0 7
        %1864 = vperm.xlu0 %1863, %v522
        %v1865 = vpop.permute.xlu0 %1864
        %1867 = vset.pattern.permute.xlu0 7
        %1868 = vperm.xlu0 %1867, %v523
        %v1869 = vpop.permute.xlu0 %1868
        %1871 = vset.pattern.permute.xlu0 7
        %1872 = vperm.xlu0 %1871, %v524
        %v1873 = vpop.permute.xlu0 %1872
        %1875 = vset.pattern.permute.xlu0 7
        %1876 = vperm.xlu0 %1875, %v525
        %v1877 = vpop.permute.xlu0 %1876
        %1879 = vset.pattern.permute.xlu0 7
        %1880 = vperm.xlu0 %1879, %v526
        %v1881 = vpop.permute.xlu0 %1880
        %1883 = vset.pattern.permute.xlu0 7
        %1884 = vperm.xlu0 %1883, %v527
        %v1885 = vpop.permute.xlu0 %1884
        %1887 = vset.pattern.permute.xlu0 7
        %1888 = vperm.xlu0 %1887, %v528
        %v1889 = vpop.permute.xlu0 %1888
        %1891 = vset.pattern.permute.xlu0 7
        %1892 = vperm.xlu0 %1891, %v529
        %v1893 = vpop.permute.xlu0 %1892
        %1895 = vset.pattern.permute.xlu0 7
        %1896 = vperm.xlu0 %1895, %v530
        %v1897 = vpop.permute.xlu0 %1896
        %1899 = vset.pattern.permute.xlu0 7
        %1900 = vperm.xlu0 %1899, %v531
        %v1901 = vpop.permute.xlu0 %1900
        %1903 = vset.pattern.permute.xlu0 7
        %1904 = vperm.xlu0 %1903, %v532
        %v1905 = vpop.permute.xlu0 %1904
        %v1907 = vlaneseq
        %v1908 = vshrl.u32 %v1907, 7
        %v1909 = vsub.s32 7, %v1908
        %v1910 = vrot.slane %v661, %v1909
        %v1911 = vlaneseq
        %v1912 = vshrl.u32 %v1911, 7
        %v1913 = vsub.s32 7, %v1912
        %v1914 = vrot.slane %v664, %v1913
        %v1915 = vlaneseq
        %v1916 = vshrl.u32 %v1915, 7
        %v1917 = vsub.s32 7, %v1916
        %v1918 = vrot.slane %v669, %v1917
        %v1919 = vlaneseq
        %v1920 = vshrl.u32 %v1919, 7
        %v1921 = vsub.s32 7, %v1920
        %v1922 = vrot.slane %v672, %v1921
        %v1923 = vlaneseq
        %v1924 = vshrl.u32 %v1923, 7
        %v1925 = vsub.s32 7, %v1924
        %v1926 = vrot.slane %v677, %v1925
        %v1927 = vlaneseq
        %v1928 = vshrl.u32 %v1927, 7
        %v1929 = vsub.s32 7, %v1928
        %v1930 = vrot.slane %v680, %v1929
        %v1931 = vlaneseq
        %v1932 = vshrl.u32 %v1931, 7
        %v1933 = vsub.s32 7, %v1932
        %v1934 = vrot.slane %v685, %v1933
        %v1935 = vlaneseq
        %v1936 = vshrl.u32 %v1935, 7
        %v1937 = vsub.s32 7, %v1936
        %v1938 = vrot.slane %v688, %v1937
        %v1939 = vlaneseq
        %v1940 = vshrl.u32 %v1939, 7
        %v1941 = vsub.s32 7, %v1940
        %v1942 = vrot.slane %v693, %v1941
        %v1943 = vlaneseq
        %v1944 = vshrl.u32 %v1943, 7
        %v1945 = vsub.s32 7, %v1944
        %v1946 = vrot.slane %v696, %v1945
        %v1947 = vlaneseq
        %v1948 = vshrl.u32 %v1947, 7
        %v1949 = vsub.s32 7, %v1948
        %v1950 = vrot.slane %v701, %v1949
        %v1951 = vlaneseq
        %v1952 = vshrl.u32 %v1951, 7
        %v1953 = vsub.s32 7, %v1952
        %v1954 = vrot.slane %v704, %v1953
        %v1955 = vlaneseq
        %v1956 = vshrl.u32 %v1955, 7
        %v1957 = vsub.s32 7, %v1956
        %v1958 = vrot.slane %v709, %v1957
        %v1959 = vlaneseq
        %v1960 = vshrl.u32 %v1959, 7
        %v1961 = vsub.s32 7, %v1960
        %v1962 = vrot.slane %v712, %v1961
        %v1963 = vlaneseq
        %v1964 = vshrl.u32 %v1963, 7
        %v1965 = vsub.s32 7, %v1964
        %v1966 = vrot.slane %v717, %v1965
        %v1967 = vlaneseq
        %v1968 = vshrl.u32 %v1967, 7
        %v1969 = vsub.s32 7, %v1968
        %v1970 = vrot.slane %v720, %v1969
        %v1971 = vmul.f32 %v1845, %v1910
        %v1972 = vmul.f32 %v1849, %v1914
        %v1973 = vmul.f32 %v1853, %v1918
        %v1974 = vmul.f32 %v1857, %v1922
        %v1975 = vmul.f32 %v1861, %v1926
        %v1976 = vmul.f32 %v1865, %v1930
        %v1977 = vmul.f32 %v1869, %v1934
        %v1978 = vmul.f32 %v1873, %v1938
        %v1979 = vmul.f32 %v1877, %v1942
        %v1980 = vmul.f32 %v1881, %v1946
        %v1981 = vmul.f32 %v1885, %v1950
        %v1982 = vmul.f32 %v1889, %v1954
        %v1983 = vmul.f32 %v1893, %v1958
        %v1984 = vmul.f32 %v1897, %v1962
        %v1985 = vmul.f32 %v1901, %v1966
        %v1986 = vmul.f32 %v1905, %v1970
        %v1987 = vadd.f32 %v1827, %v1971
        %v1988 = vadd.f32 %v1828, %v1972
        %v1989 = vadd.f32 %v1829, %v1973
        %v1990 = vadd.f32 %v1830, %v1974
        %v1991 = vadd.f32 %v1831, %v1975
        %v1992 = vadd.f32 %v1832, %v1976
        %v1993 = vadd.f32 %v1833, %v1977
        %v1994 = vadd.f32 %v1834, %v1978
        %v1995 = vadd.f32 %v1835, %v1979
        %v1996 = vadd.f32 %v1836, %v1980
        %v1997 = vadd.f32 %v1837, %v1981
        %v1998 = vadd.f32 %v1838, %v1982
        %v1999 = vadd.f32 %v1839, %v1983
        %v2000 = vadd.f32 %v1840, %v1984
        %v2001 = vadd.f32 %v1841, %v1985
        %v2002 = vadd.f32 %v1842, %v1986
        %v2003 = vadd.f32 %v1987, %v661
        %v2004 = vadd.f32 %v1988, %v664
        %v2005 = vadd.f32 %v1989, %v669
        %v2006 = vadd.f32 %v1990, %v672
        %v2007 = vadd.f32 %v1991, %v677
        %v2008 = vadd.f32 %v1992, %v680
        %v2009 = vadd.f32 %v1993, %v685
        %v2010 = vadd.f32 %v1994, %v688
        %v2011 = vadd.f32 %v1995, %v693
        %v2012 = vadd.f32 %v1996, %v696
        %v2013 = vadd.f32 %v1997, %v701
        %v2014 = vadd.f32 %v1998, %v704
        %v2015 = vadd.f32 %v1999, %v709
        %v2016 = vadd.f32 %v2000, %v712
        %v2017 = vadd.f32 %v2001, %v717
        %v2018 = vadd.f32 %v2002, %v720
        %v2019 = vtanh.pop %v2003
        %v2020 = vtanh.pop %v2004
        %v2021 = vtanh.pop %v2005
        %v2022 = vtanh.pop %v2006
        %v2023 = vtanh.pop %v2007
        %v2024 = vtanh.pop %v2008
        %v2025 = vtanh.pop %v2009
        %v2026 = vtanh.pop %v2010
        %v2027 = vtanh.pop %v2011
        %v2028 = vtanh.pop %v2012
        %v2029 = vtanh.pop %v2013
        %v2030 = vtanh.pop %v2014
        %v2031 = vtanh.pop %v2015
        %v2032 = vtanh.pop %v2016
        %v2033 = vtanh.pop %v2017
        %v2034 = vtanh.pop %v2018
        %v2035 = vpack.c.bf16 %v2020, %v2019
        %v2036 = vpack.c.bf16 %v2022, %v2021
        %v2037 = vpack.c.bf16 %v2024, %v2023
        %v2038 = vpack.c.bf16 %v2026, %v2025
        %v2039 = vpack.c.bf16 %v2028, %v2027
        %v2040 = vpack.c.bf16 %v2030, %v2029
        %v2041 = vpack.c.bf16 %v2032, %v2031
        %v2042 = vpack.c.bf16 %v2034, %v2033
        %v2043 = vld [vmem:[%s5] sm:$0xf]
        %v2044 = vld [vmem:[%s5 + $0x4] sm:$0xf]
        %v2045 = vld [vmem:[%s5 + $0x8] sm:$0xf]
        %v2046 = vld [vmem:[%s5 + $0xc] sm:$0xf]
        %v2047 = vld [vmem:[%s6] sm:$0x1]
        %v2049 = vlaneseq
        %v2050 = vshrl.u32 %v2049, 7
        %v2051 = vsub.s32 0, %v2050
        %v2052 = vrot.slane %v2047, %v2051
        %v2058 = vunpack.c.l.b16 %v2043
        %v2059 = vunpack.c.l.b16 %v2044
        %v2060 = vunpack.c.l.b16 %v2045
        %v2061 = vunpack.c.l.b16 %v2046
        %v2062 = vpack.c.b16 %v2059, %v2058
        %v2063 = vpack.c.b16 %v2061, %v2060
        %vm2066 = vcmask 261120
        %v2068 = vsel %vm2066, %v2035, 0
        %v2071 = vsel %vm2066, %v2036, 0
        %v2074 = vsel %vm2066, %v2037, 0
        %v2077 = vsel %vm2066, %v2038, 0
        %v2080 = vsel %vm2066, %v2039, 0
        %v2083 = vsel %vm2066, %v2040, 0
        %v2086 = vsel %vm2066, %v2041, 0
        %v2089 = vsel %vm2066, %v2042, 0
        %2091 = vmatprep.subr.bf16.mxu0 0
        %2092 = vmatpush1.bf16.msra.mxu0 %v2062
        %2093 = vmatprep.subr.bf16.mxu0 0
        %2094 = vmatpush1.bf16.msra.mxu0 %v2063
        %2095 = vmatprep.subr.bf16.mxu0 0
        %2096 = vmatpush1.bf16.msra.mxu0 0
        %2097 = vmatprep.subr.bf16.mxu0 0
        %2098 = vmatpush1.bf16.msra.mxu0 0
        %2099 = vmatprep.subr.bf16.mxu0 0
        %2100 = vmatpush1.bf16.msra.mxu0 0
        %2101 = vmatprep.subr.bf16.mxu0 0
        %2102 = vmatpush1.bf16.msra.mxu0 0
        %2103 = vmatprep.subr.bf16.mxu0 0
        %2104 = vmatpush1.bf16.msra.mxu0 0
        %2105 = vmatprep.subr.bf16.mxu0 0
        %2106 = vmatpush1.bf16.msra.mxu0 0
        %2107 = vmatprep.subr.bf16.mxu0 0
        %2108 = vmatpush1.bf16.msra.mxu0 0
        %2109 = vmatprep.subr.bf16.mxu0 0
        %2110 = vmatpush1.bf16.msra.mxu0 0
        %2111 = vmatprep.subr.bf16.mxu0 0
        %2112 = vmatpush1.bf16.msra.mxu0 0
        %2113 = vmatprep.subr.bf16.mxu0 0
        %2114 = vmatpush1.bf16.msra.mxu0 0
        %2115 = vmatprep.subr.bf16.mxu0 0
        %2116 = vmatpush1.bf16.msra.mxu0 0
        %2117 = vmatprep.subr.bf16.mxu0 0
        %2118 = vmatpush1.bf16.msra.mxu0 0
        %2119 = vmatprep.subr.bf16.mxu0 0
        %2120 = vmatpush1.bf16.msra.mxu0 0
        %2121 = vmatprep.subr.bf16.mxu0 0
        %2122 = vmatpush1.bf16.msra.mxu0 0
        %2123 = vmatprep.mubr.bf16.mxu0 0
        %2124 = vmatmul.mubr.bf16.gmra.mrb[0].mxu0 %v2068
        %v2125 = vpop.f32.mrb[0].mxu0
        %v2126 = vadd.f32 %v2052, %v2125
        %v2127 = vpop.f32.mrb[0].mxu0
        %v2128 = vpop.f32.mrb[0].mxu0
        %v2129 = vadd.f32 %v2052, %v2128
        %v2130 = vpop.f32.mrb[0].mxu0
        %2131 = vmatprep.mubr.bf16.mxu0 0
        %2132 = vmatmul.mubr.bf16.gmra.mrb[0].mxu0 %v2071
        %v2133 = vpop.f32.mrb[0].mxu0
        %v2134 = vadd.f32 %v2052, %v2133
        %v2135 = vpop.f32.mrb[0].mxu0
        %v2136 = vpop.f32.mrb[0].mxu0
        %v2137 = vadd.f32 %v2052, %v2136
        %v2138 = vpop.f32.mrb[0].mxu0
        %2139 = vmatprep.mubr.bf16.mxu0 0
        %2140 = vmatmul.mubr.bf16.gmra.mrb[0].mxu0 %v2074
        %v2141 = vpop.f32.mrb[0].mxu0
        %v2142 = vadd.f32 %v2052, %v2141
        %v2143 = vpop.f32.mrb[0].mxu0
        %v2144 = vpop.f32.mrb[0].mxu0
        %v2145 = vadd.f32 %v2052, %v2144
        %v2146 = vpop.f32.mrb[0].mxu0
        %2147 = vmatprep.mubr.bf16.mxu0 0
        %2148 = vmatmul.mubr.bf16.gmra.mrb[0].mxu0 %v2077
        %v2149 = vpop.f32.mrb[0].mxu0
        %v2150 = vadd.f32 %v2052, %v2149
        %v2151 = vpop.f32.mrb[0].mxu0
        %v2152 = vpop.f32.mrb[0].mxu0
        %v2153 = vadd.f32 %v2052, %v2152
        %v2154 = vpop.f32.mrb[0].mxu0
        %2155 = vmatprep.mubr.bf16.mxu0 0
        %2156 = vmatmul.mubr.bf16.gmra.mrb[0].mxu0 %v2080
        %v2157 = vpop.f32.mrb[0].mxu0
        %v2158 = vadd.f32 %v2052, %v2157
        %v2159 = vpop.f32.mrb[0].mxu0
        %v2160 = vpop.f32.mrb[0].mxu0
        %v2161 = vadd.f32 %v2052, %v2160
        %v2162 = vpop.f32.mrb[0].mxu0
        %2163 = vmatprep.mubr.bf16.mxu0 0
        %2164 = vmatmul.mubr.bf16.gmra.mrb[0].mxu0 %v2083
        %v2165 = vpop.f32.mrb[0].mxu0
        %v2166 = vadd.f32 %v2052, %v2165
        %v2167 = vpop.f32.mrb[0].mxu0
        %v2168 = vpop.f32.mrb[0].mxu0
        %v2169 = vadd.f32 %v2052, %v2168
        %v2170 = vpop.f32.mrb[0].mxu0
        %2171 = vmatprep.mubr.bf16.mxu0 0
        %2172 = vmatmul.mubr.bf16.gmra.mrb[0].mxu0 %v2086
        %v2173 = vpop.f32.mrb[0].mxu0
        %v2174 = vadd.f32 %v2052, %v2173
        %v2175 = vpop.f32.mrb[0].mxu0
        %v2176 = vpop.f32.mrb[0].mxu0
        %v2177 = vadd.f32 %v2052, %v2176
        %v2178 = vpop.f32.mrb[0].mxu0
        %2179 = vmatprep.mubr.bf16.mxu0 0
        %2180 = vmatmul.mubr.bf16.gmra.mrb[0].mxu0 %v2089
        %v2181 = vpop.f32.mrb[0].mxu0
        %v2182 = vadd.f32 %v2052, %v2181
        %v2183 = vpop.f32.mrb[0].mxu0
        %v2184 = vpop.f32.mrb[0].mxu0
        %v2185 = vadd.f32 %v2052, %v2184
        %v2186 = vpop.f32.mrb[0].mxu0
        %2187 = vdwg.mxu0
        %v2188 = vlaneseq
        %v2189 = vshrl.u32 %v2188, 7
        %v2190 = vsub.s32 0, %v2189
        %v2191 = vrot.slane %v2126, %v2190
        %v2192 = vlaneseq
        %v2193 = vshrl.u32 %v2192, 7
        %v2194 = vsub.s32 0, %v2193
        %v2195 = vrot.slane %v2129, %v2194
        %v2196 = vlaneseq
        %v2197 = vshrl.u32 %v2196, 7
        %v2198 = vsub.s32 0, %v2197
        %v2199 = vrot.slane %v2134, %v2198
        %v2200 = vlaneseq
        %v2201 = vshrl.u32 %v2200, 7
        %v2202 = vsub.s32 0, %v2201
        %v2203 = vrot.slane %v2137, %v2202
        %v2204 = vlaneseq
        %v2205 = vshrl.u32 %v2204, 7
        %v2206 = vsub.s32 0, %v2205
        %v2207 = vrot.slane %v2142, %v2206
        %v2208 = vlaneseq
        %v2209 = vshrl.u32 %v2208, 7
        %v2210 = vsub.s32 0, %v2209
        %v2211 = vrot.slane %v2145, %v2210
        %v2212 = vlaneseq
        %v2213 = vshrl.u32 %v2212, 7
        %v2214 = vsub.s32 0, %v2213
        %v2215 = vrot.slane %v2150, %v2214
        %v2216 = vlaneseq
        %v2217 = vshrl.u32 %v2216, 7
        %v2218 = vsub.s32 0, %v2217
        %v2219 = vrot.slane %v2153, %v2218
        %v2220 = vlaneseq
        %v2221 = vshrl.u32 %v2220, 7
        %v2222 = vsub.s32 0, %v2221
        %v2223 = vrot.slane %v2158, %v2222
        %v2224 = vlaneseq
        %v2225 = vshrl.u32 %v2224, 7
        %v2226 = vsub.s32 0, %v2225
        %v2227 = vrot.slane %v2161, %v2226
        %v2228 = vlaneseq
        %v2229 = vshrl.u32 %v2228, 7
        %v2230 = vsub.s32 0, %v2229
        %v2231 = vrot.slane %v2166, %v2230
        %v2232 = vlaneseq
        %v2233 = vshrl.u32 %v2232, 7
        %v2234 = vsub.s32 0, %v2233
        %v2235 = vrot.slane %v2169, %v2234
        %v2236 = vlaneseq
        %v2237 = vshrl.u32 %v2236, 7
        %v2238 = vsub.s32 0, %v2237
        %v2239 = vrot.slane %v2174, %v2238
        %v2240 = vlaneseq
        %v2241 = vshrl.u32 %v2240, 7
        %v2242 = vsub.s32 0, %v2241
        %v2243 = vrot.slane %v2177, %v2242
        %v2244 = vlaneseq
        %v2245 = vshrl.u32 %v2244, 7
        %v2246 = vsub.s32 0, %v2245
        %v2247 = vrot.slane %v2182, %v2246
        %v2248 = vlaneseq
        %v2249 = vshrl.u32 %v2248, 7
        %v2250 = vsub.s32 0, %v2249
        %v2251 = vrot.slane %v2185, %v2250
        %v2252 = vmul.f32 %v726, %v2191
        %v2253 = vmul.f32 %v731, %v2195
        %v2254 = vmul.f32 %v736, %v2199
        %v2255 = vmul.f32 %v741, %v2203
        %v2256 = vmul.f32 %v746, %v2207
        %v2257 = vmul.f32 %v751, %v2211
        %v2258 = vmul.f32 %v756, %v2215
        %v2259 = vmul.f32 %v761, %v2219
        %v2260 = vmul.f32 %v766, %v2223
        %v2261 = vmul.f32 %v771, %v2227
        %v2262 = vmul.f32 %v776, %v2231
        %v2263 = vmul.f32 %v781, %v2235
        %v2264 = vmul.f32 %v786, %v2239
        %v2265 = vmul.f32 %v791, %v2243
        %v2266 = vmul.f32 %v796, %v2247
        %v2267 = vmul.f32 %v801, %v2251
        %v2268 = vlaneseq
        %v2269 = vshrl.u32 %v2268, 7
        %v2270 = vsub.s32 1, %v2269
        %v2271 = vrot.slane %v2126, %v2270
        %v2272 = vlaneseq
        %v2273 = vshrl.u32 %v2272, 7
        %v2274 = vsub.s32 1, %v2273
        %v2275 = vrot.slane %v2129, %v2274
        %v2276 = vlaneseq
        %v2277 = vshrl.u32 %v2276, 7
        %v2278 = vsub.s32 1, %v2277
        %v2279 = vrot.slane %v2134, %v2278
        %v2280 = vlaneseq
        %v2281 = vshrl.u32 %v2280, 7
        %v2282 = vsub.s32 1, %v2281
        %v2283 = vrot.slane %v2137, %v2282
        %v2284 = vlaneseq
        %v2285 = vshrl.u32 %v2284, 7
        %v2286 = vsub.s32 1, %v2285
        %v2287 = vrot.slane %v2142, %v2286
        %v2288 = vlaneseq
        %v2289 = vshrl.u32 %v2288, 7
        %v2290 = vsub.s32 1, %v2289
        %v2291 = vrot.slane %v2145, %v2290
        %v2292 = vlaneseq
        %v2293 = vshrl.u32 %v2292, 7
        %v2294 = vsub.s32 1, %v2293
        %v2295 = vrot.slane %v2150, %v2294
        %v2296 = vlaneseq
        %v2297 = vshrl.u32 %v2296, 7
        %v2298 = vsub.s32 1, %v2297
        %v2299 = vrot.slane %v2153, %v2298
        %v2300 = vlaneseq
        %v2301 = vshrl.u32 %v2300, 7
        %v2302 = vsub.s32 1, %v2301
        %v2303 = vrot.slane %v2158, %v2302
        %v2304 = vlaneseq
        %v2305 = vshrl.u32 %v2304, 7
        %v2306 = vsub.s32 1, %v2305
        %v2307 = vrot.slane %v2161, %v2306
        %v2308 = vlaneseq
        %v2309 = vshrl.u32 %v2308, 7
        %v2310 = vsub.s32 1, %v2309
        %v2311 = vrot.slane %v2166, %v2310
        %v2312 = vlaneseq
        %v2313 = vshrl.u32 %v2312, 7
        %v2314 = vsub.s32 1, %v2313
        %v2315 = vrot.slane %v2169, %v2314
        %v2316 = vlaneseq
        %v2317 = vshrl.u32 %v2316, 7
        %v2318 = vsub.s32 1, %v2317
        %v2319 = vrot.slane %v2174, %v2318
        %v2320 = vlaneseq
        %v2321 = vshrl.u32 %v2320, 7
        %v2322 = vsub.s32 1, %v2321
        %v2323 = vrot.slane %v2177, %v2322
        %v2324 = vlaneseq
        %v2325 = vshrl.u32 %v2324, 7
        %v2326 = vsub.s32 1, %v2325
        %v2327 = vrot.slane %v2182, %v2326
        %v2328 = vlaneseq
        %v2329 = vshrl.u32 %v2328, 7
        %v2330 = vsub.s32 1, %v2329
        %v2331 = vrot.slane %v2185, %v2330
        %v2332 = vmul.f32 %v885, %v2271
        %v2333 = vmul.f32 %v889, %v2275
        %v2334 = vmul.f32 %v893, %v2279
        %v2335 = vmul.f32 %v897, %v2283
        %v2336 = vmul.f32 %v901, %v2287
        %v2337 = vmul.f32 %v905, %v2291
        %v2338 = vmul.f32 %v909, %v2295
        %v2339 = vmul.f32 %v913, %v2299
        %v2340 = vmul.f32 %v917, %v2303
        %v2341 = vmul.f32 %v921, %v2307
        %v2342 = vmul.f32 %v925, %v2311
        %v2343 = vmul.f32 %v929, %v2315
        %v2344 = vmul.f32 %v933, %v2319
        %v2345 = vmul.f32 %v937, %v2323
        %v2346 = vmul.f32 %v941, %v2327
        %v2347 = vmul.f32 %v945, %v2331
        %v2348 = vadd.f32 %v2252, %v2332
        %v2349 = vadd.f32 %v2253, %v2333
        %v2350 = vadd.f32 %v2254, %v2334
        %v2351 = vadd.f32 %v2255, %v2335
        %v2352 = vadd.f32 %v2256, %v2336
        %v2353 = vadd.f32 %v2257, %v2337
        %v2354 = vadd.f32 %v2258, %v2338
        %v2355 = vadd.f32 %v2259, %v2339
        %v2356 = vadd.f32 %v2260, %v2340
        %v2357 = vadd.f32 %v2261, %v2341
        %v2358 = vadd.f32 %v2262, %v2342
        %v2359 = vadd.f32 %v2263, %v2343
        %v2360 = vadd.f32 %v2264, %v2344
        %v2361 = vadd.f32 %v2265, %v2345
        %v2362 = vadd.f32 %v2266, %v2346
        %v2363 = vadd.f32 %v2267, %v2347
        %v2364 = vlaneseq
        %v2365 = vshrl.u32 %v2364, 7
        %v2366 = vsub.s32 2, %v2365
        %v2367 = vrot.slane %v2126, %v2366
        %v2368 = vlaneseq
        %v2369 = vshrl.u32 %v2368, 7
        %v2370 = vsub.s32 2, %v2369
        %v2371 = vrot.slane %v2129, %v2370
        %v2372 = vlaneseq
        %v2373 = vshrl.u32 %v2372, 7
        %v2374 = vsub.s32 2, %v2373
        %v2375 = vrot.slane %v2134, %v2374
        %v2376 = vlaneseq
        %v2377 = vshrl.u32 %v2376, 7
        %v2378 = vsub.s32 2, %v2377
        %v2379 = vrot.slane %v2137, %v2378
        %v2380 = vlaneseq
        %v2381 = vshrl.u32 %v2380, 7
        %v2382 = vsub.s32 2, %v2381
        %v2383 = vrot.slane %v2142, %v2382
        %v2384 = vlaneseq
        %v2385 = vshrl.u32 %v2384, 7
        %v2386 = vsub.s32 2, %v2385
        %v2387 = vrot.slane %v2145, %v2386
        %v2388 = vlaneseq
        %v2389 = vshrl.u32 %v2388, 7
        %v2390 = vsub.s32 2, %v2389
        %v2391 = vrot.slane %v2150, %v2390
        %v2392 = vlaneseq
        %v2393 = vshrl.u32 %v2392, 7
        %v2394 = vsub.s32 2, %v2393
        %v2395 = vrot.slane %v2153, %v2394
        %v2396 = vlaneseq
        %v2397 = vshrl.u32 %v2396, 7
        %v2398 = vsub.s32 2, %v2397
        %v2399 = vrot.slane %v2158, %v2398
        %v2400 = vlaneseq
        %v2401 = vshrl.u32 %v2400, 7
        %v2402 = vsub.s32 2, %v2401
        %v2403 = vrot.slane %v2161, %v2402
        %v2404 = vlaneseq
        %v2405 = vshrl.u32 %v2404, 7
        %v2406 = vsub.s32 2, %v2405
        %v2407 = vrot.slane %v2166, %v2406
        %v2408 = vlaneseq
        %v2409 = vshrl.u32 %v2408, 7
        %v2410 = vsub.s32 2, %v2409
        %v2411 = vrot.slane %v2169, %v2410
        %v2412 = vlaneseq
        %v2413 = vshrl.u32 %v2412, 7
        %v2414 = vsub.s32 2, %v2413
        %v2415 = vrot.slane %v2174, %v2414
        %v2416 = vlaneseq
        %v2417 = vshrl.u32 %v2416, 7
        %v2418 = vsub.s32 2, %v2417
        %v2419 = vrot.slane %v2177, %v2418
        %v2420 = vlaneseq
        %v2421 = vshrl.u32 %v2420, 7
        %v2422 = vsub.s32 2, %v2421
        %v2423 = vrot.slane %v2182, %v2422
        %v2424 = vlaneseq
        %v2425 = vshrl.u32 %v2424, 7
        %v2426 = vsub.s32 2, %v2425
        %v2427 = vrot.slane %v2185, %v2426
        %v2428 = vmul.f32 %v1045, %v2367
        %v2429 = vmul.f32 %v1049, %v2371
        %v2430 = vmul.f32 %v1053, %v2375
        %v2431 = vmul.f32 %v1057, %v2379
        %v2432 = vmul.f32 %v1061, %v2383
        %v2433 = vmul.f32 %v1065, %v2387
        %v2434 = vmul.f32 %v1069, %v2391
        %v2435 = vmul.f32 %v1073, %v2395
        %v2436 = vmul.f32 %v1077, %v2399
        %v2437 = vmul.f32 %v1081, %v2403
        %v2438 = vmul.f32 %v1085, %v2407
        %v2439 = vmul.f32 %v1089, %v2411
        %v2440 = vmul.f32 %v1093, %v2415
        %v2441 = vmul.f32 %v1097, %v2419
        %v2442 = vmul.f32 %v1101, %v2423
        %v2443 = vmul.f32 %v1105, %v2427
        %v2444 = vadd.f32 %v2348, %v2428
        %v2445 = vadd.f32 %v2349, %v2429
        %v2446 = vadd.f32 %v2350, %v2430
        %v2447 = vadd.f32 %v2351, %v2431
        %v2448 = vadd.f32 %v2352, %v2432
        %v2449 = vadd.f32 %v2353, %v2433
        %v2450 = vadd.f32 %v2354, %v2434
        %v2451 = vadd.f32 %v2355, %v2435
        %v2452 = vadd.f32 %v2356, %v2436
        %v2453 = vadd.f32 %v2357, %v2437
        %v2454 = vadd.f32 %v2358, %v2438
        %v2455 = vadd.f32 %v2359, %v2439
        %v2456 = vadd.f32 %v2360, %v2440
        %v2457 = vadd.f32 %v2361, %v2441
        %v2458 = vadd.f32 %v2362, %v2442
        %v2459 = vadd.f32 %v2363, %v2443
        %v2460 = vlaneseq
        %v2461 = vshrl.u32 %v2460, 7
        %v2462 = vsub.s32 3, %v2461
        %v2463 = vrot.slane %v2126, %v2462
        %v2464 = vlaneseq
        %v2465 = vshrl.u32 %v2464, 7
        %v2466 = vsub.s32 3, %v2465
        %v2467 = vrot.slane %v2129, %v2466
        %v2468 = vlaneseq
        %v2469 = vshrl.u32 %v2468, 7
        %v2470 = vsub.s32 3, %v2469
        %v2471 = vrot.slane %v2134, %v2470
        %v2472 = vlaneseq
        %v2473 = vshrl.u32 %v2472, 7
        %v2474 = vsub.s32 3, %v2473
        %v2475 = vrot.slane %v2137, %v2474
        %v2476 = vlaneseq
        %v2477 = vshrl.u32 %v2476, 7
        %v2478 = vsub.s32 3, %v2477
        %v2479 = vrot.slane %v2142, %v2478
        %v2480 = vlaneseq
        %v2481 = vshrl.u32 %v2480, 7
        %v2482 = vsub.s32 3, %v2481
        %v2483 = vrot.slane %v2145, %v2482
        %v2484 = vlaneseq
        %v2485 = vshrl.u32 %v2484, 7
        %v2486 = vsub.s32 3, %v2485
        %v2487 = vrot.slane %v2150, %v2486
        %v2488 = vlaneseq
        %v2489 = vshrl.u32 %v2488, 7
        %v2490 = vsub.s32 3, %v2489
        %v2491 = vrot.slane %v2153, %v2490
        %v2492 = vlaneseq
        %v2493 = vshrl.u32 %v2492, 7
        %v2494 = vsub.s32 3, %v2493
        %v2495 = vrot.slane %v2158, %v2494
        %v2496 = vlaneseq
        %v2497 = vshrl.u32 %v2496, 7
        %v2498 = vsub.s32 3, %v2497
        %v2499 = vrot.slane %v2161, %v2498
        %v2500 = vlaneseq
        %v2501 = vshrl.u32 %v2500, 7
        %v2502 = vsub.s32 3, %v2501
        %v2503 = vrot.slane %v2166, %v2502
        %v2504 = vlaneseq
        %v2505 = vshrl.u32 %v2504, 7
        %v2506 = vsub.s32 3, %v2505
        %v2507 = vrot.slane %v2169, %v2506
        %v2508 = vlaneseq
        %v2509 = vshrl.u32 %v2508, 7
        %v2510 = vsub.s32 3, %v2509
        %v2511 = vrot.slane %v2174, %v2510
        %v2512 = vlaneseq
        %v2513 = vshrl.u32 %v2512, 7
        %v2514 = vsub.s32 3, %v2513
        %v2515 = vrot.slane %v2177, %v2514
        %v2516 = vlaneseq
        %v2517 = vshrl.u32 %v2516, 7
        %v2518 = vsub.s32 3, %v2517
        %v2519 = vrot.slane %v2182, %v2518
        %v2520 = vlaneseq
        %v2521 = vshrl.u32 %v2520, 7
        %v2522 = vsub.s32 3, %v2521
        %v2523 = vrot.slane %v2185, %v2522
        %v2524 = vmul.f32 %v1205, %v2463
        %v2525 = vmul.f32 %v1209, %v2467
        %v2526 = vmul.f32 %v1213, %v2471
        %v2527 = vmul.f32 %v1217, %v2475
        %v2528 = vmul.f32 %v1221, %v2479
        %v2529 = vmul.f32 %v1225, %v2483
        %v2530 = vmul.f32 %v1229, %v2487
        %v2531 = vmul.f32 %v1233, %v2491
        %v2532 = vmul.f32 %v1237, %v2495
        %v2533 = vmul.f32 %v1241, %v2499
        %v2534 = vmul.f32 %v1245, %v2503
        %v2535 = vmul.f32 %v1249, %v2507
        %v2536 = vmul.f32 %v1253, %v2511
        %v2537 = vmul.f32 %v1257, %v2515
        %v2538 = vmul.f32 %v1261, %v2519
        %v2539 = vmul.f32 %v1265, %v2523
        %v2540 = vadd.f32 %v2444, %v2524
        %v2541 = vadd.f32 %v2445, %v2525
        %v2542 = vadd.f32 %v2446, %v2526
        %v2543 = vadd.f32 %v2447, %v2527
        %v2544 = vadd.f32 %v2448, %v2528
        %v2545 = vadd.f32 %v2449, %v2529
        %v2546 = vadd.f32 %v2450, %v2530
        %v2547 = vadd.f32 %v2451, %v2531
        %v2548 = vadd.f32 %v2452, %v2532
        %v2549 = vadd.f32 %v2453, %v2533
        %v2550 = vadd.f32 %v2454, %v2534
        %v2551 = vadd.f32 %v2455, %v2535
        %v2552 = vadd.f32 %v2456, %v2536
        %v2553 = vadd.f32 %v2457, %v2537
        %v2554 = vadd.f32 %v2458, %v2538
        %v2555 = vadd.f32 %v2459, %v2539
        %v2556 = vlaneseq
        %v2557 = vshrl.u32 %v2556, 7
        %v2558 = vsub.s32 4, %v2557
        %v2559 = vrot.slane %v2126, %v2558
        %v2560 = vlaneseq
        %v2561 = vshrl.u32 %v2560, 7
        %v2562 = vsub.s32 4, %v2561
        %v2563 = vrot.slane %v2129, %v2562
        %v2564 = vlaneseq
        %v2565 = vshrl.u32 %v2564, 7
        %v2566 = vsub.s32 4, %v2565
        %v2567 = vrot.slane %v2134, %v2566
        %v2568 = vlaneseq
        %v2569 = vshrl.u32 %v2568, 7
        %v2570 = vsub.s32 4, %v2569
        %v2571 = vrot.slane %v2137, %v2570
        %v2572 = vlaneseq
        %v2573 = vshrl.u32 %v2572, 7
        %v2574 = vsub.s32 4, %v2573
        %v2575 = vrot.slane %v2142, %v2574
        %v2576 = vlaneseq
        %v2577 = vshrl.u32 %v2576, 7
        %v2578 = vsub.s32 4, %v2577
        %v2579 = vrot.slane %v2145, %v2578
        %v2580 = vlaneseq
        %v2581 = vshrl.u32 %v2580, 7
        %v2582 = vsub.s32 4, %v2581
        %v2583 = vrot.slane %v2150, %v2582
        %v2584 = vlaneseq
        %v2585 = vshrl.u32 %v2584, 7
        %v2586 = vsub.s32 4, %v2585
        %v2587 = vrot.slane %v2153, %v2586
        %v2588 = vlaneseq
        %v2589 = vshrl.u32 %v2588, 7
        %v2590 = vsub.s32 4, %v2589
        %v2591 = vrot.slane %v2158, %v2590
        %v2592 = vlaneseq
        %v2593 = vshrl.u32 %v2592, 7
        %v2594 = vsub.s32 4, %v2593
        %v2595 = vrot.slane %v2161, %v2594
        %v2596 = vlaneseq
        %v2597 = vshrl.u32 %v2596, 7
        %v2598 = vsub.s32 4, %v2597
        %v2599 = vrot.slane %v2166, %v2598
        %v2600 = vlaneseq
        %v2601 = vshrl.u32 %v2600, 7
        %v2602 = vsub.s32 4, %v2601
        %v2603 = vrot.slane %v2169, %v2602
        %v2604 = vlaneseq
        %v2605 = vshrl.u32 %v2604, 7
        %v2606 = vsub.s32 4, %v2605
        %v2607 = vrot.slane %v2174, %v2606
        %v2608 = vlaneseq
        %v2609 = vshrl.u32 %v2608, 7
        %v2610 = vsub.s32 4, %v2609
        %v2611 = vrot.slane %v2177, %v2610
        %v2612 = vlaneseq
        %v2613 = vshrl.u32 %v2612, 7
        %v2614 = vsub.s32 4, %v2613
        %v2615 = vrot.slane %v2182, %v2614
        %v2616 = vlaneseq
        %v2617 = vshrl.u32 %v2616, 7
        %v2618 = vsub.s32 4, %v2617
        %v2619 = vrot.slane %v2185, %v2618
        %v2620 = vmul.f32 %v1365, %v2559
        %v2621 = vmul.f32 %v1369, %v2563
        %v2622 = vmul.f32 %v1373, %v2567
        %v2623 = vmul.f32 %v1377, %v2571
        %v2624 = vmul.f32 %v1381, %v2575
        %v2625 = vmul.f32 %v1385, %v2579
        %v2626 = vmul.f32 %v1389, %v2583
        %v2627 = vmul.f32 %v1393, %v2587
        %v2628 = vmul.f32 %v1397, %v2591
        %v2629 = vmul.f32 %v1401, %v2595
        %v2630 = vmul.f32 %v1405, %v2599
        %v2631 = vmul.f32 %v1409, %v2603
        %v2632 = vmul.f32 %v1413, %v2607
        %v2633 = vmul.f32 %v1417, %v2611
        %v2634 = vmul.f32 %v1421, %v2615
        %v2635 = vmul.f32 %v1425, %v2619
        %v2636 = vadd.f32 %v2540, %v2620
        %v2637 = vadd.f32 %v2541, %v2621
        %v2638 = vadd.f32 %v2542, %v2622
        %v2639 = vadd.f32 %v2543, %v2623
        %v2640 = vadd.f32 %v2544, %v2624
        %v2641 = vadd.f32 %v2545, %v2625
        %v2642 = vadd.f32 %v2546, %v2626
        %v2643 = vadd.f32 %v2547, %v2627
        %v2644 = vadd.f32 %v2548, %v2628
        %v2645 = vadd.f32 %v2549, %v2629
        %v2646 = vadd.f32 %v2550, %v2630
        %v2647 = vadd.f32 %v2551, %v2631
        %v2648 = vadd.f32 %v2552, %v2632
        %v2649 = vadd.f32 %v2553, %v2633
        %v2650 = vadd.f32 %v2554, %v2634
        %v2651 = vadd.f32 %v2555, %v2635
        %v2652 = vlaneseq
        %v2653 = vshrl.u32 %v2652, 7
        %v2654 = vsub.s32 5, %v2653
        %v2655 = vrot.slane %v2126, %v2654
        %v2656 = vlaneseq
        %v2657 = vshrl.u32 %v2656, 7
        %v2658 = vsub.s32 5, %v2657
        %v2659 = vrot.slane %v2129, %v2658
        %v2660 = vlaneseq
        %v2661 = vshrl.u32 %v2660, 7
        %v2662 = vsub.s32 5, %v2661
        %v2663 = vrot.slane %v2134, %v2662
        %v2664 = vlaneseq
        %v2665 = vshrl.u32 %v2664, 7
        %v2666 = vsub.s32 5, %v2665
        %v2667 = vrot.slane %v2137, %v2666
        %v2668 = vlaneseq
        %v2669 = vshrl.u32 %v2668, 7
        %v2670 = vsub.s32 5, %v2669
        %v2671 = vrot.slane %v2142, %v2670
        %v2672 = vlaneseq
        %v2673 = vshrl.u32 %v2672, 7
        %v2674 = vsub.s32 5, %v2673
        %v2675 = vrot.slane %v2145, %v2674
        %v2676 = vlaneseq
        %v2677 = vshrl.u32 %v2676, 7
        %v2678 = vsub.s32 5, %v2677
        %v2679 = vrot.slane %v2150, %v2678
        %v2680 = vlaneseq
        %v2681 = vshrl.u32 %v2680, 7
        %v2682 = vsub.s32 5, %v2681
        %v2683 = vrot.slane %v2153, %v2682
        %v2684 = vlaneseq
        %v2685 = vshrl.u32 %v2684, 7
        %v2686 = vsub.s32 5, %v2685
        %v2687 = vrot.slane %v2158, %v2686
        %v2688 = vlaneseq
        %v2689 = vshrl.u32 %v2688, 7
        %v2690 = vsub.s32 5, %v2689
        %v2691 = vrot.slane %v2161, %v2690
        %v2692 = vlaneseq
        %v2693 = vshrl.u32 %v2692, 7
        %v2694 = vsub.s32 5, %v2693
        %v2695 = vrot.slane %v2166, %v2694
        %v2696 = vlaneseq
        %v2697 = vshrl.u32 %v2696, 7
        %v2698 = vsub.s32 5, %v2697
        %v2699 = vrot.slane %v2169, %v2698
        %v2700 = vlaneseq
        %v2701 = vshrl.u32 %v2700, 7
        %v2702 = vsub.s32 5, %v2701
        %v2703 = vrot.slane %v2174, %v2702
        %v2704 = vlaneseq
        %v2705 = vshrl.u32 %v2704, 7
        %v2706 = vsub.s32 5, %v2705
        %v2707 = vrot.slane %v2177, %v2706
        %v2708 = vlaneseq
        %v2709 = vshrl.u32 %v2708, 7
        %v2710 = vsub.s32 5, %v2709
        %v2711 = vrot.slane %v2182, %v2710
        %v2712 = vlaneseq
        %v2713 = vshrl.u32 %v2712, 7
        %v2714 = vsub.s32 5, %v2713
        %v2715 = vrot.slane %v2185, %v2714
        %v2716 = vmul.f32 %v1525, %v2655
        %v2717 = vmul.f32 %v1529, %v2659
        %v2718 = vmul.f32 %v1533, %v2663
        %v2719 = vmul.f32 %v1537, %v2667
        %v2720 = vmul.f32 %v1541, %v2671
        %v2721 = vmul.f32 %v1545, %v2675
        %v2722 = vmul.f32 %v1549, %v2679
        %v2723 = vmul.f32 %v1553, %v2683
        %v2724 = vmul.f32 %v1557, %v2687
        %v2725 = vmul.f32 %v1561, %v2691
        %v2726 = vmul.f32 %v1565, %v2695
        %v2727 = vmul.f32 %v1569, %v2699
        %v2728 = vmul.f32 %v1573, %v2703
        %v2729 = vmul.f32 %v1577, %v2707
        %v2730 = vmul.f32 %v1581, %v2711
        %v2731 = vmul.f32 %v1585, %v2715
        %v2732 = vadd.f32 %v2636, %v2716
        %v2733 = vadd.f32 %v2637, %v2717
        %v2734 = vadd.f32 %v2638, %v2718
        %v2735 = vadd.f32 %v2639, %v2719
        %v2736 = vadd.f32 %v2640, %v2720
        %v2737 = vadd.f32 %v2641, %v2721
        %v2738 = vadd.f32 %v2642, %v2722
        %v2739 = vadd.f32 %v2643, %v2723
        %v2740 = vadd.f32 %v2644, %v2724
        %v2741 = vadd.f32 %v2645, %v2725
        %v2742 = vadd.f32 %v2646, %v2726
        %v2743 = vadd.f32 %v2647, %v2727
        %v2744 = vadd.f32 %v2648, %v2728
        %v2745 = vadd.f32 %v2649, %v2729
        %v2746 = vadd.f32 %v2650, %v2730
        %v2747 = vadd.f32 %v2651, %v2731
        %v2748 = vlaneseq
        %v2749 = vshrl.u32 %v2748, 7
        %v2750 = vsub.s32 6, %v2749
        %v2751 = vrot.slane %v2126, %v2750
        %v2752 = vlaneseq
        %v2753 = vshrl.u32 %v2752, 7
        %v2754 = vsub.s32 6, %v2753
        %v2755 = vrot.slane %v2129, %v2754
        %v2756 = vlaneseq
        %v2757 = vshrl.u32 %v2756, 7
        %v2758 = vsub.s32 6, %v2757
        %v2759 = vrot.slane %v2134, %v2758
        %v2760 = vlaneseq
        %v2761 = vshrl.u32 %v2760, 7
        %v2762 = vsub.s32 6, %v2761
        %v2763 = vrot.slane %v2137, %v2762
        %v2764 = vlaneseq
        %v2765 = vshrl.u32 %v2764, 7
        %v2766 = vsub.s32 6, %v2765
        %v2767 = vrot.slane %v2142, %v2766
        %v2768 = vlaneseq
        %v2769 = vshrl.u32 %v2768, 7
        %v2770 = vsub.s32 6, %v2769
        %v2771 = vrot.slane %v2145, %v2770
        %v2772 = vlaneseq
        %v2773 = vshrl.u32 %v2772, 7
        %v2774 = vsub.s32 6, %v2773
        %v2775 = vrot.slane %v2150, %v2774
        %v2776 = vlaneseq
        %v2777 = vshrl.u32 %v2776, 7
        %v2778 = vsub.s32 6, %v2777
        %v2779 = vrot.slane %v2153, %v2778
        %v2780 = vlaneseq
        %v2781 = vshrl.u32 %v2780, 7
        %v2782 = vsub.s32 6, %v2781
        %v2783 = vrot.slane %v2158, %v2782
        %v2784 = vlaneseq
        %v2785 = vshrl.u32 %v2784, 7
        %v2786 = vsub.s32 6, %v2785
        %v2787 = vrot.slane %v2161, %v2786
        %v2788 = vlaneseq
        %v2789 = vshrl.u32 %v2788, 7
        %v2790 = vsub.s32 6, %v2789
        %v2791 = vrot.slane %v2166, %v2790
        %v2792 = vlaneseq
        %v2793 = vshrl.u32 %v2792, 7
        %v2794 = vsub.s32 6, %v2793
        %v2795 = vrot.slane %v2169, %v2794
        %v2796 = vlaneseq
        %v2797 = vshrl.u32 %v2796, 7
        %v2798 = vsub.s32 6, %v2797
        %v2799 = vrot.slane %v2174, %v2798
        %v2800 = vlaneseq
        %v2801 = vshrl.u32 %v2800, 7
        %v2802 = vsub.s32 6, %v2801
        %v2803 = vrot.slane %v2177, %v2802
        %v2804 = vlaneseq
        %v2805 = vshrl.u32 %v2804, 7
        %v2806 = vsub.s32 6, %v2805
        %v2807 = vrot.slane %v2182, %v2806
        %v2808 = vlaneseq
        %v2809 = vshrl.u32 %v2808, 7
        %v2810 = vsub.s32 6, %v2809
        %v2811 = vrot.slane %v2185, %v2810
        %v2812 = vmul.f32 %v1685, %v2751
        %v2813 = vmul.f32 %v1689, %v2755
        %v2814 = vmul.f32 %v1693, %v2759
        %v2815 = vmul.f32 %v1697, %v2763
        %v2816 = vmul.f32 %v1701, %v2767
        %v2817 = vmul.f32 %v1705, %v2771
        %v2818 = vmul.f32 %v1709, %v2775
        %v2819 = vmul.f32 %v1713, %v2779
        %v2820 = vmul.f32 %v1717, %v2783
        %v2821 = vmul.f32 %v1721, %v2787
        %v2822 = vmul.f32 %v1725, %v2791
        %v2823 = vmul.f32 %v1729, %v2795
        %v2824 = vmul.f32 %v1733, %v2799
        %v2825 = vmul.f32 %v1737, %v2803
        %v2826 = vmul.f32 %v1741, %v2807
        %v2827 = vmul.f32 %v1745, %v2811
        %v2828 = vadd.f32 %v2732, %v2812
        %v2829 = vadd.f32 %v2733, %v2813
        %v2830 = vadd.f32 %v2734, %v2814
        %v2831 = vadd.f32 %v2735, %v2815
        %v2832 = vadd.f32 %v2736, %v2816
        %v2833 = vadd.f32 %v2737, %v2817
        %v2834 = vadd.f32 %v2738, %v2818
        %v2835 = vadd.f32 %v2739, %v2819
        %v2836 = vadd.f32 %v2740, %v2820
        %v2837 = vadd.f32 %v2741, %v2821
        %v2838 = vadd.f32 %v2742, %v2822
        %v2839 = vadd.f32 %v2743, %v2823
        %v2840 = vadd.f32 %v2744, %v2824
        %v2841 = vadd.f32 %v2745, %v2825
        %v2842 = vadd.f32 %v2746, %v2826
        %v2843 = vadd.f32 %v2747, %v2827
        %v2844 = vlaneseq
        %v2845 = vshrl.u32 %v2844, 7
        %v2846 = vsub.s32 7, %v2845
        %v2847 = vrot.slane %v2126, %v2846
        %v2848 = vlaneseq
        %v2849 = vshrl.u32 %v2848, 7
        %v2850 = vsub.s32 7, %v2849
        %v2851 = vrot.slane %v2129, %v2850
        %v2852 = vlaneseq
        %v2853 = vshrl.u32 %v2852, 7
        %v2854 = vsub.s32 7, %v2853
        %v2855 = vrot.slane %v2134, %v2854
        %v2856 = vlaneseq
        %v2857 = vshrl.u32 %v2856, 7
        %v2858 = vsub.s32 7, %v2857
        %v2859 = vrot.slane %v2137, %v2858
        %v2860 = vlaneseq
        %v2861 = vshrl.u32 %v2860, 7
        %v2862 = vsub.s32 7, %v2861
        %v2863 = vrot.slane %v2142, %v2862
        %v2864 = vlaneseq
        %v2865 = vshrl.u32 %v2864, 7
        %v2866 = vsub.s32 7, %v2865
        %v2867 = vrot.slane %v2145, %v2866
        %v2868 = vlaneseq
        %v2869 = vshrl.u32 %v2868, 7
        %v2870 = vsub.s32 7, %v2869
        %v2871 = vrot.slane %v2150, %v2870
        %v2872 = vlaneseq
        %v2873 = vshrl.u32 %v2872, 7
        %v2874 = vsub.s32 7, %v2873
        %v2875 = vrot.slane %v2153, %v2874
        %v2876 = vlaneseq
        %v2877 = vshrl.u32 %v2876, 7
        %v2878 = vsub.s32 7, %v2877
        %v2879 = vrot.slane %v2158, %v2878
        %v2880 = vlaneseq
        %v2881 = vshrl.u32 %v2880, 7
        %v2882 = vsub.s32 7, %v2881
        %v2883 = vrot.slane %v2161, %v2882
        %v2884 = vlaneseq
        %v2885 = vshrl.u32 %v2884, 7
        %v2886 = vsub.s32 7, %v2885
        %v2887 = vrot.slane %v2166, %v2886
        %v2888 = vlaneseq
        %v2889 = vshrl.u32 %v2888, 7
        %v2890 = vsub.s32 7, %v2889
        %v2891 = vrot.slane %v2169, %v2890
        %v2892 = vlaneseq
        %v2893 = vshrl.u32 %v2892, 7
        %v2894 = vsub.s32 7, %v2893
        %v2895 = vrot.slane %v2174, %v2894
        %v2896 = vlaneseq
        %v2897 = vshrl.u32 %v2896, 7
        %v2898 = vsub.s32 7, %v2897
        %v2899 = vrot.slane %v2177, %v2898
        %v2900 = vlaneseq
        %v2901 = vshrl.u32 %v2900, 7
        %v2902 = vsub.s32 7, %v2901
        %v2903 = vrot.slane %v2182, %v2902
        %v2904 = vlaneseq
        %v2905 = vshrl.u32 %v2904, 7
        %v2906 = vsub.s32 7, %v2905
        %v2907 = vrot.slane %v2185, %v2906
        %v2908 = vmul.f32 %v1845, %v2847
        %v2909 = vmul.f32 %v1849, %v2851
        %v2910 = vmul.f32 %v1853, %v2855
        %v2911 = vmul.f32 %v1857, %v2859
        %v2912 = vmul.f32 %v1861, %v2863
        %v2913 = vmul.f32 %v1865, %v2867
        %v2914 = vmul.f32 %v1869, %v2871
        %v2915 = vmul.f32 %v1873, %v2875
        %v2916 = vmul.f32 %v1877, %v2879
        %v2917 = vmul.f32 %v1881, %v2883
        %v2918 = vmul.f32 %v1885, %v2887
        %v2919 = vmul.f32 %v1889, %v2891
        %v2920 = vmul.f32 %v1893, %v2895
        %v2921 = vmul.f32 %v1897, %v2899
        %v2922 = vmul.f32 %v1901, %v2903
        %v2923 = vmul.f32 %v1905, %v2907
        %v2924 = vadd.f32 %v2828, %v2908
        %v2925 = vadd.f32 %v2829, %v2909
        %v2926 = vadd.f32 %v2830, %v2910
        %v2927 = vadd.f32 %v2831, %v2911
        %v2928 = vadd.f32 %v2832, %v2912
        %v2929 = vadd.f32 %v2833, %v2913
        %v2930 = vadd.f32 %v2834, %v2914
        %v2931 = vadd.f32 %v2835, %v2915
        %v2932 = vadd.f32 %v2836, %v2916
        %v2933 = vadd.f32 %v2837, %v2917
        %v2934 = vadd.f32 %v2838, %v2918
        %v2935 = vadd.f32 %v2839, %v2919
        %v2936 = vadd.f32 %v2840, %v2920
        %v2937 = vadd.f32 %v2841, %v2921
        %v2938 = vadd.f32 %v2842, %v2922
        %v2939 = vadd.f32 %v2843, %v2923
        %v2940 = vadd.f32 %v2924, %v2126
        %v2941 = vadd.f32 %v2925, %v2129
        %v2942 = vadd.f32 %v2926, %v2134
        %v2943 = vadd.f32 %v2927, %v2137
        %v2944 = vadd.f32 %v2928, %v2142
        %v2945 = vadd.f32 %v2929, %v2145
        %v2946 = vadd.f32 %v2930, %v2150
        %v2947 = vadd.f32 %v2931, %v2153
        %v2948 = vadd.f32 %v2932, %v2158
        %v2949 = vadd.f32 %v2933, %v2161
        %v2950 = vadd.f32 %v2934, %v2166
        %v2951 = vadd.f32 %v2935, %v2169
        %v2952 = vadd.f32 %v2936, %v2174
        %v2953 = vadd.f32 %v2937, %v2177
        %v2954 = vadd.f32 %v2938, %v2182
        %v2955 = vadd.f32 %v2939, %v2185
        %v2956 = vtanh.pop %v2940
        %v2957 = vtanh.pop %v2941
        %v2958 = vtanh.pop %v2942
        %v2959 = vtanh.pop %v2943
        %v2960 = vtanh.pop %v2944
        %v2961 = vtanh.pop %v2945
        %v2962 = vtanh.pop %v2946
        %v2963 = vtanh.pop %v2947
        %v2964 = vtanh.pop %v2948
        %v2965 = vtanh.pop %v2949
        %v2966 = vtanh.pop %v2950
        %v2967 = vtanh.pop %v2951
        %v2968 = vtanh.pop %v2952
        %v2969 = vtanh.pop %v2953
        %v2970 = vtanh.pop %v2954
        %v2971 = vtanh.pop %v2955
        %v2972 = vpack.c.bf16 %v2957, %v2956
        %v2973 = vpack.c.bf16 %v2959, %v2958
        %v2974 = vpack.c.bf16 %v2961, %v2960
        %v2975 = vpack.c.bf16 %v2963, %v2962
        %v2976 = vpack.c.bf16 %v2965, %v2964
        %v2977 = vpack.c.bf16 %v2967, %v2966
        %v2978 = vpack.c.bf16 %v2969, %v2968
        %v2979 = vpack.c.bf16 %v2971, %v2970
        %v2980 = vld [vmem:[%s7] sm:$0xf]
        %v2981 = vld [vmem:[%s7 + $0x4] sm:$0xf]
        %v2984 = vunpack.c.l.b16 %v2980
        %v2985 = vunpack.c.l.b16 %v2981
        %v2986 = vpack.c.b16 %v2985, %v2984
        %vm2988 = vcmask 130048
        %v2990 = vsel %vm2988, %v2972, 0
        %v2993 = vsel %vm2988, %v2973, 0
        %v2996 = vsel %vm2988, %v2974, 0
        %v2999 = vsel %vm2988, %v2975, 0
        %v3002 = vsel %vm2988, %v2976, 0
        %v3005 = vsel %vm2988, %v2977, 0
        %v3008 = vsel %vm2988, %v2978, 0
        %v3011 = vsel %vm2988, %v2979, 0
        %3013 = vmatprep.subr.bf16.mxu0 0
        %3014 = vmatpush1.bf16.msra.mxu0 %v2986
        %3015 = vmatprep.subr.bf16.mxu0 0
        %3016 = vmatpush1.bf16.msra.mxu0 0
        %3017 = vmatprep.subr.bf16.mxu0 0
        %3018 = vmatpush1.bf16.msra.mxu0 0
        %3019 = vmatprep.subr.bf16.mxu0 0
        %3020 = vmatpush1.bf16.msra.mxu0 0
        %3021 = vmatprep.subr.bf16.mxu0 0
        %3022 = vmatpush1.bf16.msra.mxu0 0
        %3023 = vmatprep.subr.bf16.mxu0 0
        %3024 = vmatpush1.bf16.msra.mxu0 0
        %3025 = vmatprep.subr.bf16.mxu0 0
        %3026 = vmatpush1.bf16.msra.mxu0 0
        %3027 = vmatprep.subr.bf16.mxu0 0
        %3028 = vmatpush1.bf16.msra.mxu0 0
        %3029 = vmatprep.subr.bf16.mxu0 0
        %3030 = vmatpush1.bf16.msra.mxu0 0
        %3031 = vmatprep.subr.bf16.mxu0 0
        %3032 = vmatpush1.bf16.msra.mxu0 0
        %3033 = vmatprep.subr.bf16.mxu0 0
        %3034 = vmatpush1.bf16.msra.mxu0 0
        %3035 = vmatprep.subr.bf16.mxu0 0
        %3036 = vmatpush1.bf16.msra.mxu0 0
        %3037 = vmatprep.subr.bf16.mxu0 0
        %3038 = vmatpush1.bf16.msra.mxu0 0
        %3039 = vmatprep.subr.bf16.mxu0 0
        %3040 = vmatpush1.bf16.msra.mxu0 0
        %3041 = vmatprep.subr.bf16.mxu0 0
        %3042 = vmatpush1.bf16.msra.mxu0 0
        %3043 = vmatprep.subr.bf16.mxu0 0
        %3044 = vmatpush1.bf16.msra.mxu0 0
        %3045 = vmatprep.mubr.bf16.mxu0 0
        %3046 = vmatmul.mubr.bf16.gmra.mrb[0].mxu0 %v2990
        %v3047 = vpop.f32.mrb[0].mxu0
        %v3048 = vadd.f32 0.0, %v3047
        %v3049 = vpop.f32.mrb[0].mxu0
        %v3050 = vpop.f32.mrb[0].mxu0
        %v3051 = vadd.f32 0.0, %v3050
        %v3052 = vpop.f32.mrb[0].mxu0
        %3053 = vmatprep.mubr.bf16.mxu0 0
        %3054 = vmatmul.mubr.bf16.gmra.mrb[0].mxu0 %v2993
        %v3055 = vpop.f32.mrb[0].mxu0
        %v3056 = vadd.f32 0.0, %v3055
        %v3057 = vpop.f32.mrb[0].mxu0
        %v3058 = vpop.f32.mrb[0].mxu0
        %v3059 = vadd.f32 0.0, %v3058
        %v3060 = vpop.f32.mrb[0].mxu0
        %3061 = vmatprep.mubr.bf16.mxu0 0
        %3062 = vmatmul.mubr.bf16.gmra.mrb[0].mxu0 %v2996
        %v3063 = vpop.f32.mrb[0].mxu0
        %v3064 = vadd.f32 0.0, %v3063
        %v3065 = vpop.f32.mrb[0].mxu0
        %v3066 = vpop.f32.mrb[0].mxu0
        %v3067 = vadd.f32 0.0, %v3066
        %v3068 = vpop.f32.mrb[0].mxu0
        %3069 = vmatprep.mubr.bf16.mxu0 0
        %3070 = vmatmul.mubr.bf16.gmra.mrb[0].mxu0 %v2999
        %v3071 = vpop.f32.mrb[0].mxu0
        %v3072 = vadd.f32 0.0, %v3071
        %v3073 = vpop.f32.mrb[0].mxu0
        %v3074 = vpop.f32.mrb[0].mxu0
        %v3075 = vadd.f32 0.0, %v3074
        %v3076 = vpop.f32.mrb[0].mxu0
        %3077 = vmatprep.mubr.bf16.mxu0 0
        %3078 = vmatmul.mubr.bf16.gmra.mrb[0].mxu0 %v3002
        %v3079 = vpop.f32.mrb[0].mxu0
        %v3080 = vadd.f32 0.0, %v3079
        %v3081 = vpop.f32.mrb[0].mxu0
        %v3082 = vpop.f32.mrb[0].mxu0
        %v3083 = vadd.f32 0.0, %v3082
        %v3084 = vpop.f32.mrb[0].mxu0
        %3085 = vmatprep.mubr.bf16.mxu0 0
        %3086 = vmatmul.mubr.bf16.gmra.mrb[0].mxu0 %v3005
        %v3087 = vpop.f32.mrb[0].mxu0
        %v3088 = vadd.f32 0.0, %v3087
        %v3089 = vpop.f32.mrb[0].mxu0
        %v3090 = vpop.f32.mrb[0].mxu0
        %v3091 = vadd.f32 0.0, %v3090
        %v3092 = vpop.f32.mrb[0].mxu0
        %3093 = vmatprep.mubr.bf16.mxu0 0
        %3094 = vmatmul.mubr.bf16.gmra.mrb[0].mxu0 %v3008
        %v3095 = vpop.f32.mrb[0].mxu0
        %v3096 = vadd.f32 0.0, %v3095
        %v3097 = vpop.f32.mrb[0].mxu0
        %v3098 = vpop.f32.mrb[0].mxu0
        %v3099 = vadd.f32 0.0, %v3098
        %v3100 = vpop.f32.mrb[0].mxu0
        %3101 = vmatprep.mubr.bf16.mxu0 0
        %3102 = vmatmul.mubr.bf16.gmra.mrb[0].mxu0 %v3011
        %v3103 = vpop.f32.mrb[0].mxu0
        %v3104 = vadd.f32 0.0, %v3103
        %v3105 = vpop.f32.mrb[0].mxu0
        %v3106 = vpop.f32.mrb[0].mxu0
        %v3107 = vadd.f32 0.0, %v3106
        %v3108 = vpop.f32.mrb[0].mxu0
        %3109 = vdwg.mxu0
        %3126 = vrot.lane.b32.xlu0 %v661, 96
        %v3127 = vpop.permute.xlu0 %3126
        %3128 = vrot.lane.b32.xlu0 %v664, 96
        %v3129 = vpop.permute.xlu0 %3128
        %3130 = vrot.lane.b32.xlu0 %v669, 96
        %v3131 = vpop.permute.xlu0 %3130
        %3132 = vrot.lane.b32.xlu0 %v672, 96
        %v3133 = vpop.permute.xlu0 %3132
        %3134 = vrot.lane.b32.xlu0 %v677, 96
        %v3135 = vpop.permute.xlu0 %3134
        %3136 = vrot.lane.b32.xlu0 %v680, 96
        %v3137 = vpop.permute.xlu0 %3136
        %3138 = vrot.lane.b32.xlu0 %v685, 96
        %v3139 = vpop.permute.xlu0 %3138
        %3140 = vrot.lane.b32.xlu0 %v688, 96
        %v3141 = vpop.permute.xlu0 %3140
        %3142 = vrot.lane.b32.xlu0 %v693, 96
        %v3143 = vpop.permute.xlu0 %3142
        %3144 = vrot.lane.b32.xlu0 %v696, 96
        %v3145 = vpop.permute.xlu0 %3144
        %3146 = vrot.lane.b32.xlu0 %v701, 96
        %v3147 = vpop.permute.xlu0 %3146
        %3148 = vrot.lane.b32.xlu0 %v704, 96
        %v3149 = vpop.permute.xlu0 %3148
        %3150 = vrot.lane.b32.xlu0 %v709, 96
        %v3151 = vpop.permute.xlu0 %3150
        %3152 = vrot.lane.b32.xlu0 %v712, 96
        %v3153 = vpop.permute.xlu0 %3152
        %3154 = vrot.lane.b32.xlu0 %v717, 96
        %v3155 = vpop.permute.xlu0 %3154
        %3156 = vrot.lane.b32.xlu0 %v720, 96
        %v3157 = vpop.permute.xlu0 %3156
        %v3174 = vadd.f32 %v3048, %v3127
        %v3175 = vadd.f32 %v3051, %v3129
        %v3176 = vadd.f32 %v3056, %v3131
        %v3177 = vadd.f32 %v3059, %v3133
        %v3178 = vadd.f32 %v3064, %v3135
        %v3179 = vadd.f32 %v3067, %v3137
        %v3180 = vadd.f32 %v3072, %v3139
        %v3181 = vadd.f32 %v3075, %v3141
        %v3182 = vadd.f32 %v3080, %v3143
        %v3183 = vadd.f32 %v3083, %v3145
        %v3184 = vadd.f32 %v3088, %v3147
        %v3185 = vadd.f32 %v3091, %v3149
        %v3186 = vadd.f32 %v3096, %v3151
        %v3187 = vadd.f32 %v3099, %v3153
        %v3188 = vadd.f32 %v3104, %v3155
        %v3189 = vadd.f32 %v3107, %v3157
        %v3190 = vxor.u32 %v3174, 2147483648
        %v3191 = vxor.u32 %v3175, 2147483648
        %v3192 = vxor.u32 %v3176, 2147483648
        %v3193 = vxor.u32 %v3177, 2147483648
        %v3194 = vxor.u32 %v3178, 2147483648
        %v3195 = vxor.u32 %v3179, 2147483648
        %v3196 = vxor.u32 %v3180, 2147483648
        %v3197 = vxor.u32 %v3181, 2147483648
        %v3198 = vxor.u32 %v3182, 2147483648
        %v3199 = vxor.u32 %v3183, 2147483648
        %v3200 = vxor.u32 %v3184, 2147483648
        %v3201 = vxor.u32 %v3185, 2147483648
        %v3202 = vxor.u32 %v3186, 2147483648
        %v3203 = vxor.u32 %v3187, 2147483648
        %v3204 = vxor.u32 %v3188, 2147483648
        %v3205 = vxor.u32 %v3189, 2147483648
        %v3206 = vmul.f32 %v3190, 1.442695
        %v3207 = vpow.pop %v3206
        %v3208 = vmul.f32 %v3191, 1.442695
        %v3209 = vpow.pop %v3208
        %v3210 = vmul.f32 %v3192, 1.442695
        %v3211 = vpow.pop %v3210
        %v3212 = vmul.f32 %v3193, 1.442695
        %v3213 = vpow.pop %v3212
        %v3214 = vmul.f32 %v3194, 1.442695
        %v3215 = vpow.pop %v3214
        %v3216 = vmul.f32 %v3195, 1.442695
        %v3217 = vpow.pop %v3216
        %v3218 = vmul.f32 %v3196, 1.442695
        %v3219 = vpow.pop %v3218
        %v3220 = vmul.f32 %v3197, 1.442695
        %v3221 = vpow.pop %v3220
        %v3222 = vmul.f32 %v3198, 1.442695
        %v3223 = vpow.pop %v3222
        %v3224 = vmul.f32 %v3199, 1.442695
        %v3225 = vpow.pop %v3224
        %v3226 = vmul.f32 %v3200, 1.442695
        %v3227 = vpow.pop %v3226
        %v3228 = vmul.f32 %v3201, 1.442695
        %v3229 = vpow.pop %v3228
        %v3230 = vmul.f32 %v3202, 1.442695
        %v3231 = vpow.pop %v3230
        %v3232 = vmul.f32 %v3203, 1.442695
        %v3233 = vpow.pop %v3232
        %v3234 = vmul.f32 %v3204, 1.442695
        %v3235 = vpow.pop %v3234
        %v3236 = vmul.f32 %v3205, 1.442695
        %v3237 = vpow.pop %v3236
        %v3238 = vadd.f32 %v3207, 1.0
        %v3239 = vadd.f32 %v3209, 1.0
        %v3240 = vadd.f32 %v3211, 1.0
        %v3241 = vadd.f32 %v3213, 1.0
        %v3242 = vadd.f32 %v3215, 1.0
        %v3243 = vadd.f32 %v3217, 1.0
        %v3244 = vadd.f32 %v3219, 1.0
        %v3245 = vadd.f32 %v3221, 1.0
        %v3246 = vadd.f32 %v3223, 1.0
        %v3247 = vadd.f32 %v3225, 1.0
        %v3248 = vadd.f32 %v3227, 1.0
        %v3249 = vadd.f32 %v3229, 1.0
        %v3250 = vadd.f32 %v3231, 1.0
        %v3251 = vadd.f32 %v3233, 1.0
        %v3252 = vadd.f32 %v3235, 1.0
        %v3253 = vadd.f32 %v3237, 1.0
        %v3254 = vrcp.pop %v3238
        %v3255 = vmul.f32 1.0, %v3254
        %v3256 = vrcp.pop %v3239
        %v3257 = vmul.f32 1.0, %v3256
        %v3258 = vrcp.pop %v3240
        %v3259 = vmul.f32 1.0, %v3258
        %v3260 = vrcp.pop %v3241
        %v3261 = vmul.f32 1.0, %v3260
        %v3262 = vrcp.pop %v3242
        %v3263 = vmul.f32 1.0, %v3262
        %v3264 = vrcp.pop %v3243
        %v3265 = vmul.f32 1.0, %v3264
        %v3266 = vrcp.pop %v3244
        %v3267 = vmul.f32 1.0, %v3266
        %v3268 = vrcp.pop %v3245
        %v3269 = vmul.f32 1.0, %v3268
        %v3270 = vrcp.pop %v3246
        %v3271 = vmul.f32 1.0, %v3270
        %v3272 = vrcp.pop %v3247
        %v3273 = vmul.f32 1.0, %v3272
        %v3274 = vrcp.pop %v3248
        %v3275 = vmul.f32 1.0, %v3274
        %v3276 = vrcp.pop %v3249
        %v3277 = vmul.f32 1.0, %v3276
        %v3278 = vrcp.pop %v3250
        %v3279 = vmul.f32 1.0, %v3278
        %v3280 = vrcp.pop %v3251
        %v3281 = vmul.f32 1.0, %v3280
        %v3282 = vrcp.pop %v3252
        %v3283 = vmul.f32 1.0, %v3282
        %v3284 = vrcp.pop %v3253
        %v3285 = vmul.f32 1.0, %v3284
        %v3286 = vtanh.pop %v3174
        %v3287 = vtanh.pop %v3175
        %v3288 = vtanh.pop %v3176
        %v3289 = vtanh.pop %v3177
        %v3290 = vtanh.pop %v3178
        %v3291 = vtanh.pop %v3179
        %v3292 = vtanh.pop %v3180
        %v3293 = vtanh.pop %v3181
        %v3294 = vtanh.pop %v3182
        %v3295 = vtanh.pop %v3183
        %v3296 = vtanh.pop %v3184
        %v3297 = vtanh.pop %v3185
        %v3298 = vtanh.pop %v3186
        %v3299 = vtanh.pop %v3187
        %v3300 = vtanh.pop %v3188
        %v3301 = vtanh.pop %v3189
        %3318 = vrot.lane.b32.xlu0 %v3286, 96
        %v3319 = vpop.permute.xlu0 %3318
        %3320 = vrot.lane.b32.xlu0 %v3287, 96
        %v3321 = vpop.permute.xlu0 %3320
        %3322 = vrot.lane.b32.xlu0 %v3288, 96
        %v3323 = vpop.permute.xlu0 %3322
        %3324 = vrot.lane.b32.xlu0 %v3289, 96
        %v3325 = vpop.permute.xlu0 %3324
        %3326 = vrot.lane.b32.xlu0 %v3290, 96
        %v3327 = vpop.permute.xlu0 %3326
        %3328 = vrot.lane.b32.xlu0 %v3291, 96
        %v3329 = vpop.permute.xlu0 %3328
        %3330 = vrot.lane.b32.xlu0 %v3292, 96
        %v3331 = vpop.permute.xlu0 %3330
        %3332 = vrot.lane.b32.xlu0 %v3293, 96
        %v3333 = vpop.permute.xlu0 %3332
        %3334 = vrot.lane.b32.xlu0 %v3294, 96
        %v3335 = vpop.permute.xlu0 %3334
        %3336 = vrot.lane.b32.xlu0 %v3295, 96
        %v3337 = vpop.permute.xlu0 %3336
        %3338 = vrot.lane.b32.xlu0 %v3296, 96
        %v3339 = vpop.permute.xlu0 %3338
        %3340 = vrot.lane.b32.xlu0 %v3297, 96
        %v3341 = vpop.permute.xlu0 %3340
        %3342 = vrot.lane.b32.xlu0 %v3298, 96
        %v3343 = vpop.permute.xlu0 %3342
        %3344 = vrot.lane.b32.xlu0 %v3299, 96
        %v3345 = vpop.permute.xlu0 %3344
        %3346 = vrot.lane.b32.xlu0 %v3300, 96
        %v3347 = vpop.permute.xlu0 %3346
        %3348 = vrot.lane.b32.xlu0 %v3301, 96
        %v3349 = vpop.permute.xlu0 %3348
        %v3366 = vmul.f32 %v3255, %v3319
        %v3367 = vmul.f32 %v3257, %v3321
        %v3368 = vmul.f32 %v3259, %v3323
        %v3369 = vmul.f32 %v3261, %v3325
        %v3370 = vmul.f32 %v3263, %v3327
        %v3371 = vmul.f32 %v3265, %v3329
        %v3372 = vmul.f32 %v3267, %v3331
        %v3373 = vmul.f32 %v3269, %v3333
        %v3374 = vmul.f32 %v3271, %v3335
        %v3375 = vmul.f32 %v3273, %v3337
        %v3376 = vmul.f32 %v3275, %v3339
        %v3377 = vmul.f32 %v3277, %v3341
        %v3378 = vmul.f32 %v3279, %v3343
        %v3379 = vmul.f32 %v3281, %v3345
        %v3380 = vmul.f32 %v3283, %v3347
        %v3381 = vmul.f32 %v3285, %v3349
        %v3382 = vsel %vm2066, %v3366, 0.0
        %v3383 = vrot.slane %v3382, 4
        %v3384 = vadd.f32 %v3382, %v3383
        %v3385 = vrot.slane %v3384, 2
        %v3386 = vadd.f32 %v3384, %v3385
        %v3387 = vrot.slane %v3386, 1
        %v3388 = vadd.f32 %v3386, %v3387
        %v3389 = vsel %vm2066, %v3367, 0.0
        %v3390 = vrot.slane %v3389, 4
        %v3391 = vadd.f32 %v3389, %v3390
        %v3392 = vrot.slane %v3391, 2
        %v3393 = vadd.f32 %v3391, %v3392
        %v3394 = vrot.slane %v3393, 1
        %v3395 = vadd.f32 %v3393, %v3394
        %v3396 = vsel %vm2066, %v3368, 0.0
        %v3397 = vrot.slane %v3396, 4
        %v3398 = vadd.f32 %v3396, %v3397
        %v3399 = vrot.slane %v3398, 2
        %v3400 = vadd.f32 %v3398, %v3399
        %v3401 = vrot.slane %v3400, 1
        %v3402 = vadd.f32 %v3400, %v3401
        %v3403 = vsel %vm2066, %v3369, 0.0
        %v3404 = vrot.slane %v3403, 4
        %v3405 = vadd.f32 %v3403, %v3404
        %v3406 = vrot.slane %v3405, 2
        %v3407 = vadd.f32 %v3405, %v3406
        %v3408 = vrot.slane %v3407, 1
        %v3409 = vadd.f32 %v3407, %v3408
        %v3410 = vsel %vm2066, %v3370, 0.0
        %v3411 = vrot.slane %v3410, 4
        %v3412 = vadd.f32 %v3410, %v3411
        %v3413 = vrot.slane %v3412, 2
        %v3414 = vadd.f32 %v3412, %v3413
        %v3415 = vrot.slane %v3414, 1
        %v3416 = vadd.f32 %v3414, %v3415
        %v3417 = vsel %vm2066, %v3371, 0.0
        %v3418 = vrot.slane %v3417, 4
        %v3419 = vadd.f32 %v3417, %v3418
        %v3420 = vrot.slane %v3419, 2
        %v3421 = vadd.f32 %v3419, %v3420
        %v3422 = vrot.slane %v3421, 1
        %v3423 = vadd.f32 %v3421, %v3422
        %v3424 = vsel %vm2066, %v3372, 0.0
        %v3425 = vrot.slane %v3424, 4
        %v3426 = vadd.f32 %v3424, %v3425
        %v3427 = vrot.slane %v3426, 2
        %v3428 = vadd.f32 %v3426, %v3427
        %v3429 = vrot.slane %v3428, 1
        %v3430 = vadd.f32 %v3428, %v3429
        %v3431 = vsel %vm2066, %v3373, 0.0
        %v3432 = vrot.slane %v3431, 4
        %v3433 = vadd.f32 %v3431, %v3432
        %v3434 = vrot.slane %v3433, 2
        %v3435 = vadd.f32 %v3433, %v3434
        %v3436 = vrot.slane %v3435, 1
        %v3437 = vadd.f32 %v3435, %v3436
        %v3438 = vsel %vm2066, %v3374, 0.0
        %v3439 = vrot.slane %v3438, 4
        %v3440 = vadd.f32 %v3438, %v3439
        %v3441 = vrot.slane %v3440, 2
        %v3442 = vadd.f32 %v3440, %v3441
        %v3443 = vrot.slane %v3442, 1
        %v3444 = vadd.f32 %v3442, %v3443
        %v3445 = vsel %vm2066, %v3375, 0.0
        %v3446 = vrot.slane %v3445, 4
        %v3447 = vadd.f32 %v3445, %v3446
        %v3448 = vrot.slane %v3447, 2
        %v3449 = vadd.f32 %v3447, %v3448
        %v3450 = vrot.slane %v3449, 1
        %v3451 = vadd.f32 %v3449, %v3450
        %v3452 = vsel %vm2066, %v3376, 0.0
        %v3453 = vrot.slane %v3452, 4
        %v3454 = vadd.f32 %v3452, %v3453
        %v3455 = vrot.slane %v3454, 2
        %v3456 = vadd.f32 %v3454, %v3455
        %v3457 = vrot.slane %v3456, 1
        %v3458 = vadd.f32 %v3456, %v3457
        %v3459 = vsel %vm2066, %v3377, 0.0
        %v3460 = vrot.slane %v3459, 4
        %v3461 = vadd.f32 %v3459, %v3460
        %v3462 = vrot.slane %v3461, 2
        %v3463 = vadd.f32 %v3461, %v3462
        %v3464 = vrot.slane %v3463, 1
        %v3465 = vadd.f32 %v3463, %v3464
        %v3466 = vsel %vm2066, %v3378, 0.0
        %v3467 = vrot.slane %v3466, 4
        %v3468 = vadd.f32 %v3466, %v3467
        %v3469 = vrot.slane %v3468, 2
        %v3470 = vadd.f32 %v3468, %v3469
        %v3471 = vrot.slane %v3470, 1
        %v3472 = vadd.f32 %v3470, %v3471
        %v3473 = vsel %vm2066, %v3379, 0.0
        %v3474 = vrot.slane %v3473, 4
        %v3475 = vadd.f32 %v3473, %v3474
        %v3476 = vrot.slane %v3475, 2
        %v3477 = vadd.f32 %v3475, %v3476
        %v3478 = vrot.slane %v3477, 1
        %v3479 = vadd.f32 %v3477, %v3478
        %v3480 = vsel %vm2066, %v3380, 0.0
        %v3481 = vrot.slane %v3480, 4
        %v3482 = vadd.f32 %v3480, %v3481
        %v3483 = vrot.slane %v3482, 2
        %v3484 = vadd.f32 %v3482, %v3483
        %v3485 = vrot.slane %v3484, 1
        %v3486 = vadd.f32 %v3484, %v3485
        %v3487 = vsel %vm2066, %v3381, 0.0
        %v3488 = vrot.slane %v3487, 4
        %v3489 = vadd.f32 %v3487, %v3488
        %v3490 = vrot.slane %v3489, 2
        %v3491 = vadd.f32 %v3489, %v3490
        %v3492 = vrot.slane %v3491, 1
        %v3493 = vadd.f32 %v3491, %v3492
        %v3494 = vtanh.pop %v3388
        %v3495 = vtanh.pop %v3395
        %v3496 = vtanh.pop %v3402
        %v3497 = vtanh.pop %v3409
        %v3498 = vtanh.pop %v3416
        %v3499 = vtanh.pop %v3423
        %v3500 = vtanh.pop %v3430
        %v3501 = vtanh.pop %v3437
        %v3502 = vtanh.pop %v3444
        %v3503 = vtanh.pop %v3451
        %v3504 = vtanh.pop %v3458
        %v3505 = vtanh.pop %v3465
        %v3506 = vtanh.pop %v3472
        %v3507 = vtanh.pop %v3479
        %v3508 = vtanh.pop %v3486
        %v3509 = vtanh.pop %v3493
        %v3510 = vpack.c.bf16 %v3494, %v3494
        %v3511 = vpack.c.bf16 %v3495, %v3495
        %v3512 = vpack.c.bf16 %v3496, %v3496
        %v3513 = vpack.c.bf16 %v3497, %v3497
        %v3514 = vpack.c.bf16 %v3498, %v3498
        %v3515 = vpack.c.bf16 %v3499, %v3499
        %v3516 = vpack.c.bf16 %v3500, %v3500
        %v3517 = vpack.c.bf16 %v3501, %v3501
        %v3518 = vpack.c.bf16 %v3502, %v3502
        %v3519 = vpack.c.bf16 %v3503, %v3503
        %v3520 = vpack.c.bf16 %v3504, %v3504
        %v3521 = vpack.c.bf16 %v3505, %v3505
        %v3522 = vpack.c.bf16 %v3506, %v3506
        %v3523 = vpack.c.bf16 %v3507, %v3507
        %v3524 = vpack.c.bf16 %v3508, %v3508
        %v3525 = vpack.c.bf16 %v3509, %v3509
        %v3526 = vld [vmem:[%s8] sm:$0xf]
        %v3527 = vld [vmem:[%s8 + $0x4] sm:$0xf]
        %v3528 = vld [vmem:[%s8 + $0x8] sm:$0xf]
        %v3529 = vld [vmem:[%s8 + $0xc] sm:$0xf]
        %v3530 = vld [vmem:[%s9] sm:$0x1]
        %v3532 = vlaneseq
        %v3533 = vshrl.u32 %v3532, 7
        %v3534 = vsub.s32 0, %v3533
        %v3535 = vrot.slane %v3530, %v3534
        %v3553 = vunpack.c.l.b16 %v3510
        %v3554 = vunpack.c.l.b16 %v3511
        %v3555 = vunpack.c.l.b16 %v3512
        %v3556 = vunpack.c.l.b16 %v3513
        %v3557 = vunpack.c.l.b16 %v3514
        %v3558 = vunpack.c.l.b16 %v3515
        %v3559 = vunpack.c.l.b16 %v3516
        %v3560 = vunpack.c.l.b16 %v3517
        %v3561 = vunpack.c.l.b16 %v3518
        %v3562 = vunpack.c.l.b16 %v3519
        %v3563 = vunpack.c.l.b16 %v3520
        %v3564 = vunpack.c.l.b16 %v3521
        %v3565 = vunpack.c.l.b16 %v3522
        %v3566 = vunpack.c.l.b16 %v3523
        %v3567 = vunpack.c.l.b16 %v3524
        %v3568 = vunpack.c.l.b16 %v3525
        %vm3569 = vcmask 1041409
        %v3570 = vsel %vm3569, %v3554, %v3553
        %vm3571 = vcmask 1042434
        %v3572 = vsel %vm3571, %v3555, %v3570
        %vm3573 = vcmask 1043459
        %v3574 = vsel %vm3573, %v3556, %v3572
        %vm3575 = vcmask 1044484
        %v3576 = vsel %vm3575, %v3557, %v3574
        %vm3577 = vcmask 1045509
        %v3578 = vsel %vm3577, %v3558, %v3576
        %vm3579 = vcmask 1046534
        %v3580 = vsel %vm3579, %v3559, %v3578
        %vm3581 = vcmask 1047559
        %v3582 = vsel %vm3581, %v3560, %v3580
        %v3583 = vsel %vm3569, %v3562, %v3561
        %v3584 = vsel %vm3571, %v3563, %v3583
        %v3585 = vsel %vm3573, %v3564, %v3584
        %v3586 = vsel %vm3575, %v3565, %v3585
        %v3587 = vsel %vm3577, %v3566, %v3586
        %v3588 = vsel %vm3579, %v3567, %v3587
        %v3589 = vsel %vm3581, %v3568, %v3588
        %v3590 = vpack.c.b16 %v3589, %v3582
        %v3595 = vunpack.c.l.b16 %v3526
        %v3596 = vunpack.c.l.b16 %v3527
        %v3597 = vunpack.c.l.b16 %v3528
        %v3598 = vunpack.c.l.b16 %v3529
        %v3599 = vpack.c.b16 %v3596, %v3595
        %v3600 = vpack.c.b16 %v3598, %v3597
        %v3604 = vsel %vm2066, %v3590, 0
        %3606 = vmatprep.subr.bf16.mxu0 0
        %3607 = vmatpush1.bf16.msra.mxu0 %v3599
        %3608 = vmatprep.subr.bf16.mxu0 0
        %3609 = vmatpush1.bf16.msra.mxu0 %v3600
        %3610 = vmatprep.subr.bf16.mxu0 0
        %3611 = vmatpush1.bf16.msra.mxu0 0
        %3612 = vmatprep.subr.bf16.mxu0 0
        %3613 = vmatpush1.bf16.msra.mxu0 0
        %3614 = vmatprep.subr.bf16.mxu0 0
        %3615 = vmatpush1.bf16.msra.mxu0 0
        %3616 = vmatprep.subr.bf16.mxu0 0
        %3617 = vmatpush1.bf16.msra.mxu0 0
        %3618 = vmatprep.subr.bf16.mxu0 0
        %3619 = vmatpush1.bf16.msra.mxu0 0
        %3620 = vmatprep.subr.bf16.mxu0 0
        %3621 = vmatpush1.bf16.msra.mxu0 0
        %3622 = vmatprep.subr.bf16.mxu0 0
        %3623 = vmatpush1.bf16.msra.mxu0 0
        %3624 = vmatprep.subr.bf16.mxu0 0
        %3625 = vmatpush1.bf16.msra.mxu0 0
        %3626 = vmatprep.subr.bf16.mxu0 0
        %3627 = vmatpush1.bf16.msra.mxu0 0
        %3628 = vmatprep.subr.bf16.mxu0 0
        %3629 = vmatpush1.bf16.msra.mxu0 0
        %3630 = vmatprep.subr.bf16.mxu0 0
        %3631 = vmatpush1.bf16.msra.mxu0 0
        %3632 = vmatprep.subr.bf16.mxu0 0
        %3633 = vmatpush1.bf16.msra.mxu0 0
        %3634 = vmatprep.subr.bf16.mxu0 0
        %3635 = vmatpush1.bf16.msra.mxu0 0
        %3636 = vmatprep.subr.bf16.mxu0 0
        %3637 = vmatpush1.bf16.msra.mxu0 0
        %3638 = vmatprep.mubr.bf16.mxu0 0
        %3639 = vmatmul.mubr.bf16.gmra.mrb[0].mxu0 %v3604
        %v3640 = vpop.f32.mrb[0].mxu0
        %v3641 = vadd.f32 %v3535, %v3640
        %v3642 = vpop.f32.mrb[0].mxu0
        %v3643 = vpop.f32.mrb[0].mxu0
        %v3644 = vadd.f32 %v3535, %v3643
        %v3645 = vpop.f32.mrb[0].mxu0
        %3646 = vdwg.mxu0
        %v3647 = vtanh.pop %v3641
        %v3648 = vtanh.pop %v3644
        %v3649 = vpack.c.bf16 %v3648, %v3647
        %v3650 = vld [vmem:[%s10] sm:$0xf]
        %v3651 = vld [vmem:[%s10 + $0x4] sm:$0xf]
        %v3652 = vld [vmem:[%s10 + $0x8] sm:$0xf]
        %v3653 = vld [vmem:[%s10 + $0xc] sm:$0xf]
        %v3654 = vld [vmem:[%s11] sm:$0x1]
        %v3656 = vlaneseq
        %v3657 = vshrl.u32 %v3656, 7
        %v3658 = vsub.s32 0, %v3657
        %v3659 = vrot.slane %v3654, %v3658
        %v3665 = vunpack.c.l.b16 %v3650
        %v3666 = vunpack.c.l.b16 %v3651
        %v3667 = vunpack.c.l.b16 %v3652
        %v3668 = vunpack.c.l.b16 %v3653
        %v3669 = vpack.c.b16 %v3666, %v3665
        %v3670 = vpack.c.b16 %v3668, %v3667
        %v3674 = vsel %vm2066, %v3649, 0
        %3676 = vmatprep.subr.bf16.mxu0 0
        %3677 = vmatpush1.bf16.msra.mxu0 %v3669
        %3678 = vmatprep.subr.bf16.mxu0 0
        %3679 = vmatpush1.bf16.msra.mxu0 %v3670
        %3680 = vmatprep.subr.bf16.mxu0 0
        %3681 = vmatpush1.bf16.msra.mxu0 0
        %3682 = vmatprep.subr.bf16.mxu0 0
        %3683 = vmatpush1.bf16.msra.mxu0 0
        %3684 = vmatprep.subr.bf16.mxu0 0
        %3685 = vmatpush1.bf16.msra.mxu0 0
        %3686 = vmatprep.subr.bf16.mxu0 0
        %3687 = vmatpush1.bf16.msra.mxu0 0
        %3688 = vmatprep.subr.bf16.mxu0 0
        %3689 = vmatpush1.bf16.msra.mxu0 0
        %3690 = vmatprep.subr.bf16.mxu0 0
        %3691 = vmatpush1.bf16.msra.mxu0 0
        %3692 = vmatprep.subr.bf16.mxu0 0
        %3693 = vmatpush1.bf16.msra.mxu0 0
        %3694 = vmatprep.subr.bf16.mxu0 0
        %3695 = vmatpush1.bf16.msra.mxu0 0
        %3696 = vmatprep.subr.bf16.mxu0 0
        %3697 = vmatpush1.bf16.msra.mxu0 0
        %3698 = vmatprep.subr.bf16.mxu0 0
        %3699 = vmatpush1.bf16.msra.mxu0 0
        %3700 = vmatprep.subr.bf16.mxu0 0
        %3701 = vmatpush1.bf16.msra.mxu0 0
        %3702 = vmatprep.subr.bf16.mxu0 0
        %3703 = vmatpush1.bf16.msra.mxu0 0
        %3704 = vmatprep.subr.bf16.mxu0 0
        %3705 = vmatpush1.bf16.msra.mxu0 0
        %3706 = vmatprep.subr.bf16.mxu0 0
        %3707 = vmatpush1.bf16.msra.mxu0 0
        %3708 = vmatprep.mubr.bf16.mxu0 0
        %3709 = vmatmul.mubr.bf16.gmra.mrb[0].mxu0 %v3674
        %v3710 = vpop.f32.mrb[0].mxu0
        %v3711 = vadd.f32 %v3659, %v3710
        %v3712 = vpop.f32.mrb[0].mxu0
        %v3713 = vpop.f32.mrb[0].mxu0
        %v3714 = vadd.f32 %v3659, %v3713
        %v3715 = vpop.f32.mrb[0].mxu0
        %3716 = vdwg.mxu0
        %v3717 = vtanh.pop %v3711
        %v3718 = vtanh.pop %v3714
        %v3719 = vpack.c.bf16 %v3718, %v3717
        %v3720 = vld [vmem:[%s12] sm:$0xff]
        %v3721 = vld [vmem:[%s12 + $0x8] sm:$0xff]
        %v3722 = vld [vmem:[%s12 + $0x10] sm:$0xff]
        %v3723 = vld [vmem:[%s12 + $0x18] sm:$0xff]
        %v3724 = vld [vmem:[%s12 + $0x20] sm:$0xff]
        %v3725 = vld [vmem:[%s12 + $0x28] sm:$0xff]
        %v3726 = vld [vmem:[%s13] sm:$0x3f]
        %v3728 = vlaneseq
        %v3729 = vshrl.u32 %v3728, 7
        %v3730 = vsub.s32 0, %v3729
        %v3731 = vrot.slane %v3726, %v3730
        %v3732 = vlaneseq
        %v3733 = vshrl.u32 %v3732, 7
        %v3734 = vsub.s32 1, %v3733
        %v3735 = vrot.slane %v3726, %v3734
        %v3736 = vlaneseq
        %v3737 = vshrl.u32 %v3736, 7
        %v3738 = vsub.s32 2, %v3737
        %v3739 = vrot.slane %v3726, %v3738
        %v3740 = vlaneseq
        %v3741 = vshrl.u32 %v3740, 7
        %v3742 = vsub.s32 3, %v3741
        %v3743 = vrot.slane %v3726, %v3742
        %v3744 = vlaneseq
        %v3745 = vshrl.u32 %v3744, 7
        %v3746 = vsub.s32 4, %v3745
        %v3747 = vrot.slane %v3726, %v3746
        %v3748 = vlaneseq
        %v3749 = vshrl.u32 %v3748, 7
        %v3750 = vsub.s32 5, %v3749
        %v3751 = vrot.slane %v3726, %v3750
        %v3764 = vunpack.c.l.b16 %v3720
        %v3765 = vunpack.c.h.b16 %v3720
        %v3766 = vunpack.c.l.b16 %v3721
        %v3767 = vunpack.c.h.b16 %v3721
        %v3768 = vunpack.c.l.b16 %v3722
        %v3769 = vunpack.c.h.b16 %v3722
        %v3770 = vunpack.c.l.b16 %v3723
        %v3771 = vunpack.c.h.b16 %v3723
        %v3772 = vunpack.c.l.b16 %v3724
        %v3773 = vunpack.c.h.b16 %v3724
        %v3774 = vunpack.c.l.b16 %v3725
        %v3775 = vunpack.c.h.b16 %v3725
        %v3776 = vpack.c.b16 %v3770, %v3764
        %v3777 = vpack.c.b16 %v3771, %v3765
        %v3778 = vpack.c.b16 %v3772, %v3766
        %v3779 = vpack.c.b16 %v3773, %v3767
        %v3780 = vpack.c.b16 %v3774, %v3768
        %v3781 = vpack.c.b16 %v3775, %v3769
        %v3789 = vsel %vm2988, %v3719, 0
        %3791 = vmatprep.subr.bf16.mxu0 %v3777
        %3792 = vmatpush1.bf16.msra.mxu0 %v3776
        %3793 = vmatprep.subr.bf16.mxu0 0
        %3794 = vmatpush1.bf16.msra.mxu0 0
        %3795 = vmatprep.subr.bf16.mxu0 0
        %3796 = vmatpush1.bf16.msra.mxu0 0
        %3797 = vmatprep.subr.bf16.mxu0 0
        %3798 = vmatpush1.bf16.msra.mxu0 0
        %3799 = vmatprep.subr.bf16.mxu0 0
        %3800 = vmatpush1.bf16.msra.mxu0 0
        %3801 = vmatprep.subr.bf16.mxu0 0
        %3802 = vmatpush1.bf16.msra.mxu0 0
        %3803 = vmatprep.subr.bf16.mxu0 0
        %3804 = vmatpush1.bf16.msra.mxu0 0
        %3805 = vmatprep.subr.bf16.mxu0 0
        %3806 = vmatpush1.bf16.msra.mxu0 0
        %3807 = vmatprep.subr.bf16.mxu0 0
        %3808 = vmatpush1.bf16.msra.mxu0 0
        %3809 = vmatprep.subr.bf16.mxu0 0
        %3810 = vmatpush1.bf16.msra.mxu0 0
        %3811 = vmatprep.subr.bf16.mxu0 0
        %3812 = vmatpush1.bf16.msra.mxu0 0
        %3813 = vmatprep.subr.bf16.mxu0 0
        %3814 = vmatpush1.bf16.msra.mxu0 0
        %3815 = vmatprep.subr.bf16.mxu0 0
        %3816 = vmatpush1.bf16.msra.mxu0 0
        %3817 = vmatprep.subr.bf16.mxu0 0
        %3818 = vmatpush1.bf16.msra.mxu0 0
        %3819 = vmatprep.subr.bf16.mxu0 0
        %3820 = vmatpush1.bf16.msra.mxu0 0
        %3821 = vmatprep.subr.bf16.mxu0 0
        %3822 = vmatpush1.bf16.msra.mxu0 0
        %3823 = vmatprep.mubr.bf16.mxu0 0
        %3824 = vmatmul.mubr.bf16.gmra.mrb[0].mxu0 %v3789
        %v3825 = vpop.f32.mrb[0].mxu0
        %v3826 = vadd.f32 %v3731, %v3825
        %v3827 = vpop.f32.mrb[0].mxu0
        %v3828 = vadd.f32 %v3735, %v3827
        %v3829 = vpop.f32.mrb[0].mxu0
        %v3830 = vadd.f32 %v3731, %v3829
        %v3831 = vpop.f32.mrb[0].mxu0
        %v3832 = vadd.f32 %v3735, %v3831
        %3833 = vdwg.mxu0
        %3834 = vmatprep.subr.bf16.mxu0 %v3779
        %3835 = vmatpush1.bf16.msra.mxu0 %v3778
        %3836 = vmatprep.subr.bf16.mxu0 0
        %3837 = vmatpush1.bf16.msra.mxu0 0
        %3838 = vmatprep.subr.bf16.mxu0 0
        %3839 = vmatpush1.bf16.msra.mxu0 0
        %3840 = vmatprep.subr.bf16.mxu0 0
        %3841 = vmatpush1.bf16.msra.mxu0 0
        %3842 = vmatprep.subr.bf16.mxu0 0
        %3843 = vmatpush1.bf16.msra.mxu0 0
        %3844 = vmatprep.subr.bf16.mxu0 0
        %3845 = vmatpush1.bf16.msra.mxu0 0
        %3846 = vmatprep.subr.bf16.mxu0 0
        %3847 = vmatpush1.bf16.msra.mxu0 0
        %3848 = vmatprep.subr.bf16.mxu0 0
        %3849 = vmatpush1.bf16.msra.mxu0 0
        %3850 = vmatprep.subr.bf16.mxu0 0
        %3851 = vmatpush1.bf16.msra.mxu0 0
        %3852 = vmatprep.subr.bf16.mxu0 0
        %3853 = vmatpush1.bf16.msra.mxu0 0
        %3854 = vmatprep.subr.bf16.mxu0 0
        %3855 = vmatpush1.bf16.msra.mxu0 0
        %3856 = vmatprep.subr.bf16.mxu0 0
        %3857 = vmatpush1.bf16.msra.mxu0 0
        %3858 = vmatprep.subr.bf16.mxu0 0
        %3859 = vmatpush1.bf16.msra.mxu0 0
        %3860 = vmatprep.subr.bf16.mxu0 0
        %3861 = vmatpush1.bf16.msra.mxu0 0
        %3862 = vmatprep.subr.bf16.mxu0 0
        %3863 = vmatpush1.bf16.msra.mxu0 0
        %3864 = vmatprep.subr.bf16.mxu0 0
        %3865 = vmatpush1.bf16.msra.mxu0 0
        %3866 = vmatprep.mubr.bf16.mxu0 0
        %3867 = vmatmul.mubr.bf16.gmra.mrb[0].mxu0 %v3789
        %v3868 = vpop.f32.mrb[0].mxu0
        %v3869 = vadd.f32 %v3739, %v3868
        %v3870 = vpop.f32.mrb[0].mxu0
        %v3871 = vadd.f32 %v3743, %v3870
        %v3872 = vpop.f32.mrb[0].mxu0
        %v3873 = vadd.f32 %v3739, %v3872
        %v3874 = vpop.f32.mrb[0].mxu0
        %v3875 = vadd.f32 %v3743, %v3874
        %3876 = vdwg.mxu0
        %3877 = vmatprep.subr.bf16.mxu0 %v3781
        %3878 = vmatpush1.bf16.msra.mxu0 %v3780
        %3879 = vmatprep.subr.bf16.mxu0 0
        %3880 = vmatpush1.bf16.msra.mxu0 0
        %3881 = vmatprep.subr.bf16.mxu0 0
        %3882 = vmatpush1.bf16.msra.mxu0 0
        %3883 = vmatprep.subr.bf16.mxu0 0
        %3884 = vmatpush1.bf16.msra.mxu0 0
        %3885 = vmatprep.subr.bf16.mxu0 0
        %3886 = vmatpush1.bf16.msra.mxu0 0
        %3887 = vmatprep.subr.bf16.mxu0 0
        %3888 = vmatpush1.bf16.msra.mxu0 0
        %3889 = vmatprep.subr.bf16.mxu0 0
        %3890 = vmatpush1.bf16.msra.mxu0 0
        %3891 = vmatprep.subr.bf16.mxu0 0
        %3892 = vmatpush1.bf16.msra.mxu0 0
        %3893 = vmatprep.subr.bf16.mxu0 0
        %3894 = vmatpush1.bf16.msra.mxu0 0
        %3895 = vmatprep.subr.bf16.mxu0 0
        %3896 = vmatpush1.bf16.msra.mxu0 0
        %3897 = vmatprep.subr.bf16.mxu0 0
        %3898 = vmatpush1.bf16.msra.mxu0 0
        %3899 = vmatprep.subr.bf16.mxu0 0
        %3900 = vmatpush1.bf16.msra.mxu0 0
        %3901 = vmatprep.subr.bf16.mxu0 0
        %3902 = vmatpush1.bf16.msra.mxu0 0
        %3903 = vmatprep.subr.bf16.mxu0 0
        %3904 = vmatpush1.bf16.msra.mxu0 0
        %3905 = vmatprep.subr.bf16.mxu0 0
        %3906 = vmatpush1.bf16.msra.mxu0 0
        %3907 = vmatprep.subr.bf16.mxu0 0
        %3908 = vmatpush1.bf16.msra.mxu0 0
        %3909 = vmatprep.mubr.bf16.mxu0 0
        %3910 = vmatmul.mubr.bf16.gmra.mrb[0].mxu0 %v3789
        %v3911 = vpop.f32.mrb[0].mxu0
        %v3912 = vadd.f32 %v3747, %v3911
        %v3913 = vpop.f32.mrb[0].mxu0
        %v3914 = vadd.f32 %v3751, %v3913
        %v3915 = vpop.f32.mrb[0].mxu0
        %v3916 = vadd.f32 %v3747, %v3915
        %v3917 = vpop.f32.mrb[0].mxu0
        %v3918 = vadd.f32 %v3751, %v3917
        %3919 = vdwg.mxu0
        %v3920 = vld [vmem:[%s513] sm:$0xff]
        %v3921 = vld [vmem:[%s513 + $0x8] sm:$0xf]
        %v3922 = vld [vmem:[%s513 + $0xc] sm:$0xff]
        %v3923 = vld [vmem:[%s513 + $0x14] sm:$0xf]
        %v3924 = vunpack.c.l.bf16 %v3920
        %v3925 = vunpack.c.h.bf16 %v3920
        %v3926 = vunpack.c.l.bf16 %v3921
        %v3927 = vunpack.c.l.bf16 %v3922
        %v3928 = vunpack.c.h.bf16 %v3922
        %v3929 = vunpack.c.l.bf16 %v3923
        %v3930 = vmul.f32 %v3871, 0.5
        %v3931 = vmul.f32 %v3912, 0.5
        %v3932 = vmul.f32 %v3914, 0.5
        %v3933 = vmul.f32 %v3875, 0.5
        %v3934 = vmul.f32 %v3916, 0.5
        %v3935 = vmul.f32 %v3918, 0.5
        %v3936 = vmul.f32 %v3930, 1.442695
        %v3937 = vpow.pop %v3936
        %v3938 = vmul.f32 %v3931, 1.442695
        %v3939 = vpow.pop %v3938
        %v3940 = vmul.f32 %v3932, 1.442695
        %v3941 = vpow.pop %v3940
        %v3942 = vmul.f32 %v3933, 1.442695
        %v3943 = vpow.pop %v3942
        %v3944 = vmul.f32 %v3934, 1.442695
        %v3945 = vpow.pop %v3944
        %v3946 = vmul.f32 %v3935, 1.442695
        %v3947 = vpow.pop %v3946
        %v3948 = vmul.f32 %v3924, %v3937
        %v3949 = vmul.f32 %v3925, %v3939
        %v3950 = vmul.f32 %v3926, %v3941
        %v3951 = vmul.f32 %v3927, %v3943
        %v3952 = vmul.f32 %v3928, %v3945
        %v3953 = vmul.f32 %v3929, %v3947
        %v3954 = vadd.f32 %v3948, %v3826
        %v3955 = vadd.f32 %v3949, %v3828
        %v3956 = vadd.f32 %v3950, %v3869
        %v3957 = vadd.f32 %v3951, %v3830
        %v3958 = vadd.f32 %v3952, %v3832
        %v3959 = vadd.f32 %v3953, %v3873
        %3960 = vst [vmem:[%s495] sm:$0xff] %v3954
        %3961 = vst [vmem:[%s495 + $0x8] sm:$0xff] %v3955
        %3962 = vst [vmem:[%s495 + $0x10] sm:$0xff] %v3956
        %3963 = vst [vmem:[%s495 + $0x48] sm:$0xff] %v3957
        %3964 = vst [vmem:[%s495 + $0x50] sm:$0xff] %v3958
        %3965 = vst [vmem:[%s495 + $0x58] sm:$0xff] %v3959
        %3966 = vst [vmem:[%s495 + $0x18] sm:$0xff] %v3826
        %3967 = vst [vmem:[%s495 + $0x20] sm:$0xff] %v3828
        %3968 = vst [vmem:[%s495 + $0x28] sm:$0xff] %v3869
        %3969 = vst [vmem:[%s495 + $0x60] sm:$0xff] %v3830
        %3970 = vst [vmem:[%s495 + $0x68] sm:$0xff] %v3832
        %3971 = vst [vmem:[%s495 + $0x70] sm:$0xff] %v3873
        %3972 = vst [vmem:[%s495 + $0x30] sm:$0xff] %v3871
        %3973 = vst [vmem:[%s495 + $0x38] sm:$0xff] %v3912
        %3974 = vst [vmem:[%s495 + $0x40] sm:$0xff] %v3914
        %3975 = vst [vmem:[%s495 + $0x78] sm:$0xff] %v3875
        %3976 = vst [vmem:[%s495 + $0x80] sm:$0xff] %v3916
        %3977 = vst [vmem:[%s495 + $0x88] sm:$0xff] %v3918
        %s3978 = sand.u32 %s345, 1
        %s3979 = scalar_lea.sflag [#allocation3], %s3978
        %s3980 = sand.u32 %s345, 1
        %s3981 = smul.addr %s3980, 144
        %s3982 = scalar_lea.vmem [#allocation2], %s3981
        // Predicated region
        $region77: #{tpu_custom_call.1} parent=75 // pred_check
          %p3983 = pneg %p355
        $region78: #{tpu_custom_call.1} parent=75 // pred_check_branch
          %3985 = sbr.rel (%p3983) target = $region80
        $region79: #{tpu_custom_call.1} parent=75 // pred_region
          %s3986 = smul.u32 2, %s28
          %s3988 = ssub.s32 2304, 2304
          %3989 = vsyncadd %s3979, %s3988
          %s3990 = smul.addr %s3986, 9
          %s3991 = smul.addr %s3990, 128
          %s3992 = scalar_lea.hbm %s14, %s3991
          %s3993 = sshll.u32 %s3982, 4
          %s3994 = int_to_ptr.vmem [resolvable:$true] %s3993
          %3999 = dma.vmem_to_hbm [thread:$0]  %s3994, 2304, %s3992, %s3979, 1152, 1152, 72
        $region80: #{tpu_custom_call.1} parent=75 // pred_fallthru
          _
      $region76: #{tpu_custom_call.1} parent=5 // pred_fallthru
        _
      %p4000 = scmp.le.s32.totalorder 2, %s23
      // Predicated region
      $region81: #{tpu_custom_call.1} parent=5 // pred_check
        %p4001 = pneg %p4000
      $region82: #{tpu_custom_call.1} parent=5 // pred_check_branch
        %4003 = sbr.rel (%p4001) target = $region84
      $region83: #{tpu_custom_call.1} parent=5 // pred_region
        %s4004 = ssub.s32 %s23, 2
        // Predicated region
        $region85: #{tpu_custom_call.1} parent=83 // pred_check
          %p4005 = pneg %p361
        $region86: #{tpu_custom_call.1} parent=83 // pred_check_branch
          %4007 = sbr.rel (%p4005) target = $region88
        $region87: #{tpu_custom_call.1} parent=83 // pred_region
          %s4008 = sand.u32 %s346, 1
          %s4009 = scalar_lea.sflag [#allocation3], %s4008
          %s4010 = sand.u32 %s346, 1
          %s4011 = smul.addr %s4010, 144
          %s4012 = scalar_lea.vmem [#allocation2], %s4011
          %4013 = dma.done %s4009, 2304
        $region88: #{tpu_custom_call.1} parent=83 // pred_fallthru
          _
      $region84: #{tpu_custom_call.1} parent=5 // pred_fallthru
        _
    $region6: #{tpu_custom_call.1} parent=1 // loop_footer
      %s27 = sadd.s32 1, %s23
    $region7: #{tpu_custom_call.1} parent=1 // loop_footer_branch
      %22 = sbr.rel target = $region3
    $region8: #{tpu_custom_call.1} parent=1 // loop_exit
      _
    %4014 = vsyncpa [#allocation3], 1
    %s4015 = scalar_lea.sflag [#allocation3], 1
    %4016 = vsyncpa %s4015, 1

</llo_original>
